<compile_context>
chip_gen: v7x
topology: tpu7x:2x2x1
jax: 0.10.0
libtpu: 0.0.40
codegen_flags: <defaults>
</compile_context>

<pallas_src>
import functools
import math

import jax
import jax.numpy as jnp
from jax import lax
from jax.experimental import pallas as pl
from jax.experimental.pallas import tpu as pltpu

NUM_HEADS = 8


def _complex_attention_kernel(x_ref, w_ref, b_ref, gamma_ref, o_ref, *,
                              num_heads, d_k):
    # x_ref:     (1, C, HW)   f32 input slab for this batch element (also residual)
    # w_ref:     (3C, C)      bf16 concatenated [Wq; Wk; Wv] 1x1-conv weights
    # b_ref:     (3C, 1)      f32  concatenated biases
    # gamma_ref: (1, 1)       f32, SMEM
    # o_ref:     (1, C, HW)
    C = x_ref.shape[1]
    HW = x_ref.shape[2]
    h = num_heads
    d_v = d_k

    x = x_ref[0]                                    # (C, HW) f32 — residual
    xb = x.astype(jnp.bfloat16)

    # Fused QKV 1x1-conv projection: one M=3C matmul instead of 3*h M=d_k ones.
    qkv = jnp.dot(w_ref[...], xb,
                  preferred_element_type=jnp.float32) + b_ref[...]     # (3C, HW) f32

    scale = 1.0 / math.sqrt(d_k)
    # Row slices at multiples of C (tile-aligned). Scale folded into q so the
    # (h, HW, HW) score tensor never sees a multiply.
    q = (qkv[0:C] * scale).astype(jnp.bfloat16)      # (C, HW)
    k = qkv[C:2 * C].astype(jnp.bfloat16)            # (C, HW)
    v = qkv[2 * C:3 * C].astype(jnp.bfloat16)        # (C, HW)

    q3 = q.reshape(h, d_k, HW)
    k3 = k.reshape(h, d_k, HW)
    v3 = v.reshape(h, d_v, HW)

    # Scores with keys on sublanes / queries on lanes:
    #   s[hd, kk, p] = sum_d k3[hd, d, kk] * q3[hd, d, p]
    s = lax.dot_general(k3, q3, (((1,), (1,)), ((0,), (0,))),
                        preferred_element_type=jnp.float32)            # (h, HW, HW)

    # Softmax over keys (axis 1) in f32; normalization deferred.
    # TODO(synk): attn_drop (p=0.1) is identity here (eval-mode forward); a
    # training-mode dropout would need pltpu.prng_seed / prng_random_bits.
    m = jnp.max(s, axis=1, keepdims=True)                              # (h, 1, HW)
    e = jnp.exp(s - m)                                                 # (h, HW, HW)
    l = jnp.sum(e, axis=1, keepdims=True)                              # (h, 1, HW)

    # O[hd, d, p] = sum_kk v3[hd, d, kk] * e[hd, kk, p]
    o = lax.dot_general(v3, e.astype(jnp.bfloat16),
                        (((2,), (1,)), ((0,), (0,))),
                        preferred_element_type=jnp.float32)            # (h, d_v, HW)

    # Deferred normalization: per-query 1/l via EUP approx reciprocal,
    # broadcast along d_v — d_v*HW multiplies instead of HW*HW divides.
    o = o * pl.reciprocal(l, approx=True)

    gamma = gamma_ref[0, 0]
    # (h, d_v, HW) -> (C, HW): channel c = head*d_v + d, matching the PyTorch merge.
    o_ref[0] = (gamma * o.reshape(C, HW) + x).astype(o_ref.dtype)


def complex_attention(x, wq, bq, wk, bk, wv, bv, gamma, *, num_heads=NUM_HEADS):
    """Forward pass of ComplexAttention.

    x        : (B, C, H, W)  NCHW input, C == d_model
    wq/wk/wv : (C, C)        1x1-conv weights (out_channels, in_channels)
    bq/bk/bv : (C,)          1x1-conv biases
    gamma    : (1,)          learnable residual scale
    """
    B, C, H, W = x.shape
    HW = H * W
    h = num_heads
    assert C % h == 0, "d_model must be divisible by the number of heads"
    d_k = C // h

    x3 = x.reshape(B, C, HW)                                                # free view
    w_cat = jnp.concatenate([wq, wk, wv], axis=0).astype(jnp.bfloat16)      # (3C, C)
    b_cat = jnp.concatenate([bq, bk, bv], axis=0).astype(jnp.float32).reshape(3 * C, 1)
    gamma2 = jnp.asarray(gamma, dtype=jnp.float32).reshape(1, 1)

    kernel = functools.partial(_complex_attention_kernel, num_heads=h, d_k=d_k)

    # TODO(synk): for large H*W the f32 (h, HW, HW) score tensor needs
    # flash-style online-softmax tiling over the key axis (and a raised
    # vmem_limit_bytes on v5e); at these shapes it is ~2 MiB and fits easily.
    # NOTE: with B == 1 on a 2-TensorCore chip (v7x), split heads into two
    # parallel grid groups to keep both cores busy.
    out = pl.pallas_call(
        kernel,
        out_shape=jax.ShapeDtypeStruct((B, C, HW), x.dtype),
        grid=(B,),
        in_specs=[
            pl.BlockSpec((1, C, HW), lambda b: (b, 0, 0)),        # x (also residual)
            pl.BlockSpec((3 * C, C), lambda b: (0, 0)),           # W_cat
            pl.BlockSpec((3 * C, 1), lambda b: (0, 0)),           # b_cat
            pl.BlockSpec(memory_space=pltpu.MemorySpace.SMEM),    # gamma
        ],
        out_specs=pl.BlockSpec((1, C, HW), lambda b: (b, 0, 0)),  # lane-dense
        compiler_params=pltpu.CompilerParams(
            dimension_semantics=("parallel",),
        ),
    )(x3, w_cat, b_cat, gamma2)

    # (B, C, HW) is channel-contiguous == (B, C, H, W): free reshape.
    return out.reshape(B, C, H, W)


def _complex_attention_ref(x, wq, bq, wk, bk, wv, bv, gamma, *, num_heads=NUM_HEADS):
    """Pure-JAX reference mirroring the PyTorch forward exactly."""
    B, C, H, W = x.shape
    HW = H * W
    h = num_heads
    d_k = C // h
    hi = lax.Precision.HIGHEST

    xs = x.reshape(B, C, HW)
    q = jnp.einsum("oc,bcp->bop", wq, xs, precision=hi) + bq[None, :, None]
    k = jnp.einsum("oc,bcp->bop", wk, xs, precision=hi) + bk[None, :, None]
    v = jnp.einsum("oc,bcp->bop", wv, xs, precision=hi) + bv[None, :, None]

    qh = q.reshape(B, h, d_k, HW).transpose(0, 1, 3, 2)   # (B, h, HW, d_k)
    kh = k.reshape(B, h, d_k, HW)                         # (B, h, d_k, HW)
    vh = v.reshape(B, h, d_k, HW).transpose(0, 1, 3, 2)   # (B, h, HW, d_v)

    s = jnp.einsum("bhpd,bhdq->bhpq", qh, kh, precision=hi) / math.sqrt(d_k)
    p = jax.nn.softmax(s, axis=-1)
    o = jnp.einsum("bhpq,bhqd->bhpd", p, vh, precision=hi)  # (B, h, HW, d_v)

    attn = o.transpose(0, 1, 3, 2).reshape(B, C, H, W)
    return gamma.reshape(()) * attn + x


if __name__ == "__main__":
    key = jax.random.PRNGKey(0)
    B, d_model, H, W = 2, 32, 16, 16          # h=8 heads -> d_k = d_v = 4
    k_x, k_wq, k_bq, k_wk, k_bk, k_wv, k_bv = jax.random.split(key, 7)

    x = jax.random.normal(k_x, (B, d_model, H, W), dtype=jnp.float32)

    # PyTorch Conv2d default init: U(-1/sqrt(fan_in), 1/sqrt(fan_in)), fan_in = C.
    bound = 1.0 / math.sqrt(d_model)
    init = lambda k, shape: jax.random.uniform(k, shape, jnp.float32, -bound, bound)
    wq = init(k_wq, (d_model, d_model)); bq = init(k_bq, (d_model,))
    wk = init(k_wk, (d_model, d_model)); bk = init(k_bk, (d_model,))
    wv = init(k_wv, (d_model, d_model)); bv = init(k_bv, (d_model,))
    # nn.Parameter(torch.zeros(1)) would make out == x exactly; use a nonzero
    # gamma so the attention path is actually exercised by the check below.
    gamma = jnp.array([0.75], dtype=jnp.float32)

    out = complex_attention(x, wq, bq, wk, bk, wv, bv, gamma)
    out = jax.block_until_ready(out)

    ref = _complex_attention_ref(x, wq, bq, wk, bk, wv, bv, gamma)
    assert out.shape == x.shape and out.dtype == x.dtype
    err = jnp.max(jnp.abs(out - ref))
    # Tolerance covers bf16 matmul operands + EUP approx reciprocal vs. the
    # f32 HIGHEST-precision reference (real bugs would be O(1) errors).
    assert jnp.allclose(out, ref, atol=3e-2, rtol=3e-2), (
        f"mismatch vs reference: max abs err = {err}")
    print("KERNEL_OK")
</pallas_src>

<mosaic_0001>
module attributes {stable_mosaic.version = 11 : i64} {
  func.func @_complex_attention_kernel(%arg0: i32, %arg1: memref<1x32x256xf32, #tpu.memory_space<vmem>>, %arg2: memref<96x32xbf16, #tpu.memory_space<vmem>>, %arg3: memref<96x1xf32, #tpu.memory_space<vmem>>, %arg4: memref<1x1xf32, #tpu.memory_space<smem>>, %arg5: memref<1x32x256xf32, #tpu.memory_space<vmem>>) attributes {dimension_semantics = [#tpu.dimension_semantics<parallel>], iteration_bounds = array<i64: 2>, scalar_prefetch = 0 : i64, scratch_operands = 0 : i64, tpu.core_type = #tpu.core_type<tc>, window_params = [{transform_indices = @transform_0, window_bounds = array<i64: 1, 32, 256>}, {pipeline_mode = #tpu.pipeline_mode<synchronous>, transform_indices = @transform_1, window_bounds = array<i64: 96, 32>}, {pipeline_mode = #tpu.pipeline_mode<synchronous>, transform_indices = @transform_2, window_bounds = array<i64: 96, 1>}, {transform_indices = @transform_3, window_bounds = array<i64: 1, 1>}, {transform_indices = @transform_4, window_bounds = array<i64: 1, 32, 256>}]} {
    %c0 = arith.constant 0 : index
    %c0_0 = arith.constant 0 : index
    %c0_1 = arith.constant 0 : index
    %0 = vector.load %arg1[%c0, %c0_0, %c0_1] : memref<1x32x256xf32, #tpu.memory_space<vmem>>, vector<1x32x256xf32>
    %1 = vector.shape_cast %0 : vector<1x32x256xf32> to vector<32x256xf32>
    %2 = arith.truncf %1 : vector<32x256xf32> to vector<32x256xbf16>
    %c0_2 = arith.constant 0 : index
    %c0_3 = arith.constant 0 : index
    %3 = vector.load %arg2[%c0_2, %c0_3] : memref<96x32xbf16, #tpu.memory_space<vmem>>, vector<96x32xbf16>
    %cst = arith.constant dense<0.000000e+00> : vector<96x256xf32>
    %4 = tpu.matmul %3, %2, %cst {dimension_numbers = #tpu.dot_dimension_numbers<[1], [0], [0], [1], [0, 0, 1, 1], [], []>} : vector<96x32xbf16>, vector<32x256xbf16>, vector<96x256xf32> -> vector<96x256xf32>
    %c0_4 = arith.constant 0 : index
    %c0_5 = arith.constant 0 : index
    %5 = vector.load %arg3[%c0_4, %c0_5] : memref<96x1xf32, #tpu.memory_space<vmem>>, vector<96x1xf32>
    %6 = vector.broadcast %5 : vector<96x1xf32> to vector<96x256xf32>
    %7 = arith.addf %4, %6 : vector<96x256xf32>
    %8 = vector.extract_strided_slice %7 {offsets = [0, 0], sizes = [32, 256], strides = [1, 1]} : vector<96x256xf32> to vector<32x256xf32>
    %cst_6 = arith.constant 5.000000e-01 : f32
    %9 = vector.broadcast %cst_6 : f32 to vector<32x256xf32>
    %10 = arith.mulf %8, %9 : vector<32x256xf32>
    %11 = arith.truncf %10 : vector<32x256xf32> to vector<32x256xbf16>
    %12 = vector.extract_strided_slice %7 {offsets = [32, 0], sizes = [32, 256], strides = [1, 1]} : vector<96x256xf32> to vector<32x256xf32>
    %13 = arith.truncf %12 : vector<32x256xf32> to vector<32x256xbf16>
    %14 = vector.extract_strided_slice %7 {offsets = [64, 0], sizes = [32, 256], strides = [1, 1]} : vector<96x256xf32> to vector<32x256xf32>
    %15 = arith.truncf %14 : vector<32x256xf32> to vector<32x256xbf16>
    %16 = vector.shape_cast %11 : vector<32x256xbf16> to vector<8x4x256xbf16>
    %17 = vector.shape_cast %13 : vector<32x256xbf16> to vector<8x4x256xbf16>
    %18 = vector.shape_cast %15 : vector<32x256xbf16> to vector<8x4x256xbf16>
    %cst_7 = arith.constant dense<0.000000e+00> : vector<8x256x256xf32>
    %19 = tpu.matmul %17, %16, %cst_7 {dimension_numbers = #tpu.dot_dimension_numbers<[1], [1], [2], [2], [0, 0, 0, 2, 1, 2], [0], [0]>} : vector<8x4x256xbf16>, vector<8x4x256xbf16>, vector<8x256x256xf32> -> vector<8x256x256xf32>
    %cst_8 = arith.constant dense<0xFF800000> : vector<8x256xf32>
    %20 = vector.multi_reduction <maximumf>, %19, %cst_8 [1] : vector<8x256x256xf32> to vector<8x256xf32>
    %21 = vector.shape_cast %20 : vector<8x256xf32> to vector<8x1x256xf32>
    %22 = vector.broadcast %21 : vector<8x1x256xf32> to vector<8x256x256xf32>
    %23 = arith.subf %19, %22 : vector<8x256x256xf32>
    %24 = math.exp %23 : vector<8x256x256xf32>
    %cst_9 = arith.constant dense<0.000000e+00> : vector<8x256xf32>
    %25 = vector.multi_reduction <add>, %24, %cst_9 [1] : vector<8x256x256xf32> to vector<8x256xf32>
    %26 = vector.shape_cast %25 : vector<8x256xf32> to vector<8x1x256xf32>
    %27 = arith.truncf %24 : vector<8x256x256xf32> to vector<8x256x256xbf16>
    %cst_10 = arith.constant dense<0.000000e+00> : vector<8x4x256xf32>
    %28 = tpu.matmul %18, %27, %cst_10 {dimension_numbers = #tpu.dot_dimension_numbers<[2], [1], [1], [2], [0, 0, 0, 1, 1, 2], [0], [0]>} : vector<8x4x256xbf16>, vector<8x256x256xbf16>, vector<8x4x256xf32> -> vector<8x4x256xf32>
    %29 = tpu.reciprocal %26 {approx = true} : vector<8x1x256xf32> -> vector<8x1x256xf32>
    %30 = vector.broadcast %29 : vector<8x1x256xf32> to vector<8x4x256xf32>
    %31 = arith.mulf %28, %30 : vector<8x4x256xf32>
    %c0_11 = arith.constant 0 : index
    %c0_12 = arith.constant 0 : index
    %32 = memref.load %arg4[%c0_11, %c0_12] : memref<1x1xf32, #tpu.memory_space<smem>>
    %33 = vector.shape_cast %31 : vector<8x4x256xf32> to vector<32x256xf32>
    %34 = vector.broadcast %32 : f32 to vector<32x256xf32>
    %35 = arith.mulf %34, %33 : vector<32x256xf32>
    %36 = arith.addf %35, %1 : vector<32x256xf32>
    %c0_13 = arith.constant 0 : index
    %c0_14 = arith.constant 0 : index
    %c0_15 = arith.constant 0 : index
    %37 = vector.load %arg5[%c0_13, %c0_14, %c0_15] : memref<1x32x256xf32, #tpu.memory_space<vmem>>, vector<1x32x256xf32>
    %38 = vector.shape_cast %37 : vector<1x32x256xf32> to vector<32x256xf32>
    %39 = vector.shape_cast %36 : vector<32x256xf32> to vector<1x32x256xf32>
    tpu.vector_store %arg5[%c0_13, %c0_14, %c0_15], %39 {strides = array<i32>} : memref<1x32x256xf32, #tpu.memory_space<vmem>>, vector<1x32x256xf32>,
    return
  }
  func.func @transform_0(%arg0: i32) -> (i32, i32, i32) {
    %c0_i32 = arith.constant 0 : i32
    %c0_i32_0 = arith.constant 0 : i32
    %c0_i32_1 = arith.constant 0 : i32
    return %arg0, %c0_i32, %c0_i32_0 : i32, i32, i32
  }
  func.func @transform_1(%arg0: i32) -> (i32, i32) {
    %c0_i32 = arith.constant 0 : i32
    %c0_i32_0 = arith.constant 0 : i32
    %c0_i32_1 = arith.constant 0 : i32
    return %c0_i32, %c0_i32_0 : i32, i32
  }
  func.func @transform_2(%arg0: i32) -> (i32, i32) {
    %c0_i32 = arith.constant 0 : i32
    %c0_i32_0 = arith.constant 0 : i32
    %c0_i32_1 = arith.constant 0 : i32
    return %c0_i32, %c0_i32_0 : i32, i32
  }
  func.func @transform_3(%arg0: i32) -> (i32, i32) {
    %c0_i32 = arith.constant 0 : i32
    %c0_i32_0 = arith.constant 0 : i32
    %c0_i32_1 = arith.constant 0 : i32
    return %c0_i32, %c0_i32_0 : i32, i32
  }
  func.func @transform_4(%arg0: i32) -> (i32, i32, i32) {
    %c0_i32 = arith.constant 0 : i32
    %c0_i32_0 = arith.constant 0 : i32
    %c0_i32_1 = arith.constant 0 : i32
    return %arg0, %c0_i32, %c0_i32_0 : i32, i32, i32
  }
}

</mosaic_0001>

<llo_original>
// kernel: tpu_custom_call.1
$region0: #{tpu_custom_call.1}
  #allocation0 [shape = 'u32[]', space=smem, size = 0x4, offset = 0x4, fixed_abs, tag = 'smem constant byte address 0x4 - core index']
  #allocation1 [shape = 'u32[144,128]{1,0:T(1,128)}', space=vmem, size = 0x12000, scoped, tag = 'internal scratch']
  #allocation2 [shape = 'f32[1,1]{1,0:T(1,128)S(6)}', space=smem, size = 0x200, scoped, tag = 'scoped memory for tpu_custom_call.1']
  %s0 = inlined_call_operand.vmem [shape: f32[2,32,256], index: 0, kind: input, shape index: {}]
  %s1 = inlined_call_operand.vmem [shape: bf16[96,32], index: 1, kind: input, shape index: {}]
  %s2 = inlined_call_operand.vmem [shape: f32[96,1], index: 2, kind: input, shape index: {}]
  %s3 = inlined_call_operand.<no memory space> [shape: f32[1,1], index: 3, kind: input, shape index: {}]
  %s4 = inlined_call_operand.hbm [shape: f32[2,32,256], index: 4, kind: output, shape index: {}]
  %s5 = sld [smem:[#allocation0]]
  $region49: #{tpu_custom_call.1} parent=0
    _
  %s7 = ssub.s32 1, %s5
  %s8 = scalar_select 0, %s7, %s5
  %9 = sst [smem:[#allocation2]] %s3
  $region1: #{tpu_custom_call.1} parent=0
    #allocation3 [shape = 'u8[65536]{0}', space=vmem, size = 0x10000, scoped, tag = 'output window, operand 0']
    #allocation4 [shape = 's32[2]{0}', space=sflag, size = 0x8, scoped, tag = 'scoped memory for tpu_custom_call.1']
    %10 = vsyncpa [#allocation4], 0
    %s11 = scalar_lea.sflag [#allocation4], 1
    %12 = vsyncpa %s11, 0
    loop: start=0, step=1, limit=4
    $region2: #{tpu_custom_call.1} parent=1 // loop_pre_header
      _
    $region3: #{tpu_custom_call.1} parent=1 // loop_header
      %s14 = sphi 0, %s18
      %p15 = scmp.ge.s32.totalorder %s14, 4
      %s24 = sphi 0, %s26
      %s27 = sphi 0, %s24
      %s28 = sphi 0, %s27
      %s44 = sphi 0, %s28
      %s48 = sphi 0, %s48
      %s50 = sphi 0, %s48
      %s51 = sphi 0, %s50
      %s65 = sphi 0, %s51
      %s69 = sphi 0, %s69
      %s71 = sphi 0, %s69
      %s72 = sphi 0, %s71
      %s86 = sphi 0, %s72
      %s90 = sphi 0, %s90
      %s92 = sphi 0, %s90
      %s93 = sphi 0, %s92
      %s107 = sphi 0, %s93
      %s113 = sphi 0, %s115
      %s116 = sphi 0, %s113
      %s117 = sphi 0, %s116
      %s133 = sphi 0, %s117
    $region4: #{tpu_custom_call.1} parent=1 // loop_header_branch
      %17 = sbr.rel (%p15) target = $region8
    $region5: #{tpu_custom_call.1} parent=1 // loop_body
      %s19 = ssub.s32 %s14, 1
      %s20 = ssub.s32 %s14, 2
      %s21 = sadd.s32 %s14, 1
      %s22 = ssub.s32 %s14, %s21
      %p23 = scmp.eq.s32.totalorder %s22, 0
      %s25 = sadd.s32 %s24, 1
      %s26 = scalar_select %p23, %s24, %s25
      %p29 = pneg %p23
      %p30 = scmp.eq.s32.totalorder %s14, 1
      %p31 = por %p29, %p30
      %p32 = scmp.ne.s32.totalorder %s24, %s27
      %p33 = scmp.eq.s32.totalorder %s14, 0
      %p34 = por %p32, %p33
      %p35 = scmp.ne.s32.totalorder %s24, %s27
      %p36 = scmp.eq.s32.totalorder %s19, 1
      %p37 = por %p35, %p36
      %p38 = scmp.ne.s32.totalorder %s27, %s28
      %p39 = scmp.eq.s32.totalorder %s19, 0
      %p40 = por %p38, %p39
      %p41 = scmp.ne.s32.totalorder %s27, %s28
      %p42 = scmp.eq.s32.totalorder %s20, 1
      %p43 = por %p41, %p42
      %p45 = scmp.ne.s32.totalorder %s28, %s44
      %p46 = scmp.eq.s32.totalorder %s20, 0
      %p47 = por %p45, %p46
      %s49 = sadd.s32 %s48, 1
      %p52 = scmp.eq.s32.totalorder %s14, 1
      %p53 = scmp.ne.s32.totalorder %s48, %s50
      %p54 = scmp.eq.s32.totalorder %s14, 0
      %p55 = por %p53, %p54
      %p56 = scmp.ne.s32.totalorder %s48, %s50
      %p57 = scmp.eq.s32.totalorder %s19, 1
      %p58 = por %p56, %p57
      %p59 = scmp.ne.s32.totalorder %s50, %s51
      %p60 = scmp.eq.s32.totalorder %s19, 0
      %p61 = por %p59, %p60
      %p62 = scmp.ne.s32.totalorder %s50, %s51
      %p63 = scmp.eq.s32.totalorder %s20, 1
      %p64 = por %p62, %p63
      %p66 = scmp.ne.s32.totalorder %s51, %s65
      %p67 = scmp.eq.s32.totalorder %s20, 0
      %p68 = por %p66, %p67
      %s70 = sadd.s32 %s69, 1
      %p73 = scmp.eq.s32.totalorder %s14, 1
      %p74 = scmp.ne.s32.totalorder %s69, %s71
      %p75 = scmp.eq.s32.totalorder %s14, 0
      %p76 = por %p74, %p75
      %p77 = scmp.ne.s32.totalorder %s69, %s71
      %p78 = scmp.eq.s32.totalorder %s19, 1
      %p79 = por %p77, %p78
      %p80 = scmp.ne.s32.totalorder %s71, %s72
      %p81 = scmp.eq.s32.totalorder %s19, 0
      %p82 = por %p80, %p81
      %p83 = scmp.ne.s32.totalorder %s71, %s72
      %p84 = scmp.eq.s32.totalorder %s20, 1
      %p85 = por %p83, %p84
      %p87 = scmp.ne.s32.totalorder %s72, %s86
      %p88 = scmp.eq.s32.totalorder %s20, 0
      %p89 = por %p87, %p88
      %s91 = sadd.s32 %s90, 1
      %p94 = scmp.eq.s32.totalorder %s14, 1
      %p95 = scmp.ne.s32.totalorder %s90, %s92
      %p96 = scmp.eq.s32.totalorder %s14, 0
      %p97 = por %p95, %p96
      %p98 = scmp.ne.s32.totalorder %s90, %s92
      %p99 = scmp.eq.s32.totalorder %s19, 1
      %p100 = por %p98, %p99
      %p101 = scmp.ne.s32.totalorder %s92, %s93
      %p102 = scmp.eq.s32.totalorder %s19, 0
      %p103 = por %p101, %p102
      %p104 = scmp.ne.s32.totalorder %s92, %s93
      %p105 = scmp.eq.s32.totalorder %s20, 1
      %p106 = por %p104, %p105
      %p108 = scmp.ne.s32.totalorder %s93, %s107
      %p109 = scmp.eq.s32.totalorder %s20, 0
      %p110 = por %p108, %p109
      %s111 = ssub.s32 %s14, %s21
      %p112 = scmp.eq.s32.totalorder %s111, 0
      %s114 = sadd.s32 %s113, 1
      %s115 = scalar_select %p112, %s113, %s114
      %p118 = pneg %p112
      %p119 = scmp.eq.s32.totalorder %s14, 1
      %p120 = por %p118, %p119
      %p121 = scmp.ne.s32.totalorder %s113, %s116
      %p122 = scmp.eq.s32.totalorder %s14, 0
      %p123 = por %p121, %p122
      %p124 = scmp.ne.s32.totalorder %s113, %s116
      %p125 = scmp.eq.s32.totalorder %s19, 1
      %p126 = por %p124, %p125
      %p127 = scmp.ne.s32.totalorder %s116, %s117
      %p128 = scmp.eq.s32.totalorder %s19, 0
      %p129 = por %p127, %p128
      %p130 = scmp.ne.s32.totalorder %s116, %s117
      %p131 = scmp.eq.s32.totalorder %s20, 1
      %p132 = por %p130, %p131
      %p134 = scmp.ne.s32.totalorder %s117, %s133
      %p135 = scmp.eq.s32.totalorder %s20, 0
      %p136 = por %p134, %p135
      %p137 = scmp.le.s32.totalorder 1, %s14
      %p138 = scmp.lt.s32.totalorder %s14, 3
      %p139 = pnand %p137, %p138
      %p140 = pneg %p139
      // Predicated region
      $region9: #{tpu_custom_call.1} parent=5 // pred_check
        _
      $region10: #{tpu_custom_call.1} parent=5 // pred_check_branch
        %142 = sbr.rel (%p139) target = $region12
      $region11: #{tpu_custom_call.1} parent=5 // pred_region
        %s143 = ssub.s32 %s14, 1
        // Predicated region
        $region13: #{tpu_custom_call.1} parent=11 // pred_check
          %p144 = pneg %p61
        $region14: #{tpu_custom_call.1} parent=11 // pred_check_branch
          %146 = sbr.rel (%p144) target = $region16
        $region15: #{tpu_custom_call.1} parent=11 // pred_region
          _
        $region16: #{tpu_custom_call.1} parent=11 // pred_fallthru
          _
        // Predicated region
        $region17: #{tpu_custom_call.1} parent=11 // pred_check
          %p147 = pneg %p82
        $region18: #{tpu_custom_call.1} parent=11 // pred_check_branch
          %149 = sbr.rel (%p147) target = $region20
        $region19: #{tpu_custom_call.1} parent=11 // pred_region
          _
        $region20: #{tpu_custom_call.1} parent=11 // pred_fallthru
          _
        // Predicated region
        $region21: #{tpu_custom_call.1} parent=11 // pred_check
          %p150 = pneg %p103
        $region22: #{tpu_custom_call.1} parent=11 // pred_check_branch
          %152 = sbr.rel (%p150) target = $region24
        $region23: #{tpu_custom_call.1} parent=11 // pred_region
          _
        $region24: #{tpu_custom_call.1} parent=11 // pred_fallthru
          _
      $region12: #{tpu_custom_call.1} parent=5 // pred_fallthru
        _
      %p153 = scmp.lt.s32.totalorder %s14, 2
      // Predicated region
      $region25: #{tpu_custom_call.1} parent=5 // pred_check
        %p154 = pneg %p153
      $region26: #{tpu_custom_call.1} parent=5 // pred_check_branch
        %156 = sbr.rel (%p154) target = $region28
      $region27: #{tpu_custom_call.1} parent=5 // pred_region
        // Predicated region
        $region29: #{tpu_custom_call.1} parent=27 // pred_check
          %p157 = pneg %p34
        $region30: #{tpu_custom_call.1} parent=27 // pred_check_branch
          %159 = sbr.rel (%p157) target = $region32
        $region31: #{tpu_custom_call.1} parent=27 // pred_region
          %p160 = scmp.lt.s32.totalorder %s14, 1
          %s161 = scalar_select %p160, %s14, 1
          %s162 = smul.addr %s161, 8
          %s163 = smul.addr %s162, 8
          %s164 = scalar_lea.vmem %s0, %s163
        $region32: #{tpu_custom_call.1} parent=27 // pred_fallthru
          _
      $region28: #{tpu_custom_call.1} parent=5 // pred_fallthru
        _
      %p165 = scmp.le.s32.totalorder 1, %s14
      %p166 = scmp.lt.s32.totalorder %s14, 3
      %p167 = pnand %p165, %p166
      %p168 = pneg %p167
      // Predicated region
      $region33: #{tpu_custom_call.1} parent=5 // pred_check
        _
      $region34: #{tpu_custom_call.1} parent=5 // pred_check_branch
        %170 = sbr.rel (%p167) target = $region36
      $region35: #{tpu_custom_call.1} parent=5 // pred_region
        %s171 = ssub.s32 %s14, 1
        %p172 = scmp.lt.s32.totalorder %s19, 1
        %s173 = scalar_select %p172, %s19, 1
        %s174 = smul.addr %s173, 8
        %s175 = smul.addr %s174, 8
        %s176 = scalar_lea.vmem %s0, %s175
        %p177 = pneg %p40
        %p178 = pneg %p37
        %p179 = pneg %p61
        %p180 = pneg %p58
        %p181 = pneg %p82
        %p182 = pneg %p79
        %p183 = pneg %p103
        %p184 = pneg %p100
        %p185 = pneg %p129
        %p186 = pneg %p126
        %s187 = sand.u32 %s116, 1
        %s188 = scalar_lea.sflag [#allocation4], %s187
        %s189 = sand.u32 %s116, 1
        %s190 = smul.addr %s189, 64
        %s191 = scalar_lea.vmem [#allocation3], %s190
        %p192 = scmp.lt.s32.totalorder %s19, 1
        %s193 = scalar_select %p192, %s19, 1
        %s194 = smul.addr %s193, 8
        %s195 = smul.addr %s194, 8
        %s196 = scalar_lea.vmem %s0, %s195
        %v198 = vld [vmem:[%s196] sm:$0xff]
        %v199 = vld [vmem:[%s196 + $0x8] sm:$0xff]
        %v200 = vld [vmem:[%s196 + $0x10] sm:$0xff]
        %v201 = vld [vmem:[%s196 + $0x18] sm:$0xff]
        %v202 = vld [vmem:[%s196 + $0x20] sm:$0xff]
        %v203 = vld [vmem:[%s196 + $0x28] sm:$0xff]
        %v204 = vld [vmem:[%s196 + $0x30] sm:$0xff]
        %v205 = vld [vmem:[%s196 + $0x38] sm:$0xff]
        %v206 = vpack.c.bf16 %v200, %v198
        %v207 = vpack.c.bf16 %v201, %v199
        %v208 = vpack.c.bf16 %v204, %v202
        %v209 = vpack.c.bf16 %v205, %v203
        %v210 = vld [vmem:[%s1] sm:$0xf]
        %v211 = vld [vmem:[%s1 + $0x4] sm:$0xf]
        %v212 = vld [vmem:[%s1 + $0x8] sm:$0xf]
        %v213 = vld [vmem:[%s1 + $0xc] sm:$0xf]
        %v214 = vld [vmem:[%s1 + $0x10] sm:$0xf]
        %v215 = vld [vmem:[%s1 + $0x14] sm:$0xf]
        %v216 = vld [vmem:[%s1 + $0x18] sm:$0xf]
        %v217 = vld [vmem:[%s1 + $0x1c] sm:$0xf]
        %v218 = vld [vmem:[%s1 + $0x20] sm:$0xf]
        %v219 = vld [vmem:[%s1 + $0x24] sm:$0xf]
        %v220 = vld [vmem:[%s1 + $0x28] sm:$0xf]
        %v221 = vld [vmem:[%s1 + $0x2c] sm:$0xf]
        %v222 = vld [vmem:[%s2] sm:$0xff]
        %v223 = vld [vmem:[%s2 + $0x8] sm:$0xff]
        %v224 = vld [vmem:[%s2 + $0x10] sm:$0xff]
        %v225 = vld [vmem:[%s2 + $0x18] sm:$0xff]
        %v226 = vld [vmem:[%s2 + $0x20] sm:$0xff]
        %v227 = vld [vmem:[%s2 + $0x28] sm:$0xff]
        %v228 = vld [vmem:[%s2 + $0x30] sm:$0xff]
        %v229 = vld [vmem:[%s2 + $0x38] sm:$0xff]
        %v230 = vld [vmem:[%s2 + $0x40] sm:$0xff]
        %v231 = vld [vmem:[%s2 + $0x48] sm:$0xff]
        %v232 = vld [vmem:[%s2 + $0x50] sm:$0xff]
        %v233 = vld [vmem:[%s2 + $0x58] sm:$0xff]
        %235 = vset.pattern.permute.xlu0 0
        %236 = vperm.xlu0 %235, %v222
        %v237 = vpop.permute.xlu0 %236
        %240 = vset.pattern.permute.xlu0 0
        %241 = vperm.xlu0 %240, %v223
        %v242 = vpop.permute.xlu0 %241
        %245 = vset.pattern.permute.xlu0 0
        %246 = vperm.xlu0 %245, %v224
        %v247 = vpop.permute.xlu0 %246
        %250 = vset.pattern.permute.xlu0 0
        %251 = vperm.xlu0 %250, %v225
        %v252 = vpop.permute.xlu0 %251
        %255 = vset.pattern.permute.xlu0 0
        %256 = vperm.xlu0 %255, %v226
        %v257 = vpop.permute.xlu0 %256
        %260 = vset.pattern.permute.xlu0 0
        %261 = vperm.xlu0 %260, %v227
        %v262 = vpop.permute.xlu0 %261
        %265 = vset.pattern.permute.xlu0 0
        %266 = vperm.xlu0 %265, %v228
        %v267 = vpop.permute.xlu0 %266
        %270 = vset.pattern.permute.xlu0 0
        %271 = vperm.xlu0 %270, %v229
        %v272 = vpop.permute.xlu0 %271
        %275 = vset.pattern.permute.xlu0 0
        %276 = vperm.xlu0 %275, %v230
        %v277 = vpop.permute.xlu0 %276
        %280 = vset.pattern.permute.xlu0 0
        %281 = vperm.xlu0 %280, %v231
        %v282 = vpop.permute.xlu0 %281
        %285 = vset.pattern.permute.xlu0 0
        %286 = vperm.xlu0 %285, %v232
        %v287 = vpop.permute.xlu0 %286
        %290 = vset.pattern.permute.xlu0 0
        %291 = vperm.xlu0 %290, %v233
        %v292 = vpop.permute.xlu0 %291
        %v306 = vunpack.c.l.b16 %v210
        %v307 = vunpack.c.l.b16 %v211
        %v308 = vunpack.c.l.b16 %v212
        %v309 = vunpack.c.l.b16 %v213
        %v310 = vunpack.c.l.b16 %v214
        %v311 = vunpack.c.l.b16 %v215
        %v312 = vunpack.c.l.b16 %v216
        %v313 = vunpack.c.l.b16 %v217
        %v314 = vunpack.c.l.b16 %v218
        %v315 = vunpack.c.l.b16 %v219
        %v316 = vunpack.c.l.b16 %v220
        %v317 = vunpack.c.l.b16 %v221
        %v318 = vpack.c.b16 %v307, %v306
        %v319 = vpack.c.b16 %v309, %v308
        %v320 = vpack.c.b16 %v311, %v310
        %v321 = vpack.c.b16 %v313, %v312
        %v322 = vpack.c.b16 %v315, %v314
        %v323 = vpack.c.b16 %v317, %v316
        %vm324 = vcmask 261120
        %v326 = vsel %vm324, %v318, 0
        %v329 = vsel %vm324, %v319, 0
        %v332 = vsel %vm324, %v320, 0
        %v335 = vsel %vm324, %v321, 0
        %v338 = vsel %vm324, %v322, 0
        %v341 = vsel %vm324, %v323, 0
        %343 = vmatprep.subr.bf16.mxu0 %v207
        %344 = vmatpush1.bf16.msra.mxu0 %v206
        %345 = vmatprep.subr.bf16.mxu0 %v209
        %346 = vmatpush1.bf16.msra.mxu0 %v208
        %347 = vmatprep.subr.bf16.mxu0 0
        %348 = vmatpush1.bf16.msra.mxu0 0
        %349 = vmatprep.subr.bf16.mxu0 0
        %350 = vmatpush1.bf16.msra.mxu0 0
        %351 = vmatprep.subr.bf16.mxu0 0
        %352 = vmatpush1.bf16.msra.mxu0 0
        %353 = vmatprep.subr.bf16.mxu0 0
        %354 = vmatpush1.bf16.msra.mxu0 0
        %355 = vmatprep.subr.bf16.mxu0 0
        %356 = vmatpush1.bf16.msra.mxu0 0
        %357 = vmatprep.subr.bf16.mxu0 0
        %358 = vmatpush1.bf16.msra.mxu0 0
        %359 = vmatprep.subr.bf16.mxu0 0
        %360 = vmatpush1.bf16.msra.mxu0 0
        %361 = vmatprep.subr.bf16.mxu0 0
        %362 = vmatpush1.bf16.msra.mxu0 0
        %363 = vmatprep.subr.bf16.mxu0 0
        %364 = vmatpush1.bf16.msra.mxu0 0
        %365 = vmatprep.subr.bf16.mxu0 0
        %366 = vmatpush1.bf16.msra.mxu0 0
        %367 = vmatprep.subr.bf16.mxu0 0
        %368 = vmatpush1.bf16.msra.mxu0 0
        %369 = vmatprep.subr.bf16.mxu0 0
        %370 = vmatpush1.bf16.msra.mxu0 0
        %371 = vmatprep.subr.bf16.mxu0 0
        %372 = vmatpush1.bf16.msra.mxu0 0
        %373 = vmatprep.subr.bf16.mxu0 0
        %374 = vmatpush1.bf16.msra.mxu0 0
        %375 = vmatprep.mubr.bf16.mxu0 0
        %376 = vmatmul.mubr.bf16.gmra.mrb[0].mxu0 %v326
        %v377 = vpop.f32.mrb[0].mxu0
        %v378 = vadd.f32 %v237, %v377
        %v379 = vpop.f32.mrb[0].mxu0
        %v380 = vadd.f32 %v237, %v379
        %v381 = vpop.f32.mrb[0].mxu0
        %v382 = vadd.f32 %v242, %v381
        %v383 = vpop.f32.mrb[0].mxu0
        %v384 = vadd.f32 %v242, %v383
        %385 = vmatprep.mubr.bf16.mxu0 0
        %386 = vmatmul.mubr.bf16.gmra.mrb[0].mxu0 %v329
        %v387 = vpop.f32.mrb[0].mxu0
        %v388 = vadd.f32 %v247, %v387
        %v389 = vpop.f32.mrb[0].mxu0
        %v390 = vadd.f32 %v247, %v389
        %v391 = vpop.f32.mrb[0].mxu0
        %v392 = vadd.f32 %v252, %v391
        %v393 = vpop.f32.mrb[0].mxu0
        %v394 = vadd.f32 %v252, %v393
        %395 = vmatprep.mubr.bf16.mxu0 0
        %396 = vmatmul.mubr.bf16.gmra.mrb[0].mxu0 %v332
        %v397 = vpop.f32.mrb[0].mxu0
        %v398 = vadd.f32 %v257, %v397
        %v399 = vpop.f32.mrb[0].mxu0
        %v400 = vadd.f32 %v257, %v399
        %v401 = vpop.f32.mrb[0].mxu0
        %v402 = vadd.f32 %v262, %v401
        %v403 = vpop.f32.mrb[0].mxu0
        %v404 = vadd.f32 %v262, %v403
        %405 = vmatprep.mubr.bf16.mxu0 0
        %406 = vmatmul.mubr.bf16.gmra.mrb[0].mxu0 %v335
        %v407 = vpop.f32.mrb[0].mxu0
        %v408 = vadd.f32 %v267, %v407
        %v409 = vpop.f32.mrb[0].mxu0
        %v410 = vadd.f32 %v267, %v409
        %v411 = vpop.f32.mrb[0].mxu0
        %v412 = vadd.f32 %v272, %v411
        %v413 = vpop.f32.mrb[0].mxu0
        %v414 = vadd.f32 %v272, %v413
        %415 = vmatprep.mubr.bf16.mxu0 0
        %416 = vmatmul.mubr.bf16.gmra.mrb[0].mxu0 %v338
        %v417 = vpop.f32.mrb[0].mxu0
        %v418 = vadd.f32 %v277, %v417
        %v419 = vpop.f32.mrb[0].mxu0
        %v420 = vadd.f32 %v277, %v419
        %v421 = vpop.f32.mrb[0].mxu0
        %v422 = vadd.f32 %v282, %v421
        %v423 = vpop.f32.mrb[0].mxu0
        %v424 = vadd.f32 %v282, %v423
        %425 = vmatprep.mubr.bf16.mxu0 0
        %426 = vmatmul.mubr.bf16.gmra.mrb[0].mxu0 %v341
        %v427 = vpop.f32.mrb[0].mxu0
        %v428 = vadd.f32 %v287, %v427
        %v429 = vpop.f32.mrb[0].mxu0
        %v430 = vadd.f32 %v287, %v429
        %v431 = vpop.f32.mrb[0].mxu0
        %v432 = vadd.f32 %v292, %v431
        %v433 = vpop.f32.mrb[0].mxu0
        %v434 = vadd.f32 %v292, %v433
        %435 = vdwg.mxu0
        %v436 = vmul.f32 %v378, 0.5
        %v437 = vmul.f32 %v380, 0.5
        %v438 = vmul.f32 %v382, 0.5
        %v439 = vmul.f32 %v384, 0.5
        %v440 = vmul.f32 %v388, 0.5
        %v441 = vmul.f32 %v390, 0.5
        %v442 = vmul.f32 %v392, 0.5
        %v443 = vmul.f32 %v394, 0.5
        %v444 = vpack.c.bf16 %v438, %v436
        %v445 = vpack.c.bf16 %v439, %v437
        %v446 = vpack.c.bf16 %v442, %v440
        %v447 = vpack.c.bf16 %v443, %v441
        %v448 = vpack.c.bf16 %v402, %v398
        %v449 = vpack.c.bf16 %v404, %v400
        %v450 = vpack.c.bf16 %v412, %v408
        %v451 = vpack.c.bf16 %v414, %v410
        %v452 = vpack.c.bf16 %v422, %v418
        %v453 = vpack.c.bf16 %v424, %v420
        %v454 = vpack.c.bf16 %v432, %v428
        %v455 = vpack.c.bf16 %v434, %v430
        %v460 = vcombine.low %v444, %v445
        %v461 = vcombine.high %v444, %v445
        %v463 = vunpack.c.l.s4 1983009808
        %v464 = vunpack.c.0.s8 %v463
        %v465 = vlaneseq
        %v466 = vshrl.u32 %v465, 7
        %v467 = vsub.s32 %v464, %v466
        %v468 = vrot.slane %v460, %v467
        %v470 = vunpack.c.l.s4 1983009808
        %v471 = vunpack.c.0.s8 %v470
        %v472 = vlaneseq
        %v473 = vshrl.u32 %v472, 7
        %v474 = vsub.s32 %v471, %v473
        %v475 = vrot.slane %v461, %v474
        %v476 = vcombine.high %v468, %v468
        %v477 = vcombine.high %v475, %v475
        %v478 = vcombine.low %v446, %v447
        %v479 = vcombine.high %v446, %v447
        %v481 = vunpack.c.l.s4 1983009808
        %v482 = vunpack.c.0.s8 %v481
        %v483 = vlaneseq
        %v484 = vshrl.u32 %v483, 7
        %v485 = vsub.s32 %v482, %v484
        %v486 = vrot.slane %v478, %v485
        %v488 = vunpack.c.l.s4 1983009808
        %v489 = vunpack.c.0.s8 %v488
        %v490 = vlaneseq
        %v491 = vshrl.u32 %v490, 7
        %v492 = vsub.s32 %v489, %v491
        %v493 = vrot.slane %v479, %v492
        %v494 = vcombine.high %v486, %v486
        %v495 = vcombine.high %v493, %v493
        %v500 = vcombine.low %v448, %v449
        %v501 = vcombine.high %v448, %v449
        %v503 = vunpack.c.l.s4 1983009808
        %v504 = vunpack.c.0.s8 %v503
        %v505 = vlaneseq
        %v506 = vshrl.u32 %v505, 7
        %v507 = vsub.s32 %v504, %v506
        %v508 = vrot.slane %v500, %v507
        %v510 = vunpack.c.l.s4 1983009808
        %v511 = vunpack.c.0.s8 %v510
        %v512 = vlaneseq
        %v513 = vshrl.u32 %v512, 7
        %v514 = vsub.s32 %v511, %v513
        %v515 = vrot.slane %v501, %v514
        %v516 = vcombine.high %v508, %v508
        %v517 = vcombine.high %v515, %v515
        %v518 = vcombine.low %v450, %v451
        %v519 = vcombine.high %v450, %v451
        %v521 = vunpack.c.l.s4 1983009808
        %v522 = vunpack.c.0.s8 %v521
        %v523 = vlaneseq
        %v524 = vshrl.u32 %v523, 7
        %v525 = vsub.s32 %v522, %v524
        %v526 = vrot.slane %v518, %v525
        %v528 = vunpack.c.l.s4 1983009808
        %v529 = vunpack.c.0.s8 %v528
        %v530 = vlaneseq
        %v531 = vshrl.u32 %v530, 7
        %v532 = vsub.s32 %v529, %v531
        %v533 = vrot.slane %v519, %v532
        %v534 = vcombine.high %v526, %v526
        %v535 = vcombine.high %v533, %v533
        %v540 = vcombine.low %v452, %v453
        %v541 = vcombine.high %v452, %v453
        %v543 = vunpack.c.l.s4 1983009808
        %v544 = vunpack.c.0.s8 %v543
        %v545 = vlaneseq
        %v546 = vshrl.u32 %v545, 7
        %v547 = vsub.s32 %v544, %v546
        %v548 = vrot.slane %v540, %v547
        %v550 = vunpack.c.l.s4 1983009808
        %v551 = vunpack.c.0.s8 %v550
        %v552 = vlaneseq
        %v553 = vshrl.u32 %v552, 7
        %v554 = vsub.s32 %v551, %v553
        %v555 = vrot.slane %v541, %v554
        %v556 = vcombine.high %v548, %v548
        %v557 = vcombine.high %v555, %v555
        %v558 = vcombine.low %v454, %v455
        %v559 = vcombine.high %v454, %v455
        %v561 = vunpack.c.l.s4 1983009808
        %v562 = vunpack.c.0.s8 %v561
        %v563 = vlaneseq
        %v564 = vshrl.u32 %v563, 7
        %v565 = vsub.s32 %v562, %v564
        %v566 = vrot.slane %v558, %v565
        %v568 = vunpack.c.l.s4 1983009808
        %v569 = vunpack.c.0.s8 %v568
        %v570 = vlaneseq
        %v571 = vshrl.u32 %v570, 7
        %v572 = vsub.s32 %v569, %v571
        %v573 = vrot.slane %v559, %v572
        %v574 = vcombine.high %v566, %v566
        %v575 = vcombine.high %v573, %v573
        %v577 = vunpack.c.l.s4 1983009808
        %v578 = vunpack.c.0.s8 %v577
        %v579 = vlaneseq
        %v580 = vshrl.u32 %v579, 7
        %v581 = vsub.s32 %v578, %v580
        %v582 = vrot.slane %v508, %v581
        %v583 = vcombine.high %v582, %v582
        %586 = vxpose.xlu0.c.b16.start [1/8] %v582, 128
        %587 = vxpose.xlu0.c.b16.cont [2/8] 0, 128
        %588 = vxpose.xlu0.c.b16.cont [3/8] 0, 128
        %589 = vxpose.xlu0.c.b16.cont [4/8] 0, 128
        %590 = vxpose.xlu0.c.b16.cont [5/8] 0, 128
        %591 = vxpose.xlu0.c.b16.cont [6/8] 0, 128
        %592 = vxpose.xlu0.c.b16.cont [7/8] 0, 128
        %593 = vxpose.xlu0.c.b16.end [8/8] 0, 128
        %v594 = vpop.trf.xlu0
        %v595 = vpop.trf.xlu0
        %v596 = vpop.trf.xlu0
        %v597 = vpop.trf.xlu0
        %v598 = vpop.trf.xlu0
        %v599 = vpop.trf.xlu0
        %v600 = vpop.trf.xlu0
        %v601 = vpop.trf.xlu0
        %602 = vxpose.xlu0.c.b16.start [1/8] %v583, 128
        %603 = vxpose.xlu0.c.b16.cont [2/8] 0, 128
        %604 = vxpose.xlu0.c.b16.cont [3/8] 0, 128
        %605 = vxpose.xlu0.c.b16.cont [4/8] 0, 128
        %606 = vxpose.xlu0.c.b16.cont [5/8] 0, 128
        %607 = vxpose.xlu0.c.b16.cont [6/8] 0, 128
        %608 = vxpose.xlu0.c.b16.cont [7/8] 0, 128
        %609 = vxpose.xlu0.c.b16.end [8/8] 0, 128
        %v610 = vpop.trf.xlu0
        %v611 = vpop.trf.xlu0
        %v612 = vpop.trf.xlu0
        %v613 = vpop.trf.xlu0
        %v614 = vpop.trf.xlu0
        %v615 = vpop.trf.xlu0
        %v616 = vpop.trf.xlu0
        %v617 = vpop.trf.xlu0
        %v619 = vunpack.c.l.s4 1983009808
        %v620 = vunpack.c.0.s8 %v619
        %v621 = vlaneseq
        %v622 = vshrl.u32 %v621, 7
        %v623 = vsub.s32 %v620, %v622
        %v624 = vrot.slane %v468, %v623
        %v625 = vcombine.high %v624, %v624
        %vm626 = vcmask 31744
        %v628 = vsel %vm626, %v594, 0
        %v631 = vsel %vm626, %v595, 0
        %v634 = vsel %vm626, %v596, 0
        %v637 = vsel %vm626, %v597, 0
        %v640 = vsel %vm626, %v598, 0
        %v643 = vsel %vm626, %v599, 0
        %v646 = vsel %vm626, %v600, 0
        %v649 = vsel %vm626, %v601, 0
        %v652 = vsel %vm626, %v610, 0
        %v655 = vsel %vm626, %v611, 0
        %v658 = vsel %vm626, %v612, 0
        %v661 = vsel %vm626, %v613, 0
        %v664 = vsel %vm626, %v614, 0
        %v667 = vsel %vm626, %v615, 0
        %v670 = vsel %vm626, %v616, 0
        %v673 = vsel %vm626, %v617, 0
        %vm675 = vcmask 1041408
        %v677 = vsel %vm675, %v624, 0
        %v680 = vsel %vm675, %v625, 0
        %682 = vmatprep.subr.bf16.mxu0 %v680
        %683 = vmatpush1.bf16.msra.mxu0 %v677
        %684 = vmatprep.subr.bf16.mxu0 0
        %685 = vmatpush1.bf16.msra.mxu0 0
        %686 = vmatprep.subr.bf16.mxu0 0
        %687 = vmatpush1.bf16.msra.mxu0 0
        %688 = vmatprep.subr.bf16.mxu0 0
        %689 = vmatpush1.bf16.msra.mxu0 0
        %690 = vmatprep.subr.bf16.mxu0 0
        %691 = vmatpush1.bf16.msra.mxu0 0
        %692 = vmatprep.subr.bf16.mxu0 0
        %693 = vmatpush1.bf16.msra.mxu0 0
        %694 = vmatprep.subr.bf16.mxu0 0
        %695 = vmatpush1.bf16.msra.mxu0 0
        %696 = vmatprep.subr.bf16.mxu0 0
        %697 = vmatpush1.bf16.msra.mxu0 0
        %698 = vmatprep.subr.bf16.mxu0 0
        %699 = vmatpush1.bf16.msra.mxu0 0
        %700 = vmatprep.subr.bf16.mxu0 0
        %701 = vmatpush1.bf16.msra.mxu0 0
        %702 = vmatprep.subr.bf16.mxu0 0
        %703 = vmatpush1.bf16.msra.mxu0 0
        %704 = vmatprep.subr.bf16.mxu0 0
        %705 = vmatpush1.bf16.msra.mxu0 0
        %706 = vmatprep.subr.bf16.mxu0 0
        %707 = vmatpush1.bf16.msra.mxu0 0
        %708 = vmatprep.subr.bf16.mxu0 0
        %709 = vmatpush1.bf16.msra.mxu0 0
        %710 = vmatprep.subr.bf16.mxu0 0
        %711 = vmatpush1.bf16.msra.mxu0 0
        %712 = vmatprep.subr.bf16.mxu0 0
        %713 = vmatpush1.bf16.msra.mxu0 0
        %714 = vmatprep.mubr.bf16.mxu0 0
        %715 = vmatmul.mubr.bf16.gmra.mrb[0].mxu0 %v628
        %v716 = vpop.f32.mrb[0].mxu0
        %v717 = vadd.f32 0.0, %v716
        %v718 = vpop.f32.mrb[0].mxu0
        %v719 = vadd.f32 0.0, %v718
        %v720 = vpop.f32.mrb[0].mxu0
        %v721 = vadd.f32 0.0, %v720
        %v722 = vpop.f32.mrb[0].mxu0
        %v723 = vadd.f32 0.0, %v722
        %724 = vmatprep.mubr.bf16.mxu0 0
        %725 = vmatmul.mubr.bf16.gmra.mrb[0].mxu0 %v631
        %v726 = vpop.f32.mrb[0].mxu0
        %v727 = vadd.f32 0.0, %v726
        %v728 = vpop.f32.mrb[0].mxu0
        %v729 = vadd.f32 0.0, %v728
        %v730 = vpop.f32.mrb[0].mxu0
        %v731 = vadd.f32 0.0, %v730
        %v732 = vpop.f32.mrb[0].mxu0
        %v733 = vadd.f32 0.0, %v732
        %734 = vmatprep.mubr.bf16.mxu0 0
        %735 = vmatmul.mubr.bf16.gmra.mrb[0].mxu0 %v634
        %v736 = vpop.f32.mrb[0].mxu0
        %v737 = vadd.f32 0.0, %v736
        %v738 = vpop.f32.mrb[0].mxu0
        %v739 = vadd.f32 0.0, %v738
        %v740 = vpop.f32.mrb[0].mxu0
        %v741 = vadd.f32 0.0, %v740
        %v742 = vpop.f32.mrb[0].mxu0
        %v743 = vadd.f32 0.0, %v742
        %744 = vmatprep.mubr.bf16.mxu0 0
        %745 = vmatmul.mubr.bf16.gmra.mrb[0].mxu0 %v637
        %v746 = vpop.f32.mrb[0].mxu0
        %v747 = vadd.f32 0.0, %v746
        %v748 = vpop.f32.mrb[0].mxu0
        %v749 = vadd.f32 0.0, %v748
        %v750 = vpop.f32.mrb[0].mxu0
        %v751 = vadd.f32 0.0, %v750
        %v752 = vpop.f32.mrb[0].mxu0
        %v753 = vadd.f32 0.0, %v752
        %754 = vmatprep.mubr.bf16.mxu0 0
        %755 = vmatmul.mubr.bf16.gmra.mrb[0].mxu0 %v640
        %v756 = vpop.f32.mrb[0].mxu0
        %v757 = vadd.f32 0.0, %v756
        %v758 = vpop.f32.mrb[0].mxu0
        %v759 = vadd.f32 0.0, %v758
        %v760 = vpop.f32.mrb[0].mxu0
        %v761 = vadd.f32 0.0, %v760
        %v762 = vpop.f32.mrb[0].mxu0
        %v763 = vadd.f32 0.0, %v762
        %764 = vmatprep.mubr.bf16.mxu0 0
        %765 = vmatmul.mubr.bf16.gmra.mrb[0].mxu0 %v643
        %v766 = vpop.f32.mrb[0].mxu0
        %v767 = vadd.f32 0.0, %v766
        %v768 = vpop.f32.mrb[0].mxu0
        %v769 = vadd.f32 0.0, %v768
        %v770 = vpop.f32.mrb[0].mxu0
        %v771 = vadd.f32 0.0, %v770
        %v772 = vpop.f32.mrb[0].mxu0
        %v773 = vadd.f32 0.0, %v772
        %774 = vmatprep.mubr.bf16.mxu0 0
        %775 = vmatmul.mubr.bf16.gmra.mrb[0].mxu0 %v646
        %v776 = vpop.f32.mrb[0].mxu0
        %v777 = vadd.f32 0.0, %v776
        %v778 = vpop.f32.mrb[0].mxu0
        %v779 = vadd.f32 0.0, %v778
        %v780 = vpop.f32.mrb[0].mxu0
        %v781 = vadd.f32 0.0, %v780
        %v782 = vpop.f32.mrb[0].mxu0
        %v783 = vadd.f32 0.0, %v782
        %784 = vmatprep.mubr.bf16.mxu0 0
        %785 = vmatmul.mubr.bf16.gmra.mrb[0].mxu0 %v649
        %v786 = vpop.f32.mrb[0].mxu0
        %v787 = vadd.f32 0.0, %v786
        %v788 = vpop.f32.mrb[0].mxu0
        %v789 = vadd.f32 0.0, %v788
        %v790 = vpop.f32.mrb[0].mxu0
        %v791 = vadd.f32 0.0, %v790
        %v792 = vpop.f32.mrb[0].mxu0
        %v793 = vadd.f32 0.0, %v792
        %794 = vmatprep.mubr.bf16.mxu0 0
        %795 = vmatmul.mubr.bf16.gmra.mrb[0].mxu0 %v652
        %v796 = vpop.f32.mrb[0].mxu0
        %v797 = vadd.f32 0.0, %v796
        %v798 = vpop.f32.mrb[0].mxu0
        %v799 = vadd.f32 0.0, %v798
        %v800 = vpop.f32.mrb[0].mxu0
        %v801 = vadd.f32 0.0, %v800
        %v802 = vpop.f32.mrb[0].mxu0
        %v803 = vadd.f32 0.0, %v802
        %804 = vmatprep.mubr.bf16.mxu0 0
        %805 = vmatmul.mubr.bf16.gmra.mrb[0].mxu0 %v655
        %v806 = vpop.f32.mrb[0].mxu0
        %v807 = vadd.f32 0.0, %v806
        %v808 = vpop.f32.mrb[0].mxu0
        %v809 = vadd.f32 0.0, %v808
        %v810 = vpop.f32.mrb[0].mxu0
        %v811 = vadd.f32 0.0, %v810
        %v812 = vpop.f32.mrb[0].mxu0
        %v813 = vadd.f32 0.0, %v812
        %814 = vmatprep.mubr.bf16.mxu0 0
        %815 = vmatmul.mubr.bf16.gmra.mrb[0].mxu0 %v658
        %v816 = vpop.f32.mrb[0].mxu0
        %v817 = vadd.f32 0.0, %v816
        %v818 = vpop.f32.mrb[0].mxu0
        %v819 = vadd.f32 0.0, %v818
        %v820 = vpop.f32.mrb[0].mxu0
        %v821 = vadd.f32 0.0, %v820
        %v822 = vpop.f32.mrb[0].mxu0
        %v823 = vadd.f32 0.0, %v822
        %824 = vmatprep.mubr.bf16.mxu0 0
        %825 = vmatmul.mubr.bf16.gmra.mrb[0].mxu0 %v661
        %v826 = vpop.f32.mrb[0].mxu0
        %v827 = vadd.f32 0.0, %v826
        %v828 = vpop.f32.mrb[0].mxu0
        %v829 = vadd.f32 0.0, %v828
        %v830 = vpop.f32.mrb[0].mxu0
        %v831 = vadd.f32 0.0, %v830
        %v832 = vpop.f32.mrb[0].mxu0
        %v833 = vadd.f32 0.0, %v832
        %834 = vmatprep.mubr.bf16.mxu0 0
        %835 = vmatmul.mubr.bf16.gmra.mrb[0].mxu0 %v664
        %v836 = vpop.f32.mrb[0].mxu0
        %v837 = vadd.f32 0.0, %v836
        %v838 = vpop.f32.mrb[0].mxu0
        %v839 = vadd.f32 0.0, %v838
        %v840 = vpop.f32.mrb[0].mxu0
        %v841 = vadd.f32 0.0, %v840
        %v842 = vpop.f32.mrb[0].mxu0
        %v843 = vadd.f32 0.0, %v842
        %844 = vmatprep.mubr.bf16.mxu0 0
        %845 = vmatmul.mubr.bf16.gmra.mrb[0].mxu0 %v667
        %v846 = vpop.f32.mrb[0].mxu0
        %v847 = vadd.f32 0.0, %v846
        %v848 = vpop.f32.mrb[0].mxu0
        %v849 = vadd.f32 0.0, %v848
        %v850 = vpop.f32.mrb[0].mxu0
        %v851 = vadd.f32 0.0, %v850
        %v852 = vpop.f32.mrb[0].mxu0
        %v853 = vadd.f32 0.0, %v852
        %854 = vmatprep.mubr.bf16.mxu0 0
        %855 = vmatmul.mubr.bf16.gmra.mrb[0].mxu0 %v670
        %v856 = vpop.f32.mrb[0].mxu0
        %v857 = vadd.f32 0.0, %v856
        %v858 = vpop.f32.mrb[0].mxu0
        %v859 = vadd.f32 0.0, %v858
        %v860 = vpop.f32.mrb[0].mxu0
        %v861 = vadd.f32 0.0, %v860
        %v862 = vpop.f32.mrb[0].mxu0
        %v863 = vadd.f32 0.0, %v862
        %864 = vmatprep.mubr.bf16.mxu0 0
        %865 = vmatmul.mubr.bf16.gmra.mrb[0].mxu0 %v673
        %v866 = vpop.f32.mrb[0].mxu0
        %v867 = vadd.f32 0.0, %v866
        %v868 = vpop.f32.mrb[0].mxu0
        %v869 = vadd.f32 0.0, %v868
        %v870 = vpop.f32.mrb[0].mxu0
        %v871 = vadd.f32 0.0, %v870
        %v872 = vpop.f32.mrb[0].mxu0
        %v873 = vadd.f32 0.0, %v872
        %874 = vdwg.mxu0
        %v876 = vunpack.c.l.s4 1983009808
        %v877 = vunpack.c.0.s8 %v876
        %v878 = vlaneseq
        %v879 = vshrl.u32 %v878, 7
        %v880 = vsub.s32 %v877, %v879
        %v881 = vrot.slane %v516, %v880
        %v882 = vcombine.high %v881, %v881
        %885 = vxpose.xlu0.c.b16.start [1/8] %v881, 128
        %886 = vxpose.xlu0.c.b16.cont [2/8] 0, 128
        %887 = vxpose.xlu0.c.b16.cont [3/8] 0, 128
        %888 = vxpose.xlu0.c.b16.cont [4/8] 0, 128
        %889 = vxpose.xlu0.c.b16.cont [5/8] 0, 128
        %890 = vxpose.xlu0.c.b16.cont [6/8] 0, 128
        %891 = vxpose.xlu0.c.b16.cont [7/8] 0, 128
        %892 = vxpose.xlu0.c.b16.end [8/8] 0, 128
        %v893 = vpop.trf.xlu0
        %v894 = vpop.trf.xlu0
        %v895 = vpop.trf.xlu0
        %v896 = vpop.trf.xlu0
        %v897 = vpop.trf.xlu0
        %v898 = vpop.trf.xlu0
        %v899 = vpop.trf.xlu0
        %v900 = vpop.trf.xlu0
        %901 = vxpose.xlu0.c.b16.start [1/8] %v882, 128
        %902 = vxpose.xlu0.c.b16.cont [2/8] 0, 128
        %903 = vxpose.xlu0.c.b16.cont [3/8] 0, 128
        %904 = vxpose.xlu0.c.b16.cont [4/8] 0, 128
        %905 = vxpose.xlu0.c.b16.cont [5/8] 0, 128
        %906 = vxpose.xlu0.c.b16.cont [6/8] 0, 128
        %907 = vxpose.xlu0.c.b16.cont [7/8] 0, 128
        %908 = vxpose.xlu0.c.b16.end [8/8] 0, 128
        %v909 = vpop.trf.xlu0
        %v910 = vpop.trf.xlu0
        %v911 = vpop.trf.xlu0
        %v912 = vpop.trf.xlu0
        %v913 = vpop.trf.xlu0
        %v914 = vpop.trf.xlu0
        %v915 = vpop.trf.xlu0
        %v916 = vpop.trf.xlu0
        %v918 = vunpack.c.l.s4 1983009808
        %v919 = vunpack.c.0.s8 %v918
        %v920 = vlaneseq
        %v921 = vshrl.u32 %v920, 7
        %v922 = vsub.s32 %v919, %v921
        %v923 = vrot.slane %v476, %v922
        %v924 = vcombine.high %v923, %v923
        %v926 = vsel %vm626, %v893, 0
        %v929 = vsel %vm626, %v894, 0
        %v932 = vsel %vm626, %v895, 0
        %v935 = vsel %vm626, %v896, 0
        %v938 = vsel %vm626, %v897, 0
        %v941 = vsel %vm626, %v898, 0
        %v944 = vsel %vm626, %v899, 0
        %v947 = vsel %vm626, %v900, 0
        %v950 = vsel %vm626, %v909, 0
        %v953 = vsel %vm626, %v910, 0
        %v956 = vsel %vm626, %v911, 0
        %v959 = vsel %vm626, %v912, 0
        %v962 = vsel %vm626, %v913, 0
        %v965 = vsel %vm626, %v914, 0
        %v968 = vsel %vm626, %v915, 0
        %v971 = vsel %vm626, %v916, 0
        %v974 = vsel %vm675, %v923, 0
        %v977 = vsel %vm675, %v924, 0
        %979 = vmatprep.subr.bf16.mxu0 %v977
        %980 = vmatpush1.bf16.msra.mxu0 %v974
        %981 = vmatprep.subr.bf16.mxu0 0
        %982 = vmatpush1.bf16.msra.mxu0 0
        %983 = vmatprep.subr.bf16.mxu0 0
        %984 = vmatpush1.bf16.msra.mxu0 0
        %985 = vmatprep.subr.bf16.mxu0 0
        %986 = vmatpush1.bf16.msra.mxu0 0
        %987 = vmatprep.subr.bf16.mxu0 0
        %988 = vmatpush1.bf16.msra.mxu0 0
        %989 = vmatprep.subr.bf16.mxu0 0
        %990 = vmatpush1.bf16.msra.mxu0 0
        %991 = vmatprep.subr.bf16.mxu0 0
        %992 = vmatpush1.bf16.msra.mxu0 0
        %993 = vmatprep.subr.bf16.mxu0 0
        %994 = vmatpush1.bf16.msra.mxu0 0
        %995 = vmatprep.subr.bf16.mxu0 0
        %996 = vmatpush1.bf16.msra.mxu0 0
        %997 = vmatprep.subr.bf16.mxu0 0
        %998 = vmatpush1.bf16.msra.mxu0 0
        %999 = vmatprep.subr.bf16.mxu0 0
        %1000 = vmatpush1.bf16.msra.mxu0 0
        %1001 = vmatprep.subr.bf16.mxu0 0
        %1002 = vmatpush1.bf16.msra.mxu0 0
        %1003 = vmatprep.subr.bf16.mxu0 0
        %1004 = vmatpush1.bf16.msra.mxu0 0
        %1005 = vmatprep.subr.bf16.mxu0 0
        %1006 = vmatpush1.bf16.msra.mxu0 0
        %1007 = vmatprep.subr.bf16.mxu0 0
        %1008 = vmatpush1.bf16.msra.mxu0 0
        %1009 = vmatprep.subr.bf16.mxu0 0
        %1010 = vmatpush1.bf16.msra.mxu0 0
        %1011 = vmatprep.mubr.bf16.mxu0 0
        %1012 = vmatmul.mubr.bf16.gmra.mrb[0].mxu0 %v926
        %v1013 = vpop.f32.mrb[0].mxu0
        %v1014 = vadd.f32 0.0, %v1013
        %v1015 = vpop.f32.mrb[0].mxu0
        %v1016 = vadd.f32 0.0, %v1015
        %v1017 = vpop.f32.mrb[0].mxu0
        %v1018 = vadd.f32 0.0, %v1017
        %v1019 = vpop.f32.mrb[0].mxu0
        %v1020 = vadd.f32 0.0, %v1019
        %1021 = vmatprep.mubr.bf16.mxu0 0
        %1022 = vmatmul.mubr.bf16.gmra.mrb[0].mxu0 %v929
        %v1023 = vpop.f32.mrb[0].mxu0
        %v1024 = vadd.f32 0.0, %v1023
        %v1025 = vpop.f32.mrb[0].mxu0
        %v1026 = vadd.f32 0.0, %v1025
        %v1027 = vpop.f32.mrb[0].mxu0
        %v1028 = vadd.f32 0.0, %v1027
        %v1029 = vpop.f32.mrb[0].mxu0
        %v1030 = vadd.f32 0.0, %v1029
        %1031 = vmatprep.mubr.bf16.mxu0 0
        %1032 = vmatmul.mubr.bf16.gmra.mrb[0].mxu0 %v932
        %v1033 = vpop.f32.mrb[0].mxu0
        %v1034 = vadd.f32 0.0, %v1033
        %v1035 = vpop.f32.mrb[0].mxu0
        %v1036 = vadd.f32 0.0, %v1035
        %v1037 = vpop.f32.mrb[0].mxu0
        %v1038 = vadd.f32 0.0, %v1037
        %v1039 = vpop.f32.mrb[0].mxu0
        %v1040 = vadd.f32 0.0, %v1039
        %1041 = vmatprep.mubr.bf16.mxu0 0
        %1042 = vmatmul.mubr.bf16.gmra.mrb[0].mxu0 %v935
        %v1043 = vpop.f32.mrb[0].mxu0
        %v1044 = vadd.f32 0.0, %v1043
        %v1045 = vpop.f32.mrb[0].mxu0
        %v1046 = vadd.f32 0.0, %v1045
        %v1047 = vpop.f32.mrb[0].mxu0
        %v1048 = vadd.f32 0.0, %v1047
        %v1049 = vpop.f32.mrb[0].mxu0
        %v1050 = vadd.f32 0.0, %v1049
        %1051 = vmatprep.mubr.bf16.mxu0 0
        %1052 = vmatmul.mubr.bf16.gmra.mrb[0].mxu0 %v938
        %v1053 = vpop.f32.mrb[0].mxu0
        %v1054 = vadd.f32 0.0, %v1053
        %v1055 = vpop.f32.mrb[0].mxu0
        %v1056 = vadd.f32 0.0, %v1055
        %v1057 = vpop.f32.mrb[0].mxu0
        %v1058 = vadd.f32 0.0, %v1057
        %v1059 = vpop.f32.mrb[0].mxu0
        %v1060 = vadd.f32 0.0, %v1059
        %1061 = vmatprep.mubr.bf16.mxu0 0
        %1062 = vmatmul.mubr.bf16.gmra.mrb[0].mxu0 %v941
        %v1063 = vpop.f32.mrb[0].mxu0
        %v1064 = vadd.f32 0.0, %v1063
        %v1065 = vpop.f32.mrb[0].mxu0
        %v1066 = vadd.f32 0.0, %v1065
        %v1067 = vpop.f32.mrb[0].mxu0
        %v1068 = vadd.f32 0.0, %v1067
        %v1069 = vpop.f32.mrb[0].mxu0
        %v1070 = vadd.f32 0.0, %v1069
        %1071 = vmatprep.mubr.bf16.mxu0 0
        %1072 = vmatmul.mubr.bf16.gmra.mrb[0].mxu0 %v944
        %v1073 = vpop.f32.mrb[0].mxu0
        %v1074 = vadd.f32 0.0, %v1073
        %v1075 = vpop.f32.mrb[0].mxu0
        %v1076 = vadd.f32 0.0, %v1075
        %v1077 = vpop.f32.mrb[0].mxu0
        %v1078 = vadd.f32 0.0, %v1077
        %v1079 = vpop.f32.mrb[0].mxu0
        %v1080 = vadd.f32 0.0, %v1079
        %1081 = vmatprep.mubr.bf16.mxu0 0
        %1082 = vmatmul.mubr.bf16.gmra.mrb[0].mxu0 %v947
        %v1083 = vpop.f32.mrb[0].mxu0
        %v1084 = vadd.f32 0.0, %v1083
        %v1085 = vpop.f32.mrb[0].mxu0
        %v1086 = vadd.f32 0.0, %v1085
        %v1087 = vpop.f32.mrb[0].mxu0
        %v1088 = vadd.f32 0.0, %v1087
        %v1089 = vpop.f32.mrb[0].mxu0
        %v1090 = vadd.f32 0.0, %v1089
        %1091 = vmatprep.mubr.bf16.mxu0 0
        %1092 = vmatmul.mubr.bf16.gmra.mrb[0].mxu0 %v950
        %v1093 = vpop.f32.mrb[0].mxu0
        %v1094 = vadd.f32 0.0, %v1093
        %v1095 = vpop.f32.mrb[0].mxu0
        %v1096 = vadd.f32 0.0, %v1095
        %v1097 = vpop.f32.mrb[0].mxu0
        %v1098 = vadd.f32 0.0, %v1097
        %v1099 = vpop.f32.mrb[0].mxu0
        %v1100 = vadd.f32 0.0, %v1099
        %1101 = vmatprep.mubr.bf16.mxu0 0
        %1102 = vmatmul.mubr.bf16.gmra.mrb[0].mxu0 %v953
        %v1103 = vpop.f32.mrb[0].mxu0
        %v1104 = vadd.f32 0.0, %v1103
        %v1105 = vpop.f32.mrb[0].mxu0
        %v1106 = vadd.f32 0.0, %v1105
        %v1107 = vpop.f32.mrb[0].mxu0
        %v1108 = vadd.f32 0.0, %v1107
        %v1109 = vpop.f32.mrb[0].mxu0
        %v1110 = vadd.f32 0.0, %v1109
        %1111 = vmatprep.mubr.bf16.mxu0 0
        %1112 = vmatmul.mubr.bf16.gmra.mrb[0].mxu0 %v956
        %v1113 = vpop.f32.mrb[0].mxu0
        %v1114 = vadd.f32 0.0, %v1113
        %v1115 = vpop.f32.mrb[0].mxu0
        %v1116 = vadd.f32 0.0, %v1115
        %v1117 = vpop.f32.mrb[0].mxu0
        %v1118 = vadd.f32 0.0, %v1117
        %v1119 = vpop.f32.mrb[0].mxu0
        %v1120 = vadd.f32 0.0, %v1119
        %1121 = vmatprep.mubr.bf16.mxu0 0
        %1122 = vmatmul.mubr.bf16.gmra.mrb[0].mxu0 %v959
        %v1123 = vpop.f32.mrb[0].mxu0
        %v1124 = vadd.f32 0.0, %v1123
        %v1125 = vpop.f32.mrb[0].mxu0
        %v1126 = vadd.f32 0.0, %v1125
        %v1127 = vpop.f32.mrb[0].mxu0
        %v1128 = vadd.f32 0.0, %v1127
        %v1129 = vpop.f32.mrb[0].mxu0
        %v1130 = vadd.f32 0.0, %v1129
        %1131 = vmatprep.mubr.bf16.mxu0 0
        %1132 = vmatmul.mubr.bf16.gmra.mrb[0].mxu0 %v962
        %v1133 = vpop.f32.mrb[0].mxu0
        %v1134 = vadd.f32 0.0, %v1133
        %v1135 = vpop.f32.mrb[0].mxu0
        %v1136 = vadd.f32 0.0, %v1135
        %v1137 = vpop.f32.mrb[0].mxu0
        %v1138 = vadd.f32 0.0, %v1137
        %v1139 = vpop.f32.mrb[0].mxu0
        %v1140 = vadd.f32 0.0, %v1139
        %1141 = vmatprep.mubr.bf16.mxu0 0
        %1142 = vmatmul.mubr.bf16.gmra.mrb[0].mxu0 %v965
        %v1143 = vpop.f32.mrb[0].mxu0
        %v1144 = vadd.f32 0.0, %v1143
        %v1145 = vpop.f32.mrb[0].mxu0
        %v1146 = vadd.f32 0.0, %v1145
        %v1147 = vpop.f32.mrb[0].mxu0
        %v1148 = vadd.f32 0.0, %v1147
        %v1149 = vpop.f32.mrb[0].mxu0
        %v1150 = vadd.f32 0.0, %v1149
        %1151 = vmatprep.mubr.bf16.mxu0 0
        %1152 = vmatmul.mubr.bf16.gmra.mrb[0].mxu0 %v968
        %v1153 = vpop.f32.mrb[0].mxu0
        %v1154 = vadd.f32 0.0, %v1153
        %v1155 = vpop.f32.mrb[0].mxu0
        %v1156 = vadd.f32 0.0, %v1155
        %v1157 = vpop.f32.mrb[0].mxu0
        %v1158 = vadd.f32 0.0, %v1157
        %v1159 = vpop.f32.mrb[0].mxu0
        %v1160 = vadd.f32 0.0, %v1159
        %1161 = vmatprep.mubr.bf16.mxu0 0
        %1162 = vmatmul.mubr.bf16.gmra.mrb[0].mxu0 %v971
        %v1163 = vpop.f32.mrb[0].mxu0
        %v1164 = vadd.f32 0.0, %v1163
        %v1165 = vpop.f32.mrb[0].mxu0
        %v1166 = vadd.f32 0.0, %v1165
        %v1167 = vpop.f32.mrb[0].mxu0
        %v1168 = vadd.f32 0.0, %v1167
        %v1169 = vpop.f32.mrb[0].mxu0
        %v1170 = vadd.f32 0.0, %v1169
        %1171 = vdwg.mxu0
        %v1173 = vunpack.c.l.s4 1983009808
        %v1174 = vunpack.c.0.s8 %v1173
        %v1175 = vlaneseq
        %v1176 = vshrl.u32 %v1175, 7
        %v1177 = vsub.s32 %v1174, %v1176
        %v1178 = vrot.slane %v515, %v1177
        %v1179 = vcombine.high %v1178, %v1178
        %1182 = vxpose.xlu0.c.b16.start [1/8] %v1178, 128
        %1183 = vxpose.xlu0.c.b16.cont [2/8] 0, 128
        %1184 = vxpose.xlu0.c.b16.cont [3/8] 0, 128
        %1185 = vxpose.xlu0.c.b16.cont [4/8] 0, 128
        %1186 = vxpose.xlu0.c.b16.cont [5/8] 0, 128
        %1187 = vxpose.xlu0.c.b16.cont [6/8] 0, 128
        %1188 = vxpose.xlu0.c.b16.cont [7/8] 0, 128
        %1189 = vxpose.xlu0.c.b16.end [8/8] 0, 128
        %v1190 = vpop.trf.xlu0
        %v1191 = vpop.trf.xlu0
        %v1192 = vpop.trf.xlu0
        %v1193 = vpop.trf.xlu0
        %v1194 = vpop.trf.xlu0
        %v1195 = vpop.trf.xlu0
        %v1196 = vpop.trf.xlu0
        %v1197 = vpop.trf.xlu0
        %1198 = vxpose.xlu0.c.b16.start [1/8] %v1179, 128
        %1199 = vxpose.xlu0.c.b16.cont [2/8] 0, 128
        %1200 = vxpose.xlu0.c.b16.cont [3/8] 0, 128
        %1201 = vxpose.xlu0.c.b16.cont [4/8] 0, 128
        %1202 = vxpose.xlu0.c.b16.cont [5/8] 0, 128
        %1203 = vxpose.xlu0.c.b16.cont [6/8] 0, 128
        %1204 = vxpose.xlu0.c.b16.cont [7/8] 0, 128
        %1205 = vxpose.xlu0.c.b16.end [8/8] 0, 128
        %v1206 = vpop.trf.xlu0
        %v1207 = vpop.trf.xlu0
        %v1208 = vpop.trf.xlu0
        %v1209 = vpop.trf.xlu0
        %v1210 = vpop.trf.xlu0
        %v1211 = vpop.trf.xlu0
        %v1212 = vpop.trf.xlu0
        %v1213 = vpop.trf.xlu0
        %v1215 = vunpack.c.l.s4 1983009808
        %v1216 = vunpack.c.0.s8 %v1215
        %v1217 = vlaneseq
        %v1218 = vshrl.u32 %v1217, 7
        %v1219 = vsub.s32 %v1216, %v1218
        %v1220 = vrot.slane %v475, %v1219
        %v1221 = vcombine.high %v1220, %v1220
        %v1223 = vsel %vm626, %v1190, 0
        %v1226 = vsel %vm626, %v1191, 0
        %v1229 = vsel %vm626, %v1192, 0
        %v1232 = vsel %vm626, %v1193, 0
        %v1235 = vsel %vm626, %v1194, 0
        %v1238 = vsel %vm626, %v1195, 0
        %v1241 = vsel %vm626, %v1196, 0
        %v1244 = vsel %vm626, %v1197, 0
        %v1247 = vsel %vm626, %v1206, 0
        %v1250 = vsel %vm626, %v1207, 0
        %v1253 = vsel %vm626, %v1208, 0
        %v1256 = vsel %vm626, %v1209, 0
        %v1259 = vsel %vm626, %v1210, 0
        %v1262 = vsel %vm626, %v1211, 0
        %v1265 = vsel %vm626, %v1212, 0
        %v1268 = vsel %vm626, %v1213, 0
        %v1271 = vsel %vm675, %v1220, 0
        %v1274 = vsel %vm675, %v1221, 0
        %1276 = vmatprep.subr.bf16.mxu0 %v1274
        %1277 = vmatpush1.bf16.msra.mxu0 %v1271
        %1278 = vmatprep.subr.bf16.mxu0 0
        %1279 = vmatpush1.bf16.msra.mxu0 0
        %1280 = vmatprep.subr.bf16.mxu0 0
        %1281 = vmatpush1.bf16.msra.mxu0 0
        %1282 = vmatprep.subr.bf16.mxu0 0
        %1283 = vmatpush1.bf16.msra.mxu0 0
        %1284 = vmatprep.subr.bf16.mxu0 0
        %1285 = vmatpush1.bf16.msra.mxu0 0
        %1286 = vmatprep.subr.bf16.mxu0 0
        %1287 = vmatpush1.bf16.msra.mxu0 0
        %1288 = vmatprep.subr.bf16.mxu0 0
        %1289 = vmatpush1.bf16.msra.mxu0 0
        %1290 = vmatprep.subr.bf16.mxu0 0
        %1291 = vmatpush1.bf16.msra.mxu0 0
        %1292 = vmatprep.subr.bf16.mxu0 0
        %1293 = vmatpush1.bf16.msra.mxu0 0
        %1294 = vmatprep.subr.bf16.mxu0 0
        %1295 = vmatpush1.bf16.msra.mxu0 0
        %1296 = vmatprep.subr.bf16.mxu0 0
        %1297 = vmatpush1.bf16.msra.mxu0 0
        %1298 = vmatprep.subr.bf16.mxu0 0
        %1299 = vmatpush1.bf16.msra.mxu0 0
        %1300 = vmatprep.subr.bf16.mxu0 0
        %1301 = vmatpush1.bf16.msra.mxu0 0
        %1302 = vmatprep.subr.bf16.mxu0 0
        %1303 = vmatpush1.bf16.msra.mxu0 0
        %1304 = vmatprep.subr.bf16.mxu0 0
        %1305 = vmatpush1.bf16.msra.mxu0 0
        %1306 = vmatprep.subr.bf16.mxu0 0
        %1307 = vmatpush1.bf16.msra.mxu0 0
        %1308 = vmatprep.mubr.bf16.mxu0 0
        %1309 = vmatmul.mubr.bf16.gmra.mrb[0].mxu0 %v1223
        %v1310 = vpop.f32.mrb[0].mxu0
        %v1311 = vadd.f32 0.0, %v1310
        %v1312 = vpop.f32.mrb[0].mxu0
        %v1313 = vadd.f32 0.0, %v1312
        %v1314 = vpop.f32.mrb[0].mxu0
        %v1315 = vadd.f32 0.0, %v1314
        %v1316 = vpop.f32.mrb[0].mxu0
        %v1317 = vadd.f32 0.0, %v1316
        %1318 = vmatprep.mubr.bf16.mxu0 0
        %1319 = vmatmul.mubr.bf16.gmra.mrb[0].mxu0 %v1226
        %v1320 = vpop.f32.mrb[0].mxu0
        %v1321 = vadd.f32 0.0, %v1320
        %v1322 = vpop.f32.mrb[0].mxu0
        %v1323 = vadd.f32 0.0, %v1322
        %v1324 = vpop.f32.mrb[0].mxu0
        %v1325 = vadd.f32 0.0, %v1324
        %v1326 = vpop.f32.mrb[0].mxu0
        %v1327 = vadd.f32 0.0, %v1326
        %1328 = vmatprep.mubr.bf16.mxu0 0
        %1329 = vmatmul.mubr.bf16.gmra.mrb[0].mxu0 %v1229
        %v1330 = vpop.f32.mrb[0].mxu0
        %v1331 = vadd.f32 0.0, %v1330
        %v1332 = vpop.f32.mrb[0].mxu0
        %v1333 = vadd.f32 0.0, %v1332
        %v1334 = vpop.f32.mrb[0].mxu0
        %v1335 = vadd.f32 0.0, %v1334
        %v1336 = vpop.f32.mrb[0].mxu0
        %v1337 = vadd.f32 0.0, %v1336
        %1338 = vmatprep.mubr.bf16.mxu0 0
        %1339 = vmatmul.mubr.bf16.gmra.mrb[0].mxu0 %v1232
        %v1340 = vpop.f32.mrb[0].mxu0
        %v1341 = vadd.f32 0.0, %v1340
        %v1342 = vpop.f32.mrb[0].mxu0
        %v1343 = vadd.f32 0.0, %v1342
        %v1344 = vpop.f32.mrb[0].mxu0
        %v1345 = vadd.f32 0.0, %v1344
        %v1346 = vpop.f32.mrb[0].mxu0
        %v1347 = vadd.f32 0.0, %v1346
        %1348 = vmatprep.mubr.bf16.mxu0 0
        %1349 = vmatmul.mubr.bf16.gmra.mrb[0].mxu0 %v1235
        %v1350 = vpop.f32.mrb[0].mxu0
        %v1351 = vadd.f32 0.0, %v1350
        %v1352 = vpop.f32.mrb[0].mxu0
        %v1353 = vadd.f32 0.0, %v1352
        %v1354 = vpop.f32.mrb[0].mxu0
        %v1355 = vadd.f32 0.0, %v1354
        %v1356 = vpop.f32.mrb[0].mxu0
        %v1357 = vadd.f32 0.0, %v1356
        %1358 = vmatprep.mubr.bf16.mxu0 0
        %1359 = vmatmul.mubr.bf16.gmra.mrb[0].mxu0 %v1238
        %v1360 = vpop.f32.mrb[0].mxu0
        %v1361 = vadd.f32 0.0, %v1360
        %v1362 = vpop.f32.mrb[0].mxu0
        %v1363 = vadd.f32 0.0, %v1362
        %v1364 = vpop.f32.mrb[0].mxu0
        %v1365 = vadd.f32 0.0, %v1364
        %v1366 = vpop.f32.mrb[0].mxu0
        %v1367 = vadd.f32 0.0, %v1366
        %1368 = vmatprep.mubr.bf16.mxu0 0
        %1369 = vmatmul.mubr.bf16.gmra.mrb[0].mxu0 %v1241
        %v1370 = vpop.f32.mrb[0].mxu0
        %v1371 = vadd.f32 0.0, %v1370
        %v1372 = vpop.f32.mrb[0].mxu0
        %v1373 = vadd.f32 0.0, %v1372
        %v1374 = vpop.f32.mrb[0].mxu0
        %v1375 = vadd.f32 0.0, %v1374
        %v1376 = vpop.f32.mrb[0].mxu0
        %v1377 = vadd.f32 0.0, %v1376
        %1378 = vmatprep.mubr.bf16.mxu0 0
        %1379 = vmatmul.mubr.bf16.gmra.mrb[0].mxu0 %v1244
        %v1380 = vpop.f32.mrb[0].mxu0
        %v1381 = vadd.f32 0.0, %v1380
        %v1382 = vpop.f32.mrb[0].mxu0
        %v1383 = vadd.f32 0.0, %v1382
        %v1384 = vpop.f32.mrb[0].mxu0
        %v1385 = vadd.f32 0.0, %v1384
        %v1386 = vpop.f32.mrb[0].mxu0
        %v1387 = vadd.f32 0.0, %v1386
        %1388 = vmatprep.mubr.bf16.mxu0 0
        %1389 = vmatmul.mubr.bf16.gmra.mrb[0].mxu0 %v1247
        %v1390 = vpop.f32.mrb[0].mxu0
        %v1391 = vadd.f32 0.0, %v1390
        %v1392 = vpop.f32.mrb[0].mxu0
        %v1393 = vadd.f32 0.0, %v1392
        %v1394 = vpop.f32.mrb[0].mxu0
        %v1395 = vadd.f32 0.0, %v1394
        %v1396 = vpop.f32.mrb[0].mxu0
        %v1397 = vadd.f32 0.0, %v1396
        %1398 = vmatprep.mubr.bf16.mxu0 0
        %1399 = vmatmul.mubr.bf16.gmra.mrb[0].mxu0 %v1250
        %v1400 = vpop.f32.mrb[0].mxu0
        %v1401 = vadd.f32 0.0, %v1400
        %v1402 = vpop.f32.mrb[0].mxu0
        %v1403 = vadd.f32 0.0, %v1402
        %v1404 = vpop.f32.mrb[0].mxu0
        %v1405 = vadd.f32 0.0, %v1404
        %v1406 = vpop.f32.mrb[0].mxu0
        %v1407 = vadd.f32 0.0, %v1406
        %1408 = vmatprep.mubr.bf16.mxu0 0
        %1409 = vmatmul.mubr.bf16.gmra.mrb[0].mxu0 %v1253
        %v1410 = vpop.f32.mrb[0].mxu0
        %v1411 = vadd.f32 0.0, %v1410
        %v1412 = vpop.f32.mrb[0].mxu0
        %v1413 = vadd.f32 0.0, %v1412
        %v1414 = vpop.f32.mrb[0].mxu0
        %v1415 = vadd.f32 0.0, %v1414
        %v1416 = vpop.f32.mrb[0].mxu0
        %v1417 = vadd.f32 0.0, %v1416
        %1418 = vmatprep.mubr.bf16.mxu0 0
        %1419 = vmatmul.mubr.bf16.gmra.mrb[0].mxu0 %v1256
        %v1420 = vpop.f32.mrb[0].mxu0
        %v1421 = vadd.f32 0.0, %v1420
        %v1422 = vpop.f32.mrb[0].mxu0
        %v1423 = vadd.f32 0.0, %v1422
        %v1424 = vpop.f32.mrb[0].mxu0
        %v1425 = vadd.f32 0.0, %v1424
        %v1426 = vpop.f32.mrb[0].mxu0
        %v1427 = vadd.f32 0.0, %v1426
        %1428 = vmatprep.mubr.bf16.mxu0 0
        %1429 = vmatmul.mubr.bf16.gmra.mrb[0].mxu0 %v1259
        %v1430 = vpop.f32.mrb[0].mxu0
        %v1431 = vadd.f32 0.0, %v1430
        %v1432 = vpop.f32.mrb[0].mxu0
        %v1433 = vadd.f32 0.0, %v1432
        %v1434 = vpop.f32.mrb[0].mxu0
        %v1435 = vadd.f32 0.0, %v1434
        %v1436 = vpop.f32.mrb[0].mxu0
        %v1437 = vadd.f32 0.0, %v1436
        %1438 = vmatprep.mubr.bf16.mxu0 0
        %1439 = vmatmul.mubr.bf16.gmra.mrb[0].mxu0 %v1262
        %v1440 = vpop.f32.mrb[0].mxu0
        %v1441 = vadd.f32 0.0, %v1440
        %v1442 = vpop.f32.mrb[0].mxu0
        %v1443 = vadd.f32 0.0, %v1442
        %v1444 = vpop.f32.mrb[0].mxu0
        %v1445 = vadd.f32 0.0, %v1444
        %v1446 = vpop.f32.mrb[0].mxu0
        %v1447 = vadd.f32 0.0, %v1446
        %1448 = vmatprep.mubr.bf16.mxu0 0
        %1449 = vmatmul.mubr.bf16.gmra.mrb[0].mxu0 %v1265
        %v1450 = vpop.f32.mrb[0].mxu0
        %v1451 = vadd.f32 0.0, %v1450
        %v1452 = vpop.f32.mrb[0].mxu0
        %v1453 = vadd.f32 0.0, %v1452
        %v1454 = vpop.f32.mrb[0].mxu0
        %v1455 = vadd.f32 0.0, %v1454
        %v1456 = vpop.f32.mrb[0].mxu0
        %v1457 = vadd.f32 0.0, %v1456
        %1458 = vmatprep.mubr.bf16.mxu0 0
        %1459 = vmatmul.mubr.bf16.gmra.mrb[0].mxu0 %v1268
        %v1460 = vpop.f32.mrb[0].mxu0
        %v1461 = vadd.f32 0.0, %v1460
        %v1462 = vpop.f32.mrb[0].mxu0
        %v1463 = vadd.f32 0.0, %v1462
        %v1464 = vpop.f32.mrb[0].mxu0
        %v1465 = vadd.f32 0.0, %v1464
        %v1466 = vpop.f32.mrb[0].mxu0
        %v1467 = vadd.f32 0.0, %v1466
        %1468 = vdwg.mxu0
        %v1470 = vunpack.c.l.s4 1983009808
        %v1471 = vunpack.c.0.s8 %v1470
        %v1472 = vlaneseq
        %v1473 = vshrl.u32 %v1472, 7
        %v1474 = vsub.s32 %v1471, %v1473
        %v1475 = vrot.slane %v517, %v1474
        %v1476 = vcombine.high %v1475, %v1475
        %1479 = vxpose.xlu0.c.b16.start [1/8] %v1475, 128
        %1480 = vxpose.xlu0.c.b16.cont [2/8] 0, 128
        %1481 = vxpose.xlu0.c.b16.cont [3/8] 0, 128
        %1482 = vxpose.xlu0.c.b16.cont [4/8] 0, 128
        %1483 = vxpose.xlu0.c.b16.cont [5/8] 0, 128
        %1484 = vxpose.xlu0.c.b16.cont [6/8] 0, 128
        %1485 = vxpose.xlu0.c.b16.cont [7/8] 0, 128
        %1486 = vxpose.xlu0.c.b16.end [8/8] 0, 128
        %v1487 = vpop.trf.xlu0
        %v1488 = vpop.trf.xlu0
        %v1489 = vpop.trf.xlu0
        %v1490 = vpop.trf.xlu0
        %v1491 = vpop.trf.xlu0
        %v1492 = vpop.trf.xlu0
        %v1493 = vpop.trf.xlu0
        %v1494 = vpop.trf.xlu0
        %1495 = vxpose.xlu0.c.b16.start [1/8] %v1476, 128
        %1496 = vxpose.xlu0.c.b16.cont [2/8] 0, 128
        %1497 = vxpose.xlu0.c.b16.cont [3/8] 0, 128
        %1498 = vxpose.xlu0.c.b16.cont [4/8] 0, 128
        %1499 = vxpose.xlu0.c.b16.cont [5/8] 0, 128
        %1500 = vxpose.xlu0.c.b16.cont [6/8] 0, 128
        %1501 = vxpose.xlu0.c.b16.cont [7/8] 0, 128
        %1502 = vxpose.xlu0.c.b16.end [8/8] 0, 128
        %v1503 = vpop.trf.xlu0
        %v1504 = vpop.trf.xlu0
        %v1505 = vpop.trf.xlu0
        %v1506 = vpop.trf.xlu0
        %v1507 = vpop.trf.xlu0
        %v1508 = vpop.trf.xlu0
        %v1509 = vpop.trf.xlu0
        %v1510 = vpop.trf.xlu0
        %v1512 = vunpack.c.l.s4 1983009808
        %v1513 = vunpack.c.0.s8 %v1512
        %v1514 = vlaneseq
        %v1515 = vshrl.u32 %v1514, 7
        %v1516 = vsub.s32 %v1513, %v1515
        %v1517 = vrot.slane %v477, %v1516
        %v1518 = vcombine.high %v1517, %v1517
        %v1520 = vsel %vm626, %v1487, 0
        %v1523 = vsel %vm626, %v1488, 0
        %v1526 = vsel %vm626, %v1489, 0
        %v1529 = vsel %vm626, %v1490, 0
        %v1532 = vsel %vm626, %v1491, 0
        %v1535 = vsel %vm626, %v1492, 0
        %v1538 = vsel %vm626, %v1493, 0
        %v1541 = vsel %vm626, %v1494, 0
        %v1544 = vsel %vm626, %v1503, 0
        %v1547 = vsel %vm626, %v1504, 0
        %v1550 = vsel %vm626, %v1505, 0
        %v1553 = vsel %vm626, %v1506, 0
        %v1556 = vsel %vm626, %v1507, 0
        %v1559 = vsel %vm626, %v1508, 0
        %v1562 = vsel %vm626, %v1509, 0
        %v1565 = vsel %vm626, %v1510, 0
        %v1568 = vsel %vm675, %v1517, 0
        %v1571 = vsel %vm675, %v1518, 0
        %1573 = vmatprep.subr.bf16.mxu0 %v1571
        %1574 = vmatpush1.bf16.msra.mxu0 %v1568
        %1575 = vmatprep.subr.bf16.mxu0 0
        %1576 = vmatpush1.bf16.msra.mxu0 0
        %1577 = vmatprep.subr.bf16.mxu0 0
        %1578 = vmatpush1.bf16.msra.mxu0 0
        %1579 = vmatprep.subr.bf16.mxu0 0
        %1580 = vmatpush1.bf16.msra.mxu0 0
        %1581 = vmatprep.subr.bf16.mxu0 0
        %1582 = vmatpush1.bf16.msra.mxu0 0
        %1583 = vmatprep.subr.bf16.mxu0 0
        %1584 = vmatpush1.bf16.msra.mxu0 0
        %1585 = vmatprep.subr.bf16.mxu0 0
        %1586 = vmatpush1.bf16.msra.mxu0 0
        %1587 = vmatprep.subr.bf16.mxu0 0
        %1588 = vmatpush1.bf16.msra.mxu0 0
        %1589 = vmatprep.subr.bf16.mxu0 0
        %1590 = vmatpush1.bf16.msra.mxu0 0
        %1591 = vmatprep.subr.bf16.mxu0 0
        %1592 = vmatpush1.bf16.msra.mxu0 0
        %1593 = vmatprep.subr.bf16.mxu0 0
        %1594 = vmatpush1.bf16.msra.mxu0 0
        %1595 = vmatprep.subr.bf16.mxu0 0
        %1596 = vmatpush1.bf16.msra.mxu0 0
        %1597 = vmatprep.subr.bf16.mxu0 0
        %1598 = vmatpush1.bf16.msra.mxu0 0
        %1599 = vmatprep.subr.bf16.mxu0 0
        %1600 = vmatpush1.bf16.msra.mxu0 0
        %1601 = vmatprep.subr.bf16.mxu0 0
        %1602 = vmatpush1.bf16.msra.mxu0 0
        %1603 = vmatprep.subr.bf16.mxu0 0
        %1604 = vmatpush1.bf16.msra.mxu0 0
        %1605 = vmatprep.mubr.bf16.mxu0 0
        %1606 = vmatmul.mubr.bf16.gmra.mrb[0].mxu0 %v1520
        %v1607 = vpop.f32.mrb[0].mxu0
        %v1608 = vadd.f32 0.0, %v1607
        %v1609 = vpop.f32.mrb[0].mxu0
        %v1610 = vadd.f32 0.0, %v1609
        %v1611 = vpop.f32.mrb[0].mxu0
        %v1612 = vadd.f32 0.0, %v1611
        %v1613 = vpop.f32.mrb[0].mxu0
        %v1614 = vadd.f32 0.0, %v1613
        %1615 = vmatprep.mubr.bf16.mxu0 0
        %1616 = vmatmul.mubr.bf16.gmra.mrb[0].mxu0 %v1523
        %v1617 = vpop.f32.mrb[0].mxu0
        %v1618 = vadd.f32 0.0, %v1617
        %v1619 = vpop.f32.mrb[0].mxu0
        %v1620 = vadd.f32 0.0, %v1619
        %v1621 = vpop.f32.mrb[0].mxu0
        %v1622 = vadd.f32 0.0, %v1621
        %v1623 = vpop.f32.mrb[0].mxu0
        %v1624 = vadd.f32 0.0, %v1623
        %1625 = vmatprep.mubr.bf16.mxu0 0
        %1626 = vmatmul.mubr.bf16.gmra.mrb[0].mxu0 %v1526
        %v1627 = vpop.f32.mrb[0].mxu0
        %v1628 = vadd.f32 0.0, %v1627
        %v1629 = vpop.f32.mrb[0].mxu0
        %v1630 = vadd.f32 0.0, %v1629
        %v1631 = vpop.f32.mrb[0].mxu0
        %v1632 = vadd.f32 0.0, %v1631
        %v1633 = vpop.f32.mrb[0].mxu0
        %v1634 = vadd.f32 0.0, %v1633
        %1635 = vmatprep.mubr.bf16.mxu0 0
        %1636 = vmatmul.mubr.bf16.gmra.mrb[0].mxu0 %v1529
        %v1637 = vpop.f32.mrb[0].mxu0
        %v1638 = vadd.f32 0.0, %v1637
        %v1639 = vpop.f32.mrb[0].mxu0
        %v1640 = vadd.f32 0.0, %v1639
        %v1641 = vpop.f32.mrb[0].mxu0
        %v1642 = vadd.f32 0.0, %v1641
        %v1643 = vpop.f32.mrb[0].mxu0
        %v1644 = vadd.f32 0.0, %v1643
        %1645 = vmatprep.mubr.bf16.mxu0 0
        %1646 = vmatmul.mubr.bf16.gmra.mrb[0].mxu0 %v1532
        %v1647 = vpop.f32.mrb[0].mxu0
        %v1648 = vadd.f32 0.0, %v1647
        %v1649 = vpop.f32.mrb[0].mxu0
        %v1650 = vadd.f32 0.0, %v1649
        %v1651 = vpop.f32.mrb[0].mxu0
        %v1652 = vadd.f32 0.0, %v1651
        %v1653 = vpop.f32.mrb[0].mxu0
        %v1654 = vadd.f32 0.0, %v1653
        %1655 = vmatprep.mubr.bf16.mxu0 0
        %1656 = vmatmul.mubr.bf16.gmra.mrb[0].mxu0 %v1535
        %v1657 = vpop.f32.mrb[0].mxu0
        %v1658 = vadd.f32 0.0, %v1657
        %v1659 = vpop.f32.mrb[0].mxu0
        %v1660 = vadd.f32 0.0, %v1659
        %v1661 = vpop.f32.mrb[0].mxu0
        %v1662 = vadd.f32 0.0, %v1661
        %v1663 = vpop.f32.mrb[0].mxu0
        %v1664 = vadd.f32 0.0, %v1663
        %1665 = vmatprep.mubr.bf16.mxu0 0
        %1666 = vmatmul.mubr.bf16.gmra.mrb[0].mxu0 %v1538
        %v1667 = vpop.f32.mrb[0].mxu0
        %v1668 = vadd.f32 0.0, %v1667
        %v1669 = vpop.f32.mrb[0].mxu0
        %v1670 = vadd.f32 0.0, %v1669
        %v1671 = vpop.f32.mrb[0].mxu0
        %v1672 = vadd.f32 0.0, %v1671
        %v1673 = vpop.f32.mrb[0].mxu0
        %v1674 = vadd.f32 0.0, %v1673
        %1675 = vmatprep.mubr.bf16.mxu0 0
        %1676 = vmatmul.mubr.bf16.gmra.mrb[0].mxu0 %v1541
        %v1677 = vpop.f32.mrb[0].mxu0
        %v1678 = vadd.f32 0.0, %v1677
        %v1679 = vpop.f32.mrb[0].mxu0
        %v1680 = vadd.f32 0.0, %v1679
        %v1681 = vpop.f32.mrb[0].mxu0
        %v1682 = vadd.f32 0.0, %v1681
        %v1683 = vpop.f32.mrb[0].mxu0
        %v1684 = vadd.f32 0.0, %v1683
        %1685 = vmatprep.mubr.bf16.mxu0 0
        %1686 = vmatmul.mubr.bf16.gmra.mrb[0].mxu0 %v1544
        %v1687 = vpop.f32.mrb[0].mxu0
        %v1688 = vadd.f32 0.0, %v1687
        %v1689 = vpop.f32.mrb[0].mxu0
        %v1690 = vadd.f32 0.0, %v1689
        %v1691 = vpop.f32.mrb[0].mxu0
        %v1692 = vadd.f32 0.0, %v1691
        %v1693 = vpop.f32.mrb[0].mxu0
        %v1694 = vadd.f32 0.0, %v1693
        %1695 = vmatprep.mubr.bf16.mxu0 0
        %1696 = vmatmul.mubr.bf16.gmra.mrb[0].mxu0 %v1547
        %v1697 = vpop.f32.mrb[0].mxu0
        %v1698 = vadd.f32 0.0, %v1697
        %v1699 = vpop.f32.mrb[0].mxu0
        %v1700 = vadd.f32 0.0, %v1699
        %v1701 = vpop.f32.mrb[0].mxu0
        %v1702 = vadd.f32 0.0, %v1701
        %v1703 = vpop.f32.mrb[0].mxu0
        %v1704 = vadd.f32 0.0, %v1703
        %1705 = vmatprep.mubr.bf16.mxu0 0
        %1706 = vmatmul.mubr.bf16.gmra.mrb[0].mxu0 %v1550
        %v1707 = vpop.f32.mrb[0].mxu0
        %v1708 = vadd.f32 0.0, %v1707
        %v1709 = vpop.f32.mrb[0].mxu0
        %v1710 = vadd.f32 0.0, %v1709
        %v1711 = vpop.f32.mrb[0].mxu0
        %v1712 = vadd.f32 0.0, %v1711
        %v1713 = vpop.f32.mrb[0].mxu0
        %v1714 = vadd.f32 0.0, %v1713
        %1715 = vmatprep.mubr.bf16.mxu0 0
        %1716 = vmatmul.mubr.bf16.gmra.mrb[0].mxu0 %v1553
        %v1717 = vpop.f32.mrb[0].mxu0
        %v1718 = vadd.f32 0.0, %v1717
        %v1719 = vpop.f32.mrb[0].mxu0
        %v1720 = vadd.f32 0.0, %v1719
        %v1721 = vpop.f32.mrb[0].mxu0
        %v1722 = vadd.f32 0.0, %v1721
        %v1723 = vpop.f32.mrb[0].mxu0
        %v1724 = vadd.f32 0.0, %v1723
        %1725 = vmatprep.mubr.bf16.mxu0 0
        %1726 = vmatmul.mubr.bf16.gmra.mrb[0].mxu0 %v1556
        %v1727 = vpop.f32.mrb[0].mxu0
        %v1728 = vadd.f32 0.0, %v1727
        %v1729 = vpop.f32.mrb[0].mxu0
        %v1730 = vadd.f32 0.0, %v1729
        %v1731 = vpop.f32.mrb[0].mxu0
        %v1732 = vadd.f32 0.0, %v1731
        %v1733 = vpop.f32.mrb[0].mxu0
        %v1734 = vadd.f32 0.0, %v1733
        %1735 = vmatprep.mubr.bf16.mxu0 0
        %1736 = vmatmul.mubr.bf16.gmra.mrb[0].mxu0 %v1559
        %v1737 = vpop.f32.mrb[0].mxu0
        %v1738 = vadd.f32 0.0, %v1737
        %v1739 = vpop.f32.mrb[0].mxu0
        %v1740 = vadd.f32 0.0, %v1739
        %v1741 = vpop.f32.mrb[0].mxu0
        %v1742 = vadd.f32 0.0, %v1741
        %v1743 = vpop.f32.mrb[0].mxu0
        %v1744 = vadd.f32 0.0, %v1743
        %1745 = vmatprep.mubr.bf16.mxu0 0
        %1746 = vmatmul.mubr.bf16.gmra.mrb[0].mxu0 %v1562
        %v1747 = vpop.f32.mrb[0].mxu0
        %v1748 = vadd.f32 0.0, %v1747
        %v1749 = vpop.f32.mrb[0].mxu0
        %v1750 = vadd.f32 0.0, %v1749
        %v1751 = vpop.f32.mrb[0].mxu0
        %v1752 = vadd.f32 0.0, %v1751
        %v1753 = vpop.f32.mrb[0].mxu0
        %v1754 = vadd.f32 0.0, %v1753
        %1755 = vmatprep.mubr.bf16.mxu0 0
        %1756 = vmatmul.mubr.bf16.gmra.mrb[0].mxu0 %v1565
        %v1757 = vpop.f32.mrb[0].mxu0
        %v1758 = vadd.f32 0.0, %v1757
        %v1759 = vpop.f32.mrb[0].mxu0
        %v1760 = vadd.f32 0.0, %v1759
        %v1761 = vpop.f32.mrb[0].mxu0
        %v1762 = vadd.f32 0.0, %v1761
        %v1763 = vpop.f32.mrb[0].mxu0
        %v1764 = vadd.f32 0.0, %v1763
        %1765 = vdwg.mxu0
        %v1767 = vunpack.c.l.s4 1983009808
        %v1768 = vunpack.c.0.s8 %v1767
        %v1769 = vlaneseq
        %v1770 = vshrl.u32 %v1769, 7
        %v1771 = vsub.s32 %v1768, %v1770
        %v1772 = vrot.slane %v526, %v1771
        %v1773 = vcombine.high %v1772, %v1772
        %1776 = vxpose.xlu0.c.b16.start [1/8] %v1772, 128
        %1777 = vxpose.xlu0.c.b16.cont [2/8] 0, 128
        %1778 = vxpose.xlu0.c.b16.cont [3/8] 0, 128
        %1779 = vxpose.xlu0.c.b16.cont [4/8] 0, 128
        %1780 = vxpose.xlu0.c.b16.cont [5/8] 0, 128
        %1781 = vxpose.xlu0.c.b16.cont [6/8] 0, 128
        %1782 = vxpose.xlu0.c.b16.cont [7/8] 0, 128
        %1783 = vxpose.xlu0.c.b16.end [8/8] 0, 128
        %v1784 = vpop.trf.xlu0
        %v1785 = vpop.trf.xlu0
        %v1786 = vpop.trf.xlu0
        %v1787 = vpop.trf.xlu0
        %v1788 = vpop.trf.xlu0
        %v1789 = vpop.trf.xlu0
        %v1790 = vpop.trf.xlu0
        %v1791 = vpop.trf.xlu0
        %1792 = vxpose.xlu0.c.b16.start [1/8] %v1773, 128
        %1793 = vxpose.xlu0.c.b16.cont [2/8] 0, 128
        %1794 = vxpose.xlu0.c.b16.cont [3/8] 0, 128
        %1795 = vxpose.xlu0.c.b16.cont [4/8] 0, 128
        %1796 = vxpose.xlu0.c.b16.cont [5/8] 0, 128
        %1797 = vxpose.xlu0.c.b16.cont [6/8] 0, 128
        %1798 = vxpose.xlu0.c.b16.cont [7/8] 0, 128
        %1799 = vxpose.xlu0.c.b16.end [8/8] 0, 128
        %v1800 = vpop.trf.xlu0
        %v1801 = vpop.trf.xlu0
        %v1802 = vpop.trf.xlu0
        %v1803 = vpop.trf.xlu0
        %v1804 = vpop.trf.xlu0
        %v1805 = vpop.trf.xlu0
        %v1806 = vpop.trf.xlu0
        %v1807 = vpop.trf.xlu0
        %v1809 = vunpack.c.l.s4 1983009808
        %v1810 = vunpack.c.0.s8 %v1809
        %v1811 = vlaneseq
        %v1812 = vshrl.u32 %v1811, 7
        %v1813 = vsub.s32 %v1810, %v1812
        %v1814 = vrot.slane %v486, %v1813
        %v1815 = vcombine.high %v1814, %v1814
        %v1817 = vsel %vm626, %v1784, 0
        %v1820 = vsel %vm626, %v1785, 0
        %v1823 = vsel %vm626, %v1786, 0
        %v1826 = vsel %vm626, %v1787, 0
        %v1829 = vsel %vm626, %v1788, 0
        %v1832 = vsel %vm626, %v1789, 0
        %v1835 = vsel %vm626, %v1790, 0
        %v1838 = vsel %vm626, %v1791, 0
        %v1841 = vsel %vm626, %v1800, 0
        %v1844 = vsel %vm626, %v1801, 0
        %v1847 = vsel %vm626, %v1802, 0
        %v1850 = vsel %vm626, %v1803, 0
        %v1853 = vsel %vm626, %v1804, 0
        %v1856 = vsel %vm626, %v1805, 0
        %v1859 = vsel %vm626, %v1806, 0
        %v1862 = vsel %vm626, %v1807, 0
        %v1865 = vsel %vm675, %v1814, 0
        %v1868 = vsel %vm675, %v1815, 0
        %1870 = vmatprep.subr.bf16.mxu0 %v1868
        %1871 = vmatpush1.bf16.msra.mxu0 %v1865
        %1872 = vmatprep.subr.bf16.mxu0 0
        %1873 = vmatpush1.bf16.msra.mxu0 0
        %1874 = vmatprep.subr.bf16.mxu0 0
        %1875 = vmatpush1.bf16.msra.mxu0 0
        %1876 = vmatprep.subr.bf16.mxu0 0
        %1877 = vmatpush1.bf16.msra.mxu0 0
        %1878 = vmatprep.subr.bf16.mxu0 0
        %1879 = vmatpush1.bf16.msra.mxu0 0
        %1880 = vmatprep.subr.bf16.mxu0 0
        %1881 = vmatpush1.bf16.msra.mxu0 0
        %1882 = vmatprep.subr.bf16.mxu0 0
        %1883 = vmatpush1.bf16.msra.mxu0 0
        %1884 = vmatprep.subr.bf16.mxu0 0
        %1885 = vmatpush1.bf16.msra.mxu0 0
        %1886 = vmatprep.subr.bf16.mxu0 0
        %1887 = vmatpush1.bf16.msra.mxu0 0
        %1888 = vmatprep.subr.bf16.mxu0 0
        %1889 = vmatpush1.bf16.msra.mxu0 0
        %1890 = vmatprep.subr.bf16.mxu0 0
        %1891 = vmatpush1.bf16.msra.mxu0 0
        %1892 = vmatprep.subr.bf16.mxu0 0
        %1893 = vmatpush1.bf16.msra.mxu0 0
        %1894 = vmatprep.subr.bf16.mxu0 0
        %1895 = vmatpush1.bf16.msra.mxu0 0
        %1896 = vmatprep.subr.bf16.mxu0 0
        %1897 = vmatpush1.bf16.msra.mxu0 0
        %1898 = vmatprep.subr.bf16.mxu0 0
        %1899 = vmatpush1.bf16.msra.mxu0 0
        %1900 = vmatprep.subr.bf16.mxu0 0
        %1901 = vmatpush1.bf16.msra.mxu0 0
        %1902 = vmatprep.mubr.bf16.mxu0 0
        %1903 = vmatmul.mubr.bf16.gmra.mrb[0].mxu0 %v1817
        %v1904 = vpop.f32.mrb[0].mxu0
        %v1905 = vadd.f32 0.0, %v1904
        %v1906 = vpop.f32.mrb[0].mxu0
        %v1907 = vadd.f32 0.0, %v1906
        %v1908 = vpop.f32.mrb[0].mxu0
        %v1909 = vadd.f32 0.0, %v1908
        %v1910 = vpop.f32.mrb[0].mxu0
        %v1911 = vadd.f32 0.0, %v1910
        %1912 = vmatprep.mubr.bf16.mxu0 0
        %1913 = vmatmul.mubr.bf16.gmra.mrb[0].mxu0 %v1820
        %v1914 = vpop.f32.mrb[0].mxu0
        %v1915 = vadd.f32 0.0, %v1914
        %v1916 = vpop.f32.mrb[0].mxu0
        %v1917 = vadd.f32 0.0, %v1916
        %v1918 = vpop.f32.mrb[0].mxu0
        %v1919 = vadd.f32 0.0, %v1918
        %v1920 = vpop.f32.mrb[0].mxu0
        %v1921 = vadd.f32 0.0, %v1920
        %1922 = vmatprep.mubr.bf16.mxu0 0
        %1923 = vmatmul.mubr.bf16.gmra.mrb[0].mxu0 %v1823
        %v1924 = vpop.f32.mrb[0].mxu0
        %v1925 = vadd.f32 0.0, %v1924
        %v1926 = vpop.f32.mrb[0].mxu0
        %v1927 = vadd.f32 0.0, %v1926
        %v1928 = vpop.f32.mrb[0].mxu0
        %v1929 = vadd.f32 0.0, %v1928
        %v1930 = vpop.f32.mrb[0].mxu0
        %v1931 = vadd.f32 0.0, %v1930
        %1932 = vmatprep.mubr.bf16.mxu0 0
        %1933 = vmatmul.mubr.bf16.gmra.mrb[0].mxu0 %v1826
        %v1934 = vpop.f32.mrb[0].mxu0
        %v1935 = vadd.f32 0.0, %v1934
        %v1936 = vpop.f32.mrb[0].mxu0
        %v1937 = vadd.f32 0.0, %v1936
        %v1938 = vpop.f32.mrb[0].mxu0
        %v1939 = vadd.f32 0.0, %v1938
        %v1940 = vpop.f32.mrb[0].mxu0
        %v1941 = vadd.f32 0.0, %v1940
        %1942 = vmatprep.mubr.bf16.mxu0 0
        %1943 = vmatmul.mubr.bf16.gmra.mrb[0].mxu0 %v1829
        %v1944 = vpop.f32.mrb[0].mxu0
        %v1945 = vadd.f32 0.0, %v1944
        %v1946 = vpop.f32.mrb[0].mxu0
        %v1947 = vadd.f32 0.0, %v1946
        %v1948 = vpop.f32.mrb[0].mxu0
        %v1949 = vadd.f32 0.0, %v1948
        %v1950 = vpop.f32.mrb[0].mxu0
        %v1951 = vadd.f32 0.0, %v1950
        %1952 = vmatprep.mubr.bf16.mxu0 0
        %1953 = vmatmul.mubr.bf16.gmra.mrb[0].mxu0 %v1832
        %v1954 = vpop.f32.mrb[0].mxu0
        %v1955 = vadd.f32 0.0, %v1954
        %v1956 = vpop.f32.mrb[0].mxu0
        %v1957 = vadd.f32 0.0, %v1956
        %v1958 = vpop.f32.mrb[0].mxu0
        %v1959 = vadd.f32 0.0, %v1958
        %v1960 = vpop.f32.mrb[0].mxu0
        %v1961 = vadd.f32 0.0, %v1960
        %1962 = vmatprep.mubr.bf16.mxu0 0
        %1963 = vmatmul.mubr.bf16.gmra.mrb[0].mxu0 %v1835
        %v1964 = vpop.f32.mrb[0].mxu0
        %v1965 = vadd.f32 0.0, %v1964
        %v1966 = vpop.f32.mrb[0].mxu0
        %v1967 = vadd.f32 0.0, %v1966
        %v1968 = vpop.f32.mrb[0].mxu0
        %v1969 = vadd.f32 0.0, %v1968
        %v1970 = vpop.f32.mrb[0].mxu0
        %v1971 = vadd.f32 0.0, %v1970
        %1972 = vmatprep.mubr.bf16.mxu0 0
        %1973 = vmatmul.mubr.bf16.gmra.mrb[0].mxu0 %v1838
        %v1974 = vpop.f32.mrb[0].mxu0
        %v1975 = vadd.f32 0.0, %v1974
        %v1976 = vpop.f32.mrb[0].mxu0
        %v1977 = vadd.f32 0.0, %v1976
        %v1978 = vpop.f32.mrb[0].mxu0
        %v1979 = vadd.f32 0.0, %v1978
        %v1980 = vpop.f32.mrb[0].mxu0
        %v1981 = vadd.f32 0.0, %v1980
        %1982 = vmatprep.mubr.bf16.mxu0 0
        %1983 = vmatmul.mubr.bf16.gmra.mrb[0].mxu0 %v1841
        %v1984 = vpop.f32.mrb[0].mxu0
        %v1985 = vadd.f32 0.0, %v1984
        %v1986 = vpop.f32.mrb[0].mxu0
        %v1987 = vadd.f32 0.0, %v1986
        %v1988 = vpop.f32.mrb[0].mxu0
        %v1989 = vadd.f32 0.0, %v1988
        %v1990 = vpop.f32.mrb[0].mxu0
        %v1991 = vadd.f32 0.0, %v1990
        %1992 = vmatprep.mubr.bf16.mxu0 0
        %1993 = vmatmul.mubr.bf16.gmra.mrb[0].mxu0 %v1844
        %v1994 = vpop.f32.mrb[0].mxu0
        %v1995 = vadd.f32 0.0, %v1994
        %v1996 = vpop.f32.mrb[0].mxu0
        %v1997 = vadd.f32 0.0, %v1996
        %v1998 = vpop.f32.mrb[0].mxu0
        %v1999 = vadd.f32 0.0, %v1998
        %v2000 = vpop.f32.mrb[0].mxu0
        %v2001 = vadd.f32 0.0, %v2000
        %2002 = vmatprep.mubr.bf16.mxu0 0
        %2003 = vmatmul.mubr.bf16.gmra.mrb[0].mxu0 %v1847
        %v2004 = vpop.f32.mrb[0].mxu0
        %v2005 = vadd.f32 0.0, %v2004
        %v2006 = vpop.f32.mrb[0].mxu0
        %v2007 = vadd.f32 0.0, %v2006
        %v2008 = vpop.f32.mrb[0].mxu0
        %v2009 = vadd.f32 0.0, %v2008
        %v2010 = vpop.f32.mrb[0].mxu0
        %v2011 = vadd.f32 0.0, %v2010
        %2012 = vmatprep.mubr.bf16.mxu0 0
        %2013 = vmatmul.mubr.bf16.gmra.mrb[0].mxu0 %v1850
        %v2014 = vpop.f32.mrb[0].mxu0
        %v2015 = vadd.f32 0.0, %v2014
        %v2016 = vpop.f32.mrb[0].mxu0
        %v2017 = vadd.f32 0.0, %v2016
        %v2018 = vpop.f32.mrb[0].mxu0
        %v2019 = vadd.f32 0.0, %v2018
        %v2020 = vpop.f32.mrb[0].mxu0
        %v2021 = vadd.f32 0.0, %v2020
        %2022 = vmatprep.mubr.bf16.mxu0 0
        %2023 = vmatmul.mubr.bf16.gmra.mrb[0].mxu0 %v1853
        %v2024 = vpop.f32.mrb[0].mxu0
        %v2025 = vadd.f32 0.0, %v2024
        %v2026 = vpop.f32.mrb[0].mxu0
        %v2027 = vadd.f32 0.0, %v2026
        %v2028 = vpop.f32.mrb[0].mxu0
        %v2029 = vadd.f32 0.0, %v2028
        %v2030 = vpop.f32.mrb[0].mxu0
        %v2031 = vadd.f32 0.0, %v2030
        %2032 = vmatprep.mubr.bf16.mxu0 0
        %2033 = vmatmul.mubr.bf16.gmra.mrb[0].mxu0 %v1856
        %v2034 = vpop.f32.mrb[0].mxu0
        %v2035 = vadd.f32 0.0, %v2034
        %v2036 = vpop.f32.mrb[0].mxu0
        %v2037 = vadd.f32 0.0, %v2036
        %v2038 = vpop.f32.mrb[0].mxu0
        %v2039 = vadd.f32 0.0, %v2038
        %v2040 = vpop.f32.mrb[0].mxu0
        %v2041 = vadd.f32 0.0, %v2040
        %2042 = vmatprep.mubr.bf16.mxu0 0
        %2043 = vmatmul.mubr.bf16.gmra.mrb[0].mxu0 %v1859
        %v2044 = vpop.f32.mrb[0].mxu0
        %v2045 = vadd.f32 0.0, %v2044
        %v2046 = vpop.f32.mrb[0].mxu0
        %v2047 = vadd.f32 0.0, %v2046
        %v2048 = vpop.f32.mrb[0].mxu0
        %v2049 = vadd.f32 0.0, %v2048
        %v2050 = vpop.f32.mrb[0].mxu0
        %v2051 = vadd.f32 0.0, %v2050
        %2052 = vmatprep.mubr.bf16.mxu0 0
        %2053 = vmatmul.mubr.bf16.gmra.mrb[0].mxu0 %v1862
        %v2054 = vpop.f32.mrb[0].mxu0
        %v2055 = vadd.f32 0.0, %v2054
        %v2056 = vpop.f32.mrb[0].mxu0
        %v2057 = vadd.f32 0.0, %v2056
        %v2058 = vpop.f32.mrb[0].mxu0
        %v2059 = vadd.f32 0.0, %v2058
        %v2060 = vpop.f32.mrb[0].mxu0
        %v2061 = vadd.f32 0.0, %v2060
        %2062 = vdwg.mxu0
        %v2064 = vunpack.c.l.s4 1983009808
        %v2065 = vunpack.c.0.s8 %v2064
        %v2066 = vlaneseq
        %v2067 = vshrl.u32 %v2066, 7
        %v2068 = vsub.s32 %v2065, %v2067
        %v2069 = vrot.slane %v534, %v2068
        %v2070 = vcombine.high %v2069, %v2069
        %2073 = vxpose.xlu0.c.b16.start [1/8] %v2069, 128
        %2074 = vxpose.xlu0.c.b16.cont [2/8] 0, 128
        %2075 = vxpose.xlu0.c.b16.cont [3/8] 0, 128
        %2076 = vxpose.xlu0.c.b16.cont [4/8] 0, 128
        %2077 = vxpose.xlu0.c.b16.cont [5/8] 0, 128
        %2078 = vxpose.xlu0.c.b16.cont [6/8] 0, 128
        %2079 = vxpose.xlu0.c.b16.cont [7/8] 0, 128
        %2080 = vxpose.xlu0.c.b16.end [8/8] 0, 128
        %v2081 = vpop.trf.xlu0
        %v2082 = vpop.trf.xlu0
        %v2083 = vpop.trf.xlu0
        %v2084 = vpop.trf.xlu0
        %v2085 = vpop.trf.xlu0
        %v2086 = vpop.trf.xlu0
        %v2087 = vpop.trf.xlu0
        %v2088 = vpop.trf.xlu0
        %2089 = vxpose.xlu0.c.b16.start [1/8] %v2070, 128
        %2090 = vxpose.xlu0.c.b16.cont [2/8] 0, 128
        %2091 = vxpose.xlu0.c.b16.cont [3/8] 0, 128
        %2092 = vxpose.xlu0.c.b16.cont [4/8] 0, 128
        %2093 = vxpose.xlu0.c.b16.cont [5/8] 0, 128
        %2094 = vxpose.xlu0.c.b16.cont [6/8] 0, 128
        %2095 = vxpose.xlu0.c.b16.cont [7/8] 0, 128
        %2096 = vxpose.xlu0.c.b16.end [8/8] 0, 128
        %v2097 = vpop.trf.xlu0
        %v2098 = vpop.trf.xlu0
        %v2099 = vpop.trf.xlu0
        %v2100 = vpop.trf.xlu0
        %v2101 = vpop.trf.xlu0
        %v2102 = vpop.trf.xlu0
        %v2103 = vpop.trf.xlu0
        %v2104 = vpop.trf.xlu0
        %v2106 = vunpack.c.l.s4 1983009808
        %v2107 = vunpack.c.0.s8 %v2106
        %v2108 = vlaneseq
        %v2109 = vshrl.u32 %v2108, 7
        %v2110 = vsub.s32 %v2107, %v2109
        %v2111 = vrot.slane %v494, %v2110
        %v2112 = vcombine.high %v2111, %v2111
        %v2114 = vsel %vm626, %v2081, 0
        %v2117 = vsel %vm626, %v2082, 0
        %v2120 = vsel %vm626, %v2083, 0
        %v2123 = vsel %vm626, %v2084, 0
        %v2126 = vsel %vm626, %v2085, 0
        %v2129 = vsel %vm626, %v2086, 0
        %v2132 = vsel %vm626, %v2087, 0
        %v2135 = vsel %vm626, %v2088, 0
        %v2138 = vsel %vm626, %v2097, 0
        %v2141 = vsel %vm626, %v2098, 0
        %v2144 = vsel %vm626, %v2099, 0
        %v2147 = vsel %vm626, %v2100, 0
        %v2150 = vsel %vm626, %v2101, 0
        %v2153 = vsel %vm626, %v2102, 0
        %v2156 = vsel %vm626, %v2103, 0
        %v2159 = vsel %vm626, %v2104, 0
        %v2162 = vsel %vm675, %v2111, 0
        %v2165 = vsel %vm675, %v2112, 0
        %2167 = vmatprep.subr.bf16.mxu0 %v2165
        %2168 = vmatpush1.bf16.msra.mxu0 %v2162
        %2169 = vmatprep.subr.bf16.mxu0 0
        %2170 = vmatpush1.bf16.msra.mxu0 0
        %2171 = vmatprep.subr.bf16.mxu0 0
        %2172 = vmatpush1.bf16.msra.mxu0 0
        %2173 = vmatprep.subr.bf16.mxu0 0
        %2174 = vmatpush1.bf16.msra.mxu0 0
        %2175 = vmatprep.subr.bf16.mxu0 0
        %2176 = vmatpush1.bf16.msra.mxu0 0
        %2177 = vmatprep.subr.bf16.mxu0 0
        %2178 = vmatpush1.bf16.msra.mxu0 0
        %2179 = vmatprep.subr.bf16.mxu0 0
        %2180 = vmatpush1.bf16.msra.mxu0 0
        %2181 = vmatprep.subr.bf16.mxu0 0
        %2182 = vmatpush1.bf16.msra.mxu0 0
        %2183 = vmatprep.subr.bf16.mxu0 0
        %2184 = vmatpush1.bf16.msra.mxu0 0
        %2185 = vmatprep.subr.bf16.mxu0 0
        %2186 = vmatpush1.bf16.msra.mxu0 0
        %2187 = vmatprep.subr.bf16.mxu0 0
        %2188 = vmatpush1.bf16.msra.mxu0 0
        %2189 = vmatprep.subr.bf16.mxu0 0
        %2190 = vmatpush1.bf16.msra.mxu0 0
        %2191 = vmatprep.subr.bf16.mxu0 0
        %2192 = vmatpush1.bf16.msra.mxu0 0
        %2193 = vmatprep.subr.bf16.mxu0 0
        %2194 = vmatpush1.bf16.msra.mxu0 0
        %2195 = vmatprep.subr.bf16.mxu0 0
        %2196 = vmatpush1.bf16.msra.mxu0 0
        %2197 = vmatprep.subr.bf16.mxu0 0
        %2198 = vmatpush1.bf16.msra.mxu0 0
        %2199 = vmatprep.mubr.bf16.mxu0 0
        %2200 = vmatmul.mubr.bf16.gmra.mrb[0].mxu0 %v2114
        %v2201 = vpop.f32.mrb[0].mxu0
        %v2202 = vadd.f32 0.0, %v2201
        %v2203 = vpop.f32.mrb[0].mxu0
        %v2204 = vadd.f32 0.0, %v2203
        %v2205 = vpop.f32.mrb[0].mxu0
        %v2206 = vadd.f32 0.0, %v2205
        %v2207 = vpop.f32.mrb[0].mxu0
        %v2208 = vadd.f32 0.0, %v2207
        %2209 = vmatprep.mubr.bf16.mxu0 0
        %2210 = vmatmul.mubr.bf16.gmra.mrb[0].mxu0 %v2117
        %v2211 = vpop.f32.mrb[0].mxu0
        %v2212 = vadd.f32 0.0, %v2211
        %v2213 = vpop.f32.mrb[0].mxu0
        %v2214 = vadd.f32 0.0, %v2213
        %v2215 = vpop.f32.mrb[0].mxu0
        %v2216 = vadd.f32 0.0, %v2215
        %v2217 = vpop.f32.mrb[0].mxu0
        %v2218 = vadd.f32 0.0, %v2217
        %2219 = vmatprep.mubr.bf16.mxu0 0
        %2220 = vmatmul.mubr.bf16.gmra.mrb[0].mxu0 %v2120
        %v2221 = vpop.f32.mrb[0].mxu0
        %v2222 = vadd.f32 0.0, %v2221
        %v2223 = vpop.f32.mrb[0].mxu0
        %v2224 = vadd.f32 0.0, %v2223
        %v2225 = vpop.f32.mrb[0].mxu0
        %v2226 = vadd.f32 0.0, %v2225
        %v2227 = vpop.f32.mrb[0].mxu0
        %v2228 = vadd.f32 0.0, %v2227
        %2229 = vmatprep.mubr.bf16.mxu0 0
        %2230 = vmatmul.mubr.bf16.gmra.mrb[0].mxu0 %v2123
        %v2231 = vpop.f32.mrb[0].mxu0
        %v2232 = vadd.f32 0.0, %v2231
        %v2233 = vpop.f32.mrb[0].mxu0
        %v2234 = vadd.f32 0.0, %v2233
        %v2235 = vpop.f32.mrb[0].mxu0
        %v2236 = vadd.f32 0.0, %v2235
        %v2237 = vpop.f32.mrb[0].mxu0
        %v2238 = vadd.f32 0.0, %v2237
        %2239 = vmatprep.mubr.bf16.mxu0 0
        %2240 = vmatmul.mubr.bf16.gmra.mrb[0].mxu0 %v2126
        %v2241 = vpop.f32.mrb[0].mxu0
        %v2242 = vadd.f32 0.0, %v2241
        %v2243 = vpop.f32.mrb[0].mxu0
        %v2244 = vadd.f32 0.0, %v2243
        %v2245 = vpop.f32.mrb[0].mxu0
        %v2246 = vadd.f32 0.0, %v2245
        %v2247 = vpop.f32.mrb[0].mxu0
        %v2248 = vadd.f32 0.0, %v2247
        %2249 = vmatprep.mubr.bf16.mxu0 0
        %2250 = vmatmul.mubr.bf16.gmra.mrb[0].mxu0 %v2129
        %v2251 = vpop.f32.mrb[0].mxu0
        %v2252 = vadd.f32 0.0, %v2251
        %v2253 = vpop.f32.mrb[0].mxu0
        %v2254 = vadd.f32 0.0, %v2253
        %v2255 = vpop.f32.mrb[0].mxu0
        %v2256 = vadd.f32 0.0, %v2255
        %v2257 = vpop.f32.mrb[0].mxu0
        %v2258 = vadd.f32 0.0, %v2257
        %2259 = vmatprep.mubr.bf16.mxu0 0
        %2260 = vmatmul.mubr.bf16.gmra.mrb[0].mxu0 %v2132
        %v2261 = vpop.f32.mrb[0].mxu0
        %v2262 = vadd.f32 0.0, %v2261
        %v2263 = vpop.f32.mrb[0].mxu0
        %v2264 = vadd.f32 0.0, %v2263
        %v2265 = vpop.f32.mrb[0].mxu0
        %v2266 = vadd.f32 0.0, %v2265
        %v2267 = vpop.f32.mrb[0].mxu0
        %v2268 = vadd.f32 0.0, %v2267
        %2269 = vmatprep.mubr.bf16.mxu0 0
        %2270 = vmatmul.mubr.bf16.gmra.mrb[0].mxu0 %v2135
        %v2271 = vpop.f32.mrb[0].mxu0
        %v2272 = vadd.f32 0.0, %v2271
        %v2273 = vpop.f32.mrb[0].mxu0
        %v2274 = vadd.f32 0.0, %v2273
        %v2275 = vpop.f32.mrb[0].mxu0
        %v2276 = vadd.f32 0.0, %v2275
        %v2277 = vpop.f32.mrb[0].mxu0
        %v2278 = vadd.f32 0.0, %v2277
        %2279 = vmatprep.mubr.bf16.mxu0 0
        %2280 = vmatmul.mubr.bf16.gmra.mrb[0].mxu0 %v2138
        %v2281 = vpop.f32.mrb[0].mxu0
        %v2282 = vadd.f32 0.0, %v2281
        %v2283 = vpop.f32.mrb[0].mxu0
        %v2284 = vadd.f32 0.0, %v2283
        %v2285 = vpop.f32.mrb[0].mxu0
        %v2286 = vadd.f32 0.0, %v2285
        %v2287 = vpop.f32.mrb[0].mxu0
        %v2288 = vadd.f32 0.0, %v2287
        %2289 = vmatprep.mubr.bf16.mxu0 0
        %2290 = vmatmul.mubr.bf16.gmra.mrb[0].mxu0 %v2141
        %v2291 = vpop.f32.mrb[0].mxu0
        %v2292 = vadd.f32 0.0, %v2291
        %v2293 = vpop.f32.mrb[0].mxu0
        %v2294 = vadd.f32 0.0, %v2293
        %v2295 = vpop.f32.mrb[0].mxu0
        %v2296 = vadd.f32 0.0, %v2295
        %v2297 = vpop.f32.mrb[0].mxu0
        %v2298 = vadd.f32 0.0, %v2297
        %2299 = vmatprep.mubr.bf16.mxu0 0
        %2300 = vmatmul.mubr.bf16.gmra.mrb[0].mxu0 %v2144
        %v2301 = vpop.f32.mrb[0].mxu0
        %v2302 = vadd.f32 0.0, %v2301
        %v2303 = vpop.f32.mrb[0].mxu0
        %v2304 = vadd.f32 0.0, %v2303
        %v2305 = vpop.f32.mrb[0].mxu0
        %v2306 = vadd.f32 0.0, %v2305
        %v2307 = vpop.f32.mrb[0].mxu0
        %v2308 = vadd.f32 0.0, %v2307
        %2309 = vmatprep.mubr.bf16.mxu0 0
        %2310 = vmatmul.mubr.bf16.gmra.mrb[0].mxu0 %v2147
        %v2311 = vpop.f32.mrb[0].mxu0
        %v2312 = vadd.f32 0.0, %v2311
        %v2313 = vpop.f32.mrb[0].mxu0
        %v2314 = vadd.f32 0.0, %v2313
        %v2315 = vpop.f32.mrb[0].mxu0
        %v2316 = vadd.f32 0.0, %v2315
        %v2317 = vpop.f32.mrb[0].mxu0
        %v2318 = vadd.f32 0.0, %v2317
        %2319 = vmatprep.mubr.bf16.mxu0 0
        %2320 = vmatmul.mubr.bf16.gmra.mrb[0].mxu0 %v2150
        %v2321 = vpop.f32.mrb[0].mxu0
        %v2322 = vadd.f32 0.0, %v2321
        %v2323 = vpop.f32.mrb[0].mxu0
        %v2324 = vadd.f32 0.0, %v2323
        %v2325 = vpop.f32.mrb[0].mxu0
        %v2326 = vadd.f32 0.0, %v2325
        %v2327 = vpop.f32.mrb[0].mxu0
        %v2328 = vadd.f32 0.0, %v2327
        %2329 = vmatprep.mubr.bf16.mxu0 0
        %2330 = vmatmul.mubr.bf16.gmra.mrb[0].mxu0 %v2153
        %v2331 = vpop.f32.mrb[0].mxu0
        %v2332 = vadd.f32 0.0, %v2331
        %v2333 = vpop.f32.mrb[0].mxu0
        %v2334 = vadd.f32 0.0, %v2333
        %v2335 = vpop.f32.mrb[0].mxu0
        %v2336 = vadd.f32 0.0, %v2335
        %v2337 = vpop.f32.mrb[0].mxu0
        %v2338 = vadd.f32 0.0, %v2337
        %2339 = vmatprep.mubr.bf16.mxu0 0
        %2340 = vmatmul.mubr.bf16.gmra.mrb[0].mxu0 %v2156
        %v2341 = vpop.f32.mrb[0].mxu0
        %v2342 = vadd.f32 0.0, %v2341
        %v2343 = vpop.f32.mrb[0].mxu0
        %v2344 = vadd.f32 0.0, %v2343
        %v2345 = vpop.f32.mrb[0].mxu0
        %v2346 = vadd.f32 0.0, %v2345
        %v2347 = vpop.f32.mrb[0].mxu0
        %v2348 = vadd.f32 0.0, %v2347
        %2349 = vmatprep.mubr.bf16.mxu0 0
        %2350 = vmatmul.mubr.bf16.gmra.mrb[0].mxu0 %v2159
        %v2351 = vpop.f32.mrb[0].mxu0
        %v2352 = vadd.f32 0.0, %v2351
        %v2353 = vpop.f32.mrb[0].mxu0
        %v2354 = vadd.f32 0.0, %v2353
        %v2355 = vpop.f32.mrb[0].mxu0
        %v2356 = vadd.f32 0.0, %v2355
        %v2357 = vpop.f32.mrb[0].mxu0
        %v2358 = vadd.f32 0.0, %v2357
        %2359 = vdwg.mxu0
        %v2361 = vunpack.c.l.s4 1983009808
        %v2362 = vunpack.c.0.s8 %v2361
        %v2363 = vlaneseq
        %v2364 = vshrl.u32 %v2363, 7
        %v2365 = vsub.s32 %v2362, %v2364
        %v2366 = vrot.slane %v533, %v2365
        %v2367 = vcombine.high %v2366, %v2366
        %2370 = vxpose.xlu0.c.b16.start [1/8] %v2366, 128
        %2371 = vxpose.xlu0.c.b16.cont [2/8] 0, 128
        %2372 = vxpose.xlu0.c.b16.cont [3/8] 0, 128
        %2373 = vxpose.xlu0.c.b16.cont [4/8] 0, 128
        %2374 = vxpose.xlu0.c.b16.cont [5/8] 0, 128
        %2375 = vxpose.xlu0.c.b16.cont [6/8] 0, 128
        %2376 = vxpose.xlu0.c.b16.cont [7/8] 0, 128
        %2377 = vxpose.xlu0.c.b16.end [8/8] 0, 128
        %v2378 = vpop.trf.xlu0
        %v2379 = vpop.trf.xlu0
        %v2380 = vpop.trf.xlu0
        %v2381 = vpop.trf.xlu0
        %v2382 = vpop.trf.xlu0
        %v2383 = vpop.trf.xlu0
        %v2384 = vpop.trf.xlu0
        %v2385 = vpop.trf.xlu0
        %2386 = vxpose.xlu0.c.b16.start [1/8] %v2367, 128
        %2387 = vxpose.xlu0.c.b16.cont [2/8] 0, 128
        %2388 = vxpose.xlu0.c.b16.cont [3/8] 0, 128
        %2389 = vxpose.xlu0.c.b16.cont [4/8] 0, 128
        %2390 = vxpose.xlu0.c.b16.cont [5/8] 0, 128
        %2391 = vxpose.xlu0.c.b16.cont [6/8] 0, 128
        %2392 = vxpose.xlu0.c.b16.cont [7/8] 0, 128
        %2393 = vxpose.xlu0.c.b16.end [8/8] 0, 128
        %v2394 = vpop.trf.xlu0
        %v2395 = vpop.trf.xlu0
        %v2396 = vpop.trf.xlu0
        %v2397 = vpop.trf.xlu0
        %v2398 = vpop.trf.xlu0
        %v2399 = vpop.trf.xlu0
        %v2400 = vpop.trf.xlu0
        %v2401 = vpop.trf.xlu0
        %v2403 = vunpack.c.l.s4 1983009808
        %v2404 = vunpack.c.0.s8 %v2403
        %v2405 = vlaneseq
        %v2406 = vshrl.u32 %v2405, 7
        %v2407 = vsub.s32 %v2404, %v2406
        %v2408 = vrot.slane %v493, %v2407
        %v2409 = vcombine.high %v2408, %v2408
        %v2411 = vsel %vm626, %v2378, 0
        %v2414 = vsel %vm626, %v2379, 0
        %v2417 = vsel %vm626, %v2380, 0
        %v2420 = vsel %vm626, %v2381, 0
        %v2423 = vsel %vm626, %v2382, 0
        %v2426 = vsel %vm626, %v2383, 0
        %v2429 = vsel %vm626, %v2384, 0
        %v2432 = vsel %vm626, %v2385, 0
        %v2435 = vsel %vm626, %v2394, 0
        %v2438 = vsel %vm626, %v2395, 0
        %v2441 = vsel %vm626, %v2396, 0
        %v2444 = vsel %vm626, %v2397, 0
        %v2447 = vsel %vm626, %v2398, 0
        %v2450 = vsel %vm626, %v2399, 0
        %v2453 = vsel %vm626, %v2400, 0
        %v2456 = vsel %vm626, %v2401, 0
        %v2459 = vsel %vm675, %v2408, 0
        %v2462 = vsel %vm675, %v2409, 0
        %2464 = vmatprep.subr.bf16.mxu0 %v2462
        %2465 = vmatpush1.bf16.msra.mxu0 %v2459
        %2466 = vmatprep.subr.bf16.mxu0 0
        %2467 = vmatpush1.bf16.msra.mxu0 0
        %2468 = vmatprep.subr.bf16.mxu0 0
        %2469 = vmatpush1.bf16.msra.mxu0 0
        %2470 = vmatprep.subr.bf16.mxu0 0
        %2471 = vmatpush1.bf16.msra.mxu0 0
        %2472 = vmatprep.subr.bf16.mxu0 0
        %2473 = vmatpush1.bf16.msra.mxu0 0
        %2474 = vmatprep.subr.bf16.mxu0 0
        %2475 = vmatpush1.bf16.msra.mxu0 0
        %2476 = vmatprep.subr.bf16.mxu0 0
        %2477 = vmatpush1.bf16.msra.mxu0 0
        %2478 = vmatprep.subr.bf16.mxu0 0
        %2479 = vmatpush1.bf16.msra.mxu0 0
        %2480 = vmatprep.subr.bf16.mxu0 0
        %2481 = vmatpush1.bf16.msra.mxu0 0
        %2482 = vmatprep.subr.bf16.mxu0 0
        %2483 = vmatpush1.bf16.msra.mxu0 0
        %2484 = vmatprep.subr.bf16.mxu0 0
        %2485 = vmatpush1.bf16.msra.mxu0 0
        %2486 = vmatprep.subr.bf16.mxu0 0
        %2487 = vmatpush1.bf16.msra.mxu0 0
        %2488 = vmatprep.subr.bf16.mxu0 0
        %2489 = vmatpush1.bf16.msra.mxu0 0
        %2490 = vmatprep.subr.bf16.mxu0 0
        %2491 = vmatpush1.bf16.msra.mxu0 0
        %2492 = vmatprep.subr.bf16.mxu0 0
        %2493 = vmatpush1.bf16.msra.mxu0 0
        %2494 = vmatprep.subr.bf16.mxu0 0
        %2495 = vmatpush1.bf16.msra.mxu0 0
        %2496 = vmatprep.mubr.bf16.mxu0 0
        %2497 = vmatmul.mubr.bf16.gmra.mrb[0].mxu0 %v2411
        %v2498 = vpop.f32.mrb[0].mxu0
        %v2499 = vadd.f32 0.0, %v2498
        %v2500 = vpop.f32.mrb[0].mxu0
        %v2501 = vadd.f32 0.0, %v2500
        %v2502 = vpop.f32.mrb[0].mxu0
        %v2503 = vadd.f32 0.0, %v2502
        %v2504 = vpop.f32.mrb[0].mxu0
        %v2505 = vadd.f32 0.0, %v2504
        %2506 = vmatprep.mubr.bf16.mxu0 0
        %2507 = vmatmul.mubr.bf16.gmra.mrb[0].mxu0 %v2414
        %v2508 = vpop.f32.mrb[0].mxu0
        %v2509 = vadd.f32 0.0, %v2508
        %v2510 = vpop.f32.mrb[0].mxu0
        %v2511 = vadd.f32 0.0, %v2510
        %v2512 = vpop.f32.mrb[0].mxu0
        %v2513 = vadd.f32 0.0, %v2512
        %v2514 = vpop.f32.mrb[0].mxu0
        %v2515 = vadd.f32 0.0, %v2514
        %2516 = vmatprep.mubr.bf16.mxu0 0
        %2517 = vmatmul.mubr.bf16.gmra.mrb[0].mxu0 %v2417
        %v2518 = vpop.f32.mrb[0].mxu0
        %v2519 = vadd.f32 0.0, %v2518
        %v2520 = vpop.f32.mrb[0].mxu0
        %v2521 = vadd.f32 0.0, %v2520
        %v2522 = vpop.f32.mrb[0].mxu0
        %v2523 = vadd.f32 0.0, %v2522
        %v2524 = vpop.f32.mrb[0].mxu0
        %v2525 = vadd.f32 0.0, %v2524
        %2526 = vmatprep.mubr.bf16.mxu0 0
        %2527 = vmatmul.mubr.bf16.gmra.mrb[0].mxu0 %v2420
        %v2528 = vpop.f32.mrb[0].mxu0
        %v2529 = vadd.f32 0.0, %v2528
        %v2530 = vpop.f32.mrb[0].mxu0
        %v2531 = vadd.f32 0.0, %v2530
        %v2532 = vpop.f32.mrb[0].mxu0
        %v2533 = vadd.f32 0.0, %v2532
        %v2534 = vpop.f32.mrb[0].mxu0
        %v2535 = vadd.f32 0.0, %v2534
        %2536 = vmatprep.mubr.bf16.mxu0 0
        %2537 = vmatmul.mubr.bf16.gmra.mrb[0].mxu0 %v2423
        %v2538 = vpop.f32.mrb[0].mxu0
        %v2539 = vadd.f32 0.0, %v2538
        %v2540 = vpop.f32.mrb[0].mxu0
        %v2541 = vadd.f32 0.0, %v2540
        %v2542 = vpop.f32.mrb[0].mxu0
        %v2543 = vadd.f32 0.0, %v2542
        %v2544 = vpop.f32.mrb[0].mxu0
        %v2545 = vadd.f32 0.0, %v2544
        %2546 = vmatprep.mubr.bf16.mxu0 0
        %2547 = vmatmul.mubr.bf16.gmra.mrb[0].mxu0 %v2426
        %v2548 = vpop.f32.mrb[0].mxu0
        %v2549 = vadd.f32 0.0, %v2548
        %v2550 = vpop.f32.mrb[0].mxu0
        %v2551 = vadd.f32 0.0, %v2550
        %v2552 = vpop.f32.mrb[0].mxu0
        %v2553 = vadd.f32 0.0, %v2552
        %v2554 = vpop.f32.mrb[0].mxu0
        %v2555 = vadd.f32 0.0, %v2554
        %2556 = vmatprep.mubr.bf16.mxu0 0
        %2557 = vmatmul.mubr.bf16.gmra.mrb[0].mxu0 %v2429
        %v2558 = vpop.f32.mrb[0].mxu0
        %v2559 = vadd.f32 0.0, %v2558
        %v2560 = vpop.f32.mrb[0].mxu0
        %v2561 = vadd.f32 0.0, %v2560
        %v2562 = vpop.f32.mrb[0].mxu0
        %v2563 = vadd.f32 0.0, %v2562
        %v2564 = vpop.f32.mrb[0].mxu0
        %v2565 = vadd.f32 0.0, %v2564
        %2566 = vmatprep.mubr.bf16.mxu0 0
        %2567 = vmatmul.mubr.bf16.gmra.mrb[0].mxu0 %v2432
        %v2568 = vpop.f32.mrb[0].mxu0
        %v2569 = vadd.f32 0.0, %v2568
        %v2570 = vpop.f32.mrb[0].mxu0
        %v2571 = vadd.f32 0.0, %v2570
        %v2572 = vpop.f32.mrb[0].mxu0
        %v2573 = vadd.f32 0.0, %v2572
        %v2574 = vpop.f32.mrb[0].mxu0
        %v2575 = vadd.f32 0.0, %v2574
        %2576 = vmatprep.mubr.bf16.mxu0 0
        %2577 = vmatmul.mubr.bf16.gmra.mrb[0].mxu0 %v2435
        %v2578 = vpop.f32.mrb[0].mxu0
        %v2579 = vadd.f32 0.0, %v2578
        %v2580 = vpop.f32.mrb[0].mxu0
        %v2581 = vadd.f32 0.0, %v2580
        %v2582 = vpop.f32.mrb[0].mxu0
        %v2583 = vadd.f32 0.0, %v2582
        %v2584 = vpop.f32.mrb[0].mxu0
        %v2585 = vadd.f32 0.0, %v2584
        %2586 = vmatprep.mubr.bf16.mxu0 0
        %2587 = vmatmul.mubr.bf16.gmra.mrb[0].mxu0 %v2438
        %v2588 = vpop.f32.mrb[0].mxu0
        %v2589 = vadd.f32 0.0, %v2588
        %v2590 = vpop.f32.mrb[0].mxu0
        %v2591 = vadd.f32 0.0, %v2590
        %v2592 = vpop.f32.mrb[0].mxu0
        %v2593 = vadd.f32 0.0, %v2592
        %v2594 = vpop.f32.mrb[0].mxu0
        %v2595 = vadd.f32 0.0, %v2594
        %2596 = vmatprep.mubr.bf16.mxu0 0
        %2597 = vmatmul.mubr.bf16.gmra.mrb[0].mxu0 %v2441
        %v2598 = vpop.f32.mrb[0].mxu0
        %v2599 = vadd.f32 0.0, %v2598
        %v2600 = vpop.f32.mrb[0].mxu0
        %v2601 = vadd.f32 0.0, %v2600
        %v2602 = vpop.f32.mrb[0].mxu0
        %v2603 = vadd.f32 0.0, %v2602
        %v2604 = vpop.f32.mrb[0].mxu0
        %v2605 = vadd.f32 0.0, %v2604
        %2606 = vmatprep.mubr.bf16.mxu0 0
        %2607 = vmatmul.mubr.bf16.gmra.mrb[0].mxu0 %v2444
        %v2608 = vpop.f32.mrb[0].mxu0
        %v2609 = vadd.f32 0.0, %v2608
        %v2610 = vpop.f32.mrb[0].mxu0
        %v2611 = vadd.f32 0.0, %v2610
        %v2612 = vpop.f32.mrb[0].mxu0
        %v2613 = vadd.f32 0.0, %v2612
        %v2614 = vpop.f32.mrb[0].mxu0
        %v2615 = vadd.f32 0.0, %v2614
        %2616 = vmatprep.mubr.bf16.mxu0 0
        %2617 = vmatmul.mubr.bf16.gmra.mrb[0].mxu0 %v2447
        %v2618 = vpop.f32.mrb[0].mxu0
        %v2619 = vadd.f32 0.0, %v2618
        %v2620 = vpop.f32.mrb[0].mxu0
        %v2621 = vadd.f32 0.0, %v2620
        %v2622 = vpop.f32.mrb[0].mxu0
        %v2623 = vadd.f32 0.0, %v2622
        %v2624 = vpop.f32.mrb[0].mxu0
        %v2625 = vadd.f32 0.0, %v2624
        %2626 = vmatprep.mubr.bf16.mxu0 0
        %2627 = vmatmul.mubr.bf16.gmra.mrb[0].mxu0 %v2450
        %v2628 = vpop.f32.mrb[0].mxu0
        %v2629 = vadd.f32 0.0, %v2628
        %v2630 = vpop.f32.mrb[0].mxu0
        %v2631 = vadd.f32 0.0, %v2630
        %v2632 = vpop.f32.mrb[0].mxu0
        %v2633 = vadd.f32 0.0, %v2632
        %v2634 = vpop.f32.mrb[0].mxu0
        %v2635 = vadd.f32 0.0, %v2634
        %2636 = vmatprep.mubr.bf16.mxu0 0
        %2637 = vmatmul.mubr.bf16.gmra.mrb[0].mxu0 %v2453
        %v2638 = vpop.f32.mrb[0].mxu0
        %v2639 = vadd.f32 0.0, %v2638
        %v2640 = vpop.f32.mrb[0].mxu0
        %v2641 = vadd.f32 0.0, %v2640
        %v2642 = vpop.f32.mrb[0].mxu0
        %v2643 = vadd.f32 0.0, %v2642
        %v2644 = vpop.f32.mrb[0].mxu0
        %v2645 = vadd.f32 0.0, %v2644
        %2646 = vmatprep.mubr.bf16.mxu0 0
        %2647 = vmatmul.mubr.bf16.gmra.mrb[0].mxu0 %v2456
        %v2648 = vpop.f32.mrb[0].mxu0
        %v2649 = vadd.f32 0.0, %v2648
        %v2650 = vpop.f32.mrb[0].mxu0
        %v2651 = vadd.f32 0.0, %v2650
        %v2652 = vpop.f32.mrb[0].mxu0
        %v2653 = vadd.f32 0.0, %v2652
        %v2654 = vpop.f32.mrb[0].mxu0
        %v2655 = vadd.f32 0.0, %v2654
        %2656 = vdwg.mxu0
        %v2658 = vunpack.c.l.s4 1983009808
        %v2659 = vunpack.c.0.s8 %v2658
        %v2660 = vlaneseq
        %v2661 = vshrl.u32 %v2660, 7
        %v2662 = vsub.s32 %v2659, %v2661
        %v2663 = vrot.slane %v535, %v2662
        %v2664 = vcombine.high %v2663, %v2663
        %2667 = vxpose.xlu0.c.b16.start [1/8] %v2663, 128
        %2668 = vxpose.xlu0.c.b16.cont [2/8] 0, 128
        %2669 = vxpose.xlu0.c.b16.cont [3/8] 0, 128
        %2670 = vxpose.xlu0.c.b16.cont [4/8] 0, 128
        %2671 = vxpose.xlu0.c.b16.cont [5/8] 0, 128
        %2672 = vxpose.xlu0.c.b16.cont [6/8] 0, 128
        %2673 = vxpose.xlu0.c.b16.cont [7/8] 0, 128
        %2674 = vxpose.xlu0.c.b16.end [8/8] 0, 128
        %v2675 = vpop.trf.xlu0
        %v2676 = vpop.trf.xlu0
        %v2677 = vpop.trf.xlu0
        %v2678 = vpop.trf.xlu0
        %v2679 = vpop.trf.xlu0
        %v2680 = vpop.trf.xlu0
        %v2681 = vpop.trf.xlu0
        %v2682 = vpop.trf.xlu0
        %2683 = vxpose.xlu0.c.b16.start [1/8] %v2664, 128
        %2684 = vxpose.xlu0.c.b16.cont [2/8] 0, 128
        %2685 = vxpose.xlu0.c.b16.cont [3/8] 0, 128
        %2686 = vxpose.xlu0.c.b16.cont [4/8] 0, 128
        %2687 = vxpose.xlu0.c.b16.cont [5/8] 0, 128
        %2688 = vxpose.xlu0.c.b16.cont [6/8] 0, 128
        %2689 = vxpose.xlu0.c.b16.cont [7/8] 0, 128
        %2690 = vxpose.xlu0.c.b16.end [8/8] 0, 128
        %v2691 = vpop.trf.xlu0
        %v2692 = vpop.trf.xlu0
        %v2693 = vpop.trf.xlu0
        %v2694 = vpop.trf.xlu0
        %v2695 = vpop.trf.xlu0
        %v2696 = vpop.trf.xlu0
        %v2697 = vpop.trf.xlu0
        %v2698 = vpop.trf.xlu0
        %v2700 = vunpack.c.l.s4 1983009808
        %v2701 = vunpack.c.0.s8 %v2700
        %v2702 = vlaneseq
        %v2703 = vshrl.u32 %v2702, 7
        %v2704 = vsub.s32 %v2701, %v2703
        %v2705 = vrot.slane %v495, %v2704
        %v2706 = vcombine.high %v2705, %v2705
        %v2708 = vsel %vm626, %v2675, 0
        %v2711 = vsel %vm626, %v2676, 0
        %v2714 = vsel %vm626, %v2677, 0
        %v2717 = vsel %vm626, %v2678, 0
        %v2720 = vsel %vm626, %v2679, 0
        %v2723 = vsel %vm626, %v2680, 0
        %v2726 = vsel %vm626, %v2681, 0
        %v2729 = vsel %vm626, %v2682, 0
        %v2732 = vsel %vm626, %v2691, 0
        %v2735 = vsel %vm626, %v2692, 0
        %v2738 = vsel %vm626, %v2693, 0
        %v2741 = vsel %vm626, %v2694, 0
        %v2744 = vsel %vm626, %v2695, 0
        %v2747 = vsel %vm626, %v2696, 0
        %v2750 = vsel %vm626, %v2697, 0
        %v2753 = vsel %vm626, %v2698, 0
        %v2756 = vsel %vm675, %v2705, 0
        %v2759 = vsel %vm675, %v2706, 0
        %2761 = vmatprep.subr.bf16.mxu0 %v2759
        %2762 = vmatpush1.bf16.msra.mxu0 %v2756
        %2763 = vmatprep.subr.bf16.mxu0 0
        %2764 = vmatpush1.bf16.msra.mxu0 0
        %2765 = vmatprep.subr.bf16.mxu0 0
        %2766 = vmatpush1.bf16.msra.mxu0 0
        %2767 = vmatprep.subr.bf16.mxu0 0
        %2768 = vmatpush1.bf16.msra.mxu0 0
        %2769 = vmatprep.subr.bf16.mxu0 0
        %2770 = vmatpush1.bf16.msra.mxu0 0
        %2771 = vmatprep.subr.bf16.mxu0 0
        %2772 = vmatpush1.bf16.msra.mxu0 0
        %2773 = vmatprep.subr.bf16.mxu0 0
        %2774 = vmatpush1.bf16.msra.mxu0 0
        %2775 = vmatprep.subr.bf16.mxu0 0
        %2776 = vmatpush1.bf16.msra.mxu0 0
        %2777 = vmatprep.subr.bf16.mxu0 0
        %2778 = vmatpush1.bf16.msra.mxu0 0
        %2779 = vmatprep.subr.bf16.mxu0 0
        %2780 = vmatpush1.bf16.msra.mxu0 0
        %2781 = vmatprep.subr.bf16.mxu0 0
        %2782 = vmatpush1.bf16.msra.mxu0 0
        %2783 = vmatprep.subr.bf16.mxu0 0
        %2784 = vmatpush1.bf16.msra.mxu0 0
        %2785 = vmatprep.subr.bf16.mxu0 0
        %2786 = vmatpush1.bf16.msra.mxu0 0
        %2787 = vmatprep.subr.bf16.mxu0 0
        %2788 = vmatpush1.bf16.msra.mxu0 0
        %2789 = vmatprep.subr.bf16.mxu0 0
        %2790 = vmatpush1.bf16.msra.mxu0 0
        %2791 = vmatprep.subr.bf16.mxu0 0
        %2792 = vmatpush1.bf16.msra.mxu0 0
        %2793 = vmatprep.mubr.bf16.mxu0 0
        %2794 = vmatmul.mubr.bf16.gmra.mrb[0].mxu0 %v2708
        %v2795 = vpop.f32.mrb[0].mxu0
        %v2796 = vadd.f32 0.0, %v2795
        %v2797 = vpop.f32.mrb[0].mxu0
        %v2798 = vadd.f32 0.0, %v2797
        %v2799 = vpop.f32.mrb[0].mxu0
        %v2800 = vadd.f32 0.0, %v2799
        %v2801 = vpop.f32.mrb[0].mxu0
        %v2802 = vadd.f32 0.0, %v2801
        %2803 = vmatprep.mubr.bf16.mxu0 0
        %2804 = vmatmul.mubr.bf16.gmra.mrb[0].mxu0 %v2711
        %v2805 = vpop.f32.mrb[0].mxu0
        %v2806 = vadd.f32 0.0, %v2805
        %v2807 = vpop.f32.mrb[0].mxu0
        %v2808 = vadd.f32 0.0, %v2807
        %v2809 = vpop.f32.mrb[0].mxu0
        %v2810 = vadd.f32 0.0, %v2809
        %v2811 = vpop.f32.mrb[0].mxu0
        %v2812 = vadd.f32 0.0, %v2811
        %2813 = vmatprep.mubr.bf16.mxu0 0
        %2814 = vmatmul.mubr.bf16.gmra.mrb[0].mxu0 %v2714
        %v2815 = vpop.f32.mrb[0].mxu0
        %v2816 = vadd.f32 0.0, %v2815
        %v2817 = vpop.f32.mrb[0].mxu0
        %v2818 = vadd.f32 0.0, %v2817
        %v2819 = vpop.f32.mrb[0].mxu0
        %v2820 = vadd.f32 0.0, %v2819
        %v2821 = vpop.f32.mrb[0].mxu0
        %v2822 = vadd.f32 0.0, %v2821
        %2823 = vmatprep.mubr.bf16.mxu0 0
        %2824 = vmatmul.mubr.bf16.gmra.mrb[0].mxu0 %v2717
        %v2825 = vpop.f32.mrb[0].mxu0
        %v2826 = vadd.f32 0.0, %v2825
        %v2827 = vpop.f32.mrb[0].mxu0
        %v2828 = vadd.f32 0.0, %v2827
        %v2829 = vpop.f32.mrb[0].mxu0
        %v2830 = vadd.f32 0.0, %v2829
        %v2831 = vpop.f32.mrb[0].mxu0
        %v2832 = vadd.f32 0.0, %v2831
        %2833 = vmatprep.mubr.bf16.mxu0 0
        %2834 = vmatmul.mubr.bf16.gmra.mrb[0].mxu0 %v2720
        %v2835 = vpop.f32.mrb[0].mxu0
        %v2836 = vadd.f32 0.0, %v2835
        %v2837 = vpop.f32.mrb[0].mxu0
        %v2838 = vadd.f32 0.0, %v2837
        %v2839 = vpop.f32.mrb[0].mxu0
        %v2840 = vadd.f32 0.0, %v2839
        %v2841 = vpop.f32.mrb[0].mxu0
        %v2842 = vadd.f32 0.0, %v2841
        %2843 = vmatprep.mubr.bf16.mxu0 0
        %2844 = vmatmul.mubr.bf16.gmra.mrb[0].mxu0 %v2723
        %v2845 = vpop.f32.mrb[0].mxu0
        %v2846 = vadd.f32 0.0, %v2845
        %v2847 = vpop.f32.mrb[0].mxu0
        %v2848 = vadd.f32 0.0, %v2847
        %v2849 = vpop.f32.mrb[0].mxu0
        %v2850 = vadd.f32 0.0, %v2849
        %v2851 = vpop.f32.mrb[0].mxu0
        %v2852 = vadd.f32 0.0, %v2851
        %2853 = vmatprep.mubr.bf16.mxu0 0
        %2854 = vmatmul.mubr.bf16.gmra.mrb[0].mxu0 %v2726
        %v2855 = vpop.f32.mrb[0].mxu0
        %v2856 = vadd.f32 0.0, %v2855
        %v2857 = vpop.f32.mrb[0].mxu0
        %v2858 = vadd.f32 0.0, %v2857
        %v2859 = vpop.f32.mrb[0].mxu0
        %v2860 = vadd.f32 0.0, %v2859
        %v2861 = vpop.f32.mrb[0].mxu0
        %v2862 = vadd.f32 0.0, %v2861
        %2863 = vmatprep.mubr.bf16.mxu0 0
        %2864 = vmatmul.mubr.bf16.gmra.mrb[0].mxu0 %v2729
        %v2865 = vpop.f32.mrb[0].mxu0
        %v2866 = vadd.f32 0.0, %v2865
        %v2867 = vpop.f32.mrb[0].mxu0
        %v2868 = vadd.f32 0.0, %v2867
        %v2869 = vpop.f32.mrb[0].mxu0
        %v2870 = vadd.f32 0.0, %v2869
        %v2871 = vpop.f32.mrb[0].mxu0
        %v2872 = vadd.f32 0.0, %v2871
        %2873 = vmatprep.mubr.bf16.mxu0 0
        %2874 = vmatmul.mubr.bf16.gmra.mrb[0].mxu0 %v2732
        %v2875 = vpop.f32.mrb[0].mxu0
        %v2876 = vadd.f32 0.0, %v2875
        %v2877 = vpop.f32.mrb[0].mxu0
        %v2878 = vadd.f32 0.0, %v2877
        %v2879 = vpop.f32.mrb[0].mxu0
        %v2880 = vadd.f32 0.0, %v2879
        %v2881 = vpop.f32.mrb[0].mxu0
        %v2882 = vadd.f32 0.0, %v2881
        %2883 = vmatprep.mubr.bf16.mxu0 0
        %2884 = vmatmul.mubr.bf16.gmra.mrb[0].mxu0 %v2735
        %v2885 = vpop.f32.mrb[0].mxu0
        %v2886 = vadd.f32 0.0, %v2885
        %v2887 = vpop.f32.mrb[0].mxu0
        %v2888 = vadd.f32 0.0, %v2887
        %v2889 = vpop.f32.mrb[0].mxu0
        %v2890 = vadd.f32 0.0, %v2889
        %v2891 = vpop.f32.mrb[0].mxu0
        %v2892 = vadd.f32 0.0, %v2891
        %2893 = vmatprep.mubr.bf16.mxu0 0
        %2894 = vmatmul.mubr.bf16.gmra.mrb[0].mxu0 %v2738
        %v2895 = vpop.f32.mrb[0].mxu0
        %v2896 = vadd.f32 0.0, %v2895
        %v2897 = vpop.f32.mrb[0].mxu0
        %v2898 = vadd.f32 0.0, %v2897
        %v2899 = vpop.f32.mrb[0].mxu0
        %v2900 = vadd.f32 0.0, %v2899
        %v2901 = vpop.f32.mrb[0].mxu0
        %v2902 = vadd.f32 0.0, %v2901
        %2903 = vmatprep.mubr.bf16.mxu0 0
        %2904 = vmatmul.mubr.bf16.gmra.mrb[0].mxu0 %v2741
        %v2905 = vpop.f32.mrb[0].mxu0
        %v2906 = vadd.f32 0.0, %v2905
        %v2907 = vpop.f32.mrb[0].mxu0
        %v2908 = vadd.f32 0.0, %v2907
        %v2909 = vpop.f32.mrb[0].mxu0
        %v2910 = vadd.f32 0.0, %v2909
        %v2911 = vpop.f32.mrb[0].mxu0
        %v2912 = vadd.f32 0.0, %v2911
        %2913 = vmatprep.mubr.bf16.mxu0 0
        %2914 = vmatmul.mubr.bf16.gmra.mrb[0].mxu0 %v2744
        %v2915 = vpop.f32.mrb[0].mxu0
        %v2916 = vadd.f32 0.0, %v2915
        %v2917 = vpop.f32.mrb[0].mxu0
        %v2918 = vadd.f32 0.0, %v2917
        %v2919 = vpop.f32.mrb[0].mxu0
        %v2920 = vadd.f32 0.0, %v2919
        %v2921 = vpop.f32.mrb[0].mxu0
        %v2922 = vadd.f32 0.0, %v2921
        %2923 = vmatprep.mubr.bf16.mxu0 0
        %2924 = vmatmul.mubr.bf16.gmra.mrb[0].mxu0 %v2747
        %v2925 = vpop.f32.mrb[0].mxu0
        %v2926 = vadd.f32 0.0, %v2925
        %v2927 = vpop.f32.mrb[0].mxu0
        %v2928 = vadd.f32 0.0, %v2927
        %v2929 = vpop.f32.mrb[0].mxu0
        %v2930 = vadd.f32 0.0, %v2929
        %v2931 = vpop.f32.mrb[0].mxu0
        %v2932 = vadd.f32 0.0, %v2931
        %2933 = vmatprep.mubr.bf16.mxu0 0
        %2934 = vmatmul.mubr.bf16.gmra.mrb[0].mxu0 %v2750
        %v2935 = vpop.f32.mrb[0].mxu0
        %v2936 = vadd.f32 0.0, %v2935
        %v2937 = vpop.f32.mrb[0].mxu0
        %v2938 = vadd.f32 0.0, %v2937
        %v2939 = vpop.f32.mrb[0].mxu0
        %v2940 = vadd.f32 0.0, %v2939
        %v2941 = vpop.f32.mrb[0].mxu0
        %v2942 = vadd.f32 0.0, %v2941
        %2943 = vmatprep.mubr.bf16.mxu0 0
        %2944 = vmatmul.mubr.bf16.gmra.mrb[0].mxu0 %v2753
        %v2945 = vpop.f32.mrb[0].mxu0
        %v2946 = vadd.f32 0.0, %v2945
        %v2947 = vpop.f32.mrb[0].mxu0
        %v2948 = vadd.f32 0.0, %v2947
        %v2949 = vpop.f32.mrb[0].mxu0
        %v2950 = vadd.f32 0.0, %v2949
        %v2951 = vpop.f32.mrb[0].mxu0
        %v2952 = vadd.f32 0.0, %v2951
        %2953 = vdwg.mxu0
        %v2954 = vmax.f32 %v717, %v721
        %v2955 = vmax.f32 %v2954, %v727
        %v2956 = vmax.f32 %v2955, %v731
        %v2957 = vmax.f32 %v2956, %v737
        %v2958 = vmax.f32 %v2957, %v741
        %v2959 = vmax.f32 %v2958, %v747
        %v2960 = vmax.f32 %v2959, %v751
        %v2961 = vmax.f32 %v2960, %v757
        %v2962 = vmax.f32 %v2961, %v761
        %v2963 = vmax.f32 %v2962, %v767
        %v2964 = vmax.f32 %v2963, %v771
        %v2965 = vmax.f32 %v2964, %v777
        %v2966 = vmax.f32 %v2965, %v781
        %v2967 = vmax.f32 %v2966, %v787
        %v2968 = vmax.f32 %v2967, %v791
        %v2969 = vmax.f32 %v2968, %v797
        %v2970 = vmax.f32 %v2969, %v801
        %v2971 = vmax.f32 %v2970, %v807
        %v2972 = vmax.f32 %v2971, %v811
        %v2973 = vmax.f32 %v2972, %v817
        %v2974 = vmax.f32 %v2973, %v821
        %v2975 = vmax.f32 %v2974, %v827
        %v2976 = vmax.f32 %v2975, %v831
        %v2977 = vmax.f32 %v2976, %v837
        %v2978 = vmax.f32 %v2977, %v841
        %v2979 = vmax.f32 %v2978, %v847
        %v2980 = vmax.f32 %v2979, %v851
        %v2981 = vmax.f32 %v2980, %v857
        %v2982 = vmax.f32 %v2981, %v861
        %v2983 = vmax.f32 %v2982, %v867
        %v2984 = vmax.f32 %v2983, %v871
        %v2985 = vrot.slane %v2984, 4
        %v2986 = vmax.f32 %v2984, %v2985
        %v2987 = vrot.slane %v2986, 2
        %v2988 = vmax.f32 %v2986, %v2987
        %v2989 = vrot.slane %v2988, 1
        %v2990 = vmax.f32 %v2988, %v2989
        %v2991 = vmax.f32 %v719, %v723
        %v2992 = vmax.f32 %v2991, %v729
        %v2993 = vmax.f32 %v2992, %v733
        %v2994 = vmax.f32 %v2993, %v739
        %v2995 = vmax.f32 %v2994, %v743
        %v2996 = vmax.f32 %v2995, %v749
        %v2997 = vmax.f32 %v2996, %v753
        %v2998 = vmax.f32 %v2997, %v759
        %v2999 = vmax.f32 %v2998, %v763
        %v3000 = vmax.f32 %v2999, %v769
        %v3001 = vmax.f32 %v3000, %v773
        %v3002 = vmax.f32 %v3001, %v779
        %v3003 = vmax.f32 %v3002, %v783
        %v3004 = vmax.f32 %v3003, %v789
        %v3005 = vmax.f32 %v3004, %v793
        %v3006 = vmax.f32 %v3005, %v799
        %v3007 = vmax.f32 %v3006, %v803
        %v3008 = vmax.f32 %v3007, %v809
        %v3009 = vmax.f32 %v3008, %v813
        %v3010 = vmax.f32 %v3009, %v819
        %v3011 = vmax.f32 %v3010, %v823
        %v3012 = vmax.f32 %v3011, %v829
        %v3013 = vmax.f32 %v3012, %v833
        %v3014 = vmax.f32 %v3013, %v839
        %v3015 = vmax.f32 %v3014, %v843
        %v3016 = vmax.f32 %v3015, %v849
        %v3017 = vmax.f32 %v3016, %v853
        %v3018 = vmax.f32 %v3017, %v859
        %v3019 = vmax.f32 %v3018, %v863
        %v3020 = vmax.f32 %v3019, %v869
        %v3021 = vmax.f32 %v3020, %v873
        %v3022 = vrot.slane %v3021, 4
        %v3023 = vmax.f32 %v3021, %v3022
        %v3024 = vrot.slane %v3023, 2
        %v3025 = vmax.f32 %v3023, %v3024
        %v3026 = vrot.slane %v3025, 1
        %v3027 = vmax.f32 %v3025, %v3026
        %v3028 = vmax.f32 %v1014, %v1018
        %v3029 = vmax.f32 %v3028, %v1024
        %v3030 = vmax.f32 %v3029, %v1028
        %v3031 = vmax.f32 %v3030, %v1034
        %v3032 = vmax.f32 %v3031, %v1038
        %v3033 = vmax.f32 %v3032, %v1044
        %v3034 = vmax.f32 %v3033, %v1048
        %v3035 = vmax.f32 %v3034, %v1054
        %v3036 = vmax.f32 %v3035, %v1058
        %v3037 = vmax.f32 %v3036, %v1064
        %v3038 = vmax.f32 %v3037, %v1068
        %v3039 = vmax.f32 %v3038, %v1074
        %v3040 = vmax.f32 %v3039, %v1078
        %v3041 = vmax.f32 %v3040, %v1084
        %v3042 = vmax.f32 %v3041, %v1088
        %v3043 = vmax.f32 %v3042, %v1094
        %v3044 = vmax.f32 %v3043, %v1098
        %v3045 = vmax.f32 %v3044, %v1104
        %v3046 = vmax.f32 %v3045, %v1108
        %v3047 = vmax.f32 %v3046, %v1114
        %v3048 = vmax.f32 %v3047, %v1118
        %v3049 = vmax.f32 %v3048, %v1124
        %v3050 = vmax.f32 %v3049, %v1128
        %v3051 = vmax.f32 %v3050, %v1134
        %v3052 = vmax.f32 %v3051, %v1138
        %v3053 = vmax.f32 %v3052, %v1144
        %v3054 = vmax.f32 %v3053, %v1148
        %v3055 = vmax.f32 %v3054, %v1154
        %v3056 = vmax.f32 %v3055, %v1158
        %v3057 = vmax.f32 %v3056, %v1164
        %v3058 = vmax.f32 %v3057, %v1168
        %v3059 = vrot.slane %v3058, 4
        %v3060 = vmax.f32 %v3058, %v3059
        %v3061 = vrot.slane %v3060, 2
        %v3062 = vmax.f32 %v3060, %v3061
        %v3063 = vrot.slane %v3062, 1
        %v3064 = vmax.f32 %v3062, %v3063
        %v3065 = vmax.f32 %v1016, %v1020
        %v3066 = vmax.f32 %v3065, %v1026
        %v3067 = vmax.f32 %v3066, %v1030
        %v3068 = vmax.f32 %v3067, %v1036
        %v3069 = vmax.f32 %v3068, %v1040
        %v3070 = vmax.f32 %v3069, %v1046
        %v3071 = vmax.f32 %v3070, %v1050
        %v3072 = vmax.f32 %v3071, %v1056
        %v3073 = vmax.f32 %v3072, %v1060
        %v3074 = vmax.f32 %v3073, %v1066
        %v3075 = vmax.f32 %v3074, %v1070
        %v3076 = vmax.f32 %v3075, %v1076
        %v3077 = vmax.f32 %v3076, %v1080
        %v3078 = vmax.f32 %v3077, %v1086
        %v3079 = vmax.f32 %v3078, %v1090
        %v3080 = vmax.f32 %v3079, %v1096
        %v3081 = vmax.f32 %v3080, %v1100
        %v3082 = vmax.f32 %v3081, %v1106
        %v3083 = vmax.f32 %v3082, %v1110
        %v3084 = vmax.f32 %v3083, %v1116
        %v3085 = vmax.f32 %v3084, %v1120
        %v3086 = vmax.f32 %v3085, %v1126
        %v3087 = vmax.f32 %v3086, %v1130
        %v3088 = vmax.f32 %v3087, %v1136
        %v3089 = vmax.f32 %v3088, %v1140
        %v3090 = vmax.f32 %v3089, %v1146
        %v3091 = vmax.f32 %v3090, %v1150
        %v3092 = vmax.f32 %v3091, %v1156
        %v3093 = vmax.f32 %v3092, %v1160
        %v3094 = vmax.f32 %v3093, %v1166
        %v3095 = vmax.f32 %v3094, %v1170
        %v3096 = vrot.slane %v3095, 4
        %v3097 = vmax.f32 %v3095, %v3096
        %v3098 = vrot.slane %v3097, 2
        %v3099 = vmax.f32 %v3097, %v3098
        %v3100 = vrot.slane %v3099, 1
        %v3101 = vmax.f32 %v3099, %v3100
        %v3102 = vmax.f32 %v1311, %v1315
        %v3103 = vmax.f32 %v3102, %v1321
        %v3104 = vmax.f32 %v3103, %v1325
        %v3105 = vmax.f32 %v3104, %v1331
        %v3106 = vmax.f32 %v3105, %v1335
        %v3107 = vmax.f32 %v3106, %v1341
        %v3108 = vmax.f32 %v3107, %v1345
        %v3109 = vmax.f32 %v3108, %v1351
        %v3110 = vmax.f32 %v3109, %v1355
        %v3111 = vmax.f32 %v3110, %v1361
        %v3112 = vmax.f32 %v3111, %v1365
        %v3113 = vmax.f32 %v3112, %v1371
        %v3114 = vmax.f32 %v3113, %v1375
        %v3115 = vmax.f32 %v3114, %v1381
        %v3116 = vmax.f32 %v3115, %v1385
        %v3117 = vmax.f32 %v3116, %v1391
        %v3118 = vmax.f32 %v3117, %v1395
        %v3119 = vmax.f32 %v3118, %v1401
        %v3120 = vmax.f32 %v3119, %v1405
        %v3121 = vmax.f32 %v3120, %v1411
        %v3122 = vmax.f32 %v3121, %v1415
        %v3123 = vmax.f32 %v3122, %v1421
        %v3124 = vmax.f32 %v3123, %v1425
        %v3125 = vmax.f32 %v3124, %v1431
        %v3126 = vmax.f32 %v3125, %v1435
        %v3127 = vmax.f32 %v3126, %v1441
        %v3128 = vmax.f32 %v3127, %v1445
        %v3129 = vmax.f32 %v3128, %v1451
        %v3130 = vmax.f32 %v3129, %v1455
        %v3131 = vmax.f32 %v3130, %v1461
        %v3132 = vmax.f32 %v3131, %v1465
        %v3133 = vrot.slane %v3132, 4
        %v3134 = vmax.f32 %v3132, %v3133
        %v3135 = vrot.slane %v3134, 2
        %v3136 = vmax.f32 %v3134, %v3135
        %v3137 = vrot.slane %v3136, 1
        %v3138 = vmax.f32 %v3136, %v3137
        %v3139 = vmax.f32 %v1313, %v1317
        %v3140 = vmax.f32 %v3139, %v1323
        %v3141 = vmax.f32 %v3140, %v1327
        %v3142 = vmax.f32 %v3141, %v1333
        %v3143 = vmax.f32 %v3142, %v1337
        %v3144 = vmax.f32 %v3143, %v1343
        %v3145 = vmax.f32 %v3144, %v1347
        %v3146 = vmax.f32 %v3145, %v1353
        %v3147 = vmax.f32 %v3146, %v1357
        %v3148 = vmax.f32 %v3147, %v1363
        %v3149 = vmax.f32 %v3148, %v1367
        %v3150 = vmax.f32 %v3149, %v1373
        %v3151 = vmax.f32 %v3150, %v1377
        %v3152 = vmax.f32 %v3151, %v1383
        %v3153 = vmax.f32 %v3152, %v1387
        %v3154 = vmax.f32 %v3153, %v1393
        %v3155 = vmax.f32 %v3154, %v1397
        %v3156 = vmax.f32 %v3155, %v1403
        %v3157 = vmax.f32 %v3156, %v1407
        %v3158 = vmax.f32 %v3157, %v1413
        %v3159 = vmax.f32 %v3158, %v1417
        %v3160 = vmax.f32 %v3159, %v1423
        %v3161 = vmax.f32 %v3160, %v1427
        %v3162 = vmax.f32 %v3161, %v1433
        %v3163 = vmax.f32 %v3162, %v1437
        %v3164 = vmax.f32 %v3163, %v1443
        %v3165 = vmax.f32 %v3164, %v1447
        %v3166 = vmax.f32 %v3165, %v1453
        %v3167 = vmax.f32 %v3166, %v1457
        %v3168 = vmax.f32 %v3167, %v1463
        %v3169 = vmax.f32 %v3168, %v1467
        %v3170 = vrot.slane %v3169, 4
        %v3171 = vmax.f32 %v3169, %v3170
        %v3172 = vrot.slane %v3171, 2
        %v3173 = vmax.f32 %v3171, %v3172
        %v3174 = vrot.slane %v3173, 1
        %v3175 = vmax.f32 %v3173, %v3174
        %v3176 = vmax.f32 %v1608, %v1612
        %v3177 = vmax.f32 %v3176, %v1618
        %v3178 = vmax.f32 %v3177, %v1622
        %v3179 = vmax.f32 %v3178, %v1628
        %v3180 = vmax.f32 %v3179, %v1632
        %v3181 = vmax.f32 %v3180, %v1638
        %v3182 = vmax.f32 %v3181, %v1642
        %v3183 = vmax.f32 %v3182, %v1648
        %v3184 = vmax.f32 %v3183, %v1652
        %v3185 = vmax.f32 %v3184, %v1658
        %v3186 = vmax.f32 %v3185, %v1662
        %v3187 = vmax.f32 %v3186, %v1668
        %v3188 = vmax.f32 %v3187, %v1672
        %v3189 = vmax.f32 %v3188, %v1678
        %v3190 = vmax.f32 %v3189, %v1682
        %v3191 = vmax.f32 %v3190, %v1688
        %v3192 = vmax.f32 %v3191, %v1692
        %v3193 = vmax.f32 %v3192, %v1698
        %v3194 = vmax.f32 %v3193, %v1702
        %v3195 = vmax.f32 %v3194, %v1708
        %v3196 = vmax.f32 %v3195, %v1712
        %v3197 = vmax.f32 %v3196, %v1718
        %v3198 = vmax.f32 %v3197, %v1722
        %v3199 = vmax.f32 %v3198, %v1728
        %v3200 = vmax.f32 %v3199, %v1732
        %v3201 = vmax.f32 %v3200, %v1738
        %v3202 = vmax.f32 %v3201, %v1742
        %v3203 = vmax.f32 %v3202, %v1748
        %v3204 = vmax.f32 %v3203, %v1752
        %v3205 = vmax.f32 %v3204, %v1758
        %v3206 = vmax.f32 %v3205, %v1762
        %v3207 = vrot.slane %v3206, 4
        %v3208 = vmax.f32 %v3206, %v3207
        %v3209 = vrot.slane %v3208, 2
        %v3210 = vmax.f32 %v3208, %v3209
        %v3211 = vrot.slane %v3210, 1
        %v3212 = vmax.f32 %v3210, %v3211
        %v3213 = vmax.f32 %v1610, %v1614
        %v3214 = vmax.f32 %v3213, %v1620
        %v3215 = vmax.f32 %v3214, %v1624
        %v3216 = vmax.f32 %v3215, %v1630
        %v3217 = vmax.f32 %v3216, %v1634
        %v3218 = vmax.f32 %v3217, %v1640
        %v3219 = vmax.f32 %v3218, %v1644
        %v3220 = vmax.f32 %v3219, %v1650
        %v3221 = vmax.f32 %v3220, %v1654
        %v3222 = vmax.f32 %v3221, %v1660
        %v3223 = vmax.f32 %v3222, %v1664
        %v3224 = vmax.f32 %v3223, %v1670
        %v3225 = vmax.f32 %v3224, %v1674
        %v3226 = vmax.f32 %v3225, %v1680
        %v3227 = vmax.f32 %v3226, %v1684
        %v3228 = vmax.f32 %v3227, %v1690
        %v3229 = vmax.f32 %v3228, %v1694
        %v3230 = vmax.f32 %v3229, %v1700
        %v3231 = vmax.f32 %v3230, %v1704
        %v3232 = vmax.f32 %v3231, %v1710
        %v3233 = vmax.f32 %v3232, %v1714
        %v3234 = vmax.f32 %v3233, %v1720
        %v3235 = vmax.f32 %v3234, %v1724
        %v3236 = vmax.f32 %v3235, %v1730
        %v3237 = vmax.f32 %v3236, %v1734
        %v3238 = vmax.f32 %v3237, %v1740
        %v3239 = vmax.f32 %v3238, %v1744
        %v3240 = vmax.f32 %v3239, %v1750
        %v3241 = vmax.f32 %v3240, %v1754
        %v3242 = vmax.f32 %v3241, %v1760
        %v3243 = vmax.f32 %v3242, %v1764
        %v3244 = vrot.slane %v3243, 4
        %v3245 = vmax.f32 %v3243, %v3244
        %v3246 = vrot.slane %v3245, 2
        %v3247 = vmax.f32 %v3245, %v3246
        %v3248 = vrot.slane %v3247, 1
        %v3249 = vmax.f32 %v3247, %v3248
        %v3250 = vmax.f32 %v1905, %v1909
        %v3251 = vmax.f32 %v3250, %v1915
        %v3252 = vmax.f32 %v3251, %v1919
        %v3253 = vmax.f32 %v3252, %v1925
        %v3254 = vmax.f32 %v3253, %v1929
        %v3255 = vmax.f32 %v3254, %v1935
        %v3256 = vmax.f32 %v3255, %v1939
        %v3257 = vmax.f32 %v3256, %v1945
        %v3258 = vmax.f32 %v3257, %v1949
        %v3259 = vmax.f32 %v3258, %v1955
        %v3260 = vmax.f32 %v3259, %v1959
        %v3261 = vmax.f32 %v3260, %v1965
        %v3262 = vmax.f32 %v3261, %v1969
        %v3263 = vmax.f32 %v3262, %v1975
        %v3264 = vmax.f32 %v3263, %v1979
        %v3265 = vmax.f32 %v3264, %v1985
        %v3266 = vmax.f32 %v3265, %v1989
        %v3267 = vmax.f32 %v3266, %v1995
        %v3268 = vmax.f32 %v3267, %v1999
        %v3269 = vmax.f32 %v3268, %v2005
        %v3270 = vmax.f32 %v3269, %v2009
        %v3271 = vmax.f32 %v3270, %v2015
        %v3272 = vmax.f32 %v3271, %v2019
        %v3273 = vmax.f32 %v3272, %v2025
        %v3274 = vmax.f32 %v3273, %v2029
        %v3275 = vmax.f32 %v3274, %v2035
        %v3276 = vmax.f32 %v3275, %v2039
        %v3277 = vmax.f32 %v3276, %v2045
        %v3278 = vmax.f32 %v3277, %v2049
        %v3279 = vmax.f32 %v3278, %v2055
        %v3280 = vmax.f32 %v3279, %v2059
        %v3281 = vrot.slane %v3280, 4
        %v3282 = vmax.f32 %v3280, %v3281
        %v3283 = vrot.slane %v3282, 2
        %v3284 = vmax.f32 %v3282, %v3283
        %v3285 = vrot.slane %v3284, 1
        %v3286 = vmax.f32 %v3284, %v3285
        %v3287 = vmax.f32 %v1907, %v1911
        %v3288 = vmax.f32 %v3287, %v1917
        %v3289 = vmax.f32 %v3288, %v1921
        %v3290 = vmax.f32 %v3289, %v1927
        %v3291 = vmax.f32 %v3290, %v1931
        %v3292 = vmax.f32 %v3291, %v1937
        %v3293 = vmax.f32 %v3292, %v1941
        %v3294 = vmax.f32 %v3293, %v1947
        %v3295 = vmax.f32 %v3294, %v1951
        %v3296 = vmax.f32 %v3295, %v1957
        %v3297 = vmax.f32 %v3296, %v1961
        %v3298 = vmax.f32 %v3297, %v1967
        %v3299 = vmax.f32 %v3298, %v1971
        %v3300 = vmax.f32 %v3299, %v1977
        %v3301 = vmax.f32 %v3300, %v1981
        %v3302 = vmax.f32 %v3301, %v1987
        %v3303 = vmax.f32 %v3302, %v1991
        %v3304 = vmax.f32 %v3303, %v1997
        %v3305 = vmax.f32 %v3304, %v2001
        %v3306 = vmax.f32 %v3305, %v2007
        %v3307 = vmax.f32 %v3306, %v2011
        %v3308 = vmax.f32 %v3307, %v2017
        %v3309 = vmax.f32 %v3308, %v2021
        %v3310 = vmax.f32 %v3309, %v2027
        %v3311 = vmax.f32 %v3310, %v2031
        %v3312 = vmax.f32 %v3311, %v2037
        %v3313 = vmax.f32 %v3312, %v2041
        %v3314 = vmax.f32 %v3313, %v2047
        %v3315 = vmax.f32 %v3314, %v2051
        %v3316 = vmax.f32 %v3315, %v2057
        %v3317 = vmax.f32 %v3316, %v2061
        %v3318 = vrot.slane %v3317, 4
        %v3319 = vmax.f32 %v3317, %v3318
        %v3320 = vrot.slane %v3319, 2
        %v3321 = vmax.f32 %v3319, %v3320
        %v3322 = vrot.slane %v3321, 1
        %v3323 = vmax.f32 %v3321, %v3322
        %v3324 = vmax.f32 %v2202, %v2206
        %v3325 = vmax.f32 %v3324, %v2212
        %v3326 = vmax.f32 %v3325, %v2216
        %v3327 = vmax.f32 %v3326, %v2222
        %v3328 = vmax.f32 %v3327, %v2226
        %v3329 = vmax.f32 %v3328, %v2232
        %v3330 = vmax.f32 %v3329, %v2236
        %v3331 = vmax.f32 %v3330, %v2242
        %v3332 = vmax.f32 %v3331, %v2246
        %v3333 = vmax.f32 %v3332, %v2252
        %v3334 = vmax.f32 %v3333, %v2256
        %v3335 = vmax.f32 %v3334, %v2262
        %v3336 = vmax.f32 %v3335, %v2266
        %v3337 = vmax.f32 %v3336, %v2272
        %v3338 = vmax.f32 %v3337, %v2276
        %v3339 = vmax.f32 %v3338, %v2282
        %v3340 = vmax.f32 %v3339, %v2286
        %v3341 = vmax.f32 %v3340, %v2292
        %v3342 = vmax.f32 %v3341, %v2296
        %v3343 = vmax.f32 %v3342, %v2302
        %v3344 = vmax.f32 %v3343, %v2306
        %v3345 = vmax.f32 %v3344, %v2312
        %v3346 = vmax.f32 %v3345, %v2316
        %v3347 = vmax.f32 %v3346, %v2322
        %v3348 = vmax.f32 %v3347, %v2326
        %v3349 = vmax.f32 %v3348, %v2332
        %v3350 = vmax.f32 %v3349, %v2336
        %v3351 = vmax.f32 %v3350, %v2342
        %v3352 = vmax.f32 %v3351, %v2346
        %v3353 = vmax.f32 %v3352, %v2352
        %v3354 = vmax.f32 %v3353, %v2356
        %v3355 = vrot.slane %v3354, 4
        %v3356 = vmax.f32 %v3354, %v3355
        %v3357 = vrot.slane %v3356, 2
        %v3358 = vmax.f32 %v3356, %v3357
        %v3359 = vrot.slane %v3358, 1
        %v3360 = vmax.f32 %v3358, %v3359
        %v3361 = vmax.f32 %v2204, %v2208
        %v3362 = vmax.f32 %v3361, %v2214
        %v3363 = vmax.f32 %v3362, %v2218
        %v3364 = vmax.f32 %v3363, %v2224
        %v3365 = vmax.f32 %v3364, %v2228
        %v3366 = vmax.f32 %v3365, %v2234
        %v3367 = vmax.f32 %v3366, %v2238
        %v3368 = vmax.f32 %v3367, %v2244
        %v3369 = vmax.f32 %v3368, %v2248
        %v3370 = vmax.f32 %v3369, %v2254
        %v3371 = vmax.f32 %v3370, %v2258
        %v3372 = vmax.f32 %v3371, %v2264
        %v3373 = vmax.f32 %v3372, %v2268
        %v3374 = vmax.f32 %v3373, %v2274
        %v3375 = vmax.f32 %v3374, %v2278
        %v3376 = vmax.f32 %v3375, %v2284
        %v3377 = vmax.f32 %v3376, %v2288
        %v3378 = vmax.f32 %v3377, %v2294
        %v3379 = vmax.f32 %v3378, %v2298
        %v3380 = vmax.f32 %v3379, %v2304
        %v3381 = vmax.f32 %v3380, %v2308
        %v3382 = vmax.f32 %v3381, %v2314
        %v3383 = vmax.f32 %v3382, %v2318
        %v3384 = vmax.f32 %v3383, %v2324
        %v3385 = vmax.f32 %v3384, %v2328
        %v3386 = vmax.f32 %v3385, %v2334
        %v3387 = vmax.f32 %v3386, %v2338
        %v3388 = vmax.f32 %v3387, %v2344
        %v3389 = vmax.f32 %v3388, %v2348
        %v3390 = vmax.f32 %v3389, %v2354
        %v3391 = vmax.f32 %v3390, %v2358
        %v3392 = vrot.slane %v3391, 4
        %v3393 = vmax.f32 %v3391, %v3392
        %v3394 = vrot.slane %v3393, 2
        %v3395 = vmax.f32 %v3393, %v3394
        %v3396 = vrot.slane %v3395, 1
        %v3397 = vmax.f32 %v3395, %v3396
        %v3398 = vmax.f32 %v2499, %v2503
        %v3399 = vmax.f32 %v3398, %v2509
        %v3400 = vmax.f32 %v3399, %v2513
        %v3401 = vmax.f32 %v3400, %v2519
        %v3402 = vmax.f32 %v3401, %v2523
        %v3403 = vmax.f32 %v3402, %v2529
        %v3404 = vmax.f32 %v3403, %v2533
        %v3405 = vmax.f32 %v3404, %v2539
        %v3406 = vmax.f32 %v3405, %v2543
        %v3407 = vmax.f32 %v3406, %v2549
        %v3408 = vmax.f32 %v3407, %v2553
        %v3409 = vmax.f32 %v3408, %v2559
        %v3410 = vmax.f32 %v3409, %v2563
        %v3411 = vmax.f32 %v3410, %v2569
        %v3412 = vmax.f32 %v3411, %v2573
        %v3413 = vmax.f32 %v3412, %v2579
        %v3414 = vmax.f32 %v3413, %v2583
        %v3415 = vmax.f32 %v3414, %v2589
        %v3416 = vmax.f32 %v3415, %v2593
        %v3417 = vmax.f32 %v3416, %v2599
        %v3418 = vmax.f32 %v3417, %v2603
        %v3419 = vmax.f32 %v3418, %v2609
        %v3420 = vmax.f32 %v3419, %v2613
        %v3421 = vmax.f32 %v3420, %v2619
        %v3422 = vmax.f32 %v3421, %v2623
        %v3423 = vmax.f32 %v3422, %v2629
        %v3424 = vmax.f32 %v3423, %v2633
        %v3425 = vmax.f32 %v3424, %v2639
        %v3426 = vmax.f32 %v3425, %v2643
        %v3427 = vmax.f32 %v3426, %v2649
        %v3428 = vmax.f32 %v3427, %v2653
        %v3429 = vrot.slane %v3428, 4
        %v3430 = vmax.f32 %v3428, %v3429
        %v3431 = vrot.slane %v3430, 2
        %v3432 = vmax.f32 %v3430, %v3431
        %v3433 = vrot.slane %v3432, 1
        %v3434 = vmax.f32 %v3432, %v3433
        %v3435 = vmax.f32 %v2501, %v2505
        %v3436 = vmax.f32 %v3435, %v2511
        %v3437 = vmax.f32 %v3436, %v2515
        %v3438 = vmax.f32 %v3437, %v2521
        %v3439 = vmax.f32 %v3438, %v2525
        %v3440 = vmax.f32 %v3439, %v2531
        %v3441 = vmax.f32 %v3440, %v2535
        %v3442 = vmax.f32 %v3441, %v2541
        %v3443 = vmax.f32 %v3442, %v2545
        %v3444 = vmax.f32 %v3443, %v2551
        %v3445 = vmax.f32 %v3444, %v2555
        %v3446 = vmax.f32 %v3445, %v2561
        %v3447 = vmax.f32 %v3446, %v2565
        %v3448 = vmax.f32 %v3447, %v2571
        %v3449 = vmax.f32 %v3448, %v2575
        %v3450 = vmax.f32 %v3449, %v2581
        %v3451 = vmax.f32 %v3450, %v2585
        %v3452 = vmax.f32 %v3451, %v2591
        %v3453 = vmax.f32 %v3452, %v2595
        %v3454 = vmax.f32 %v3453, %v2601
        %v3455 = vmax.f32 %v3454, %v2605
        %v3456 = vmax.f32 %v3455, %v2611
        %v3457 = vmax.f32 %v3456, %v2615
        %v3458 = vmax.f32 %v3457, %v2621
        %v3459 = vmax.f32 %v3458, %v2625
        %v3460 = vmax.f32 %v3459, %v2631
        %v3461 = vmax.f32 %v3460, %v2635
        %v3462 = vmax.f32 %v3461, %v2641
        %v3463 = vmax.f32 %v3462, %v2645
        %v3464 = vmax.f32 %v3463, %v2651
        %v3465 = vmax.f32 %v3464, %v2655
        %v3466 = vrot.slane %v3465, 4
        %v3467 = vmax.f32 %v3465, %v3466
        %v3468 = vrot.slane %v3467, 2
        %v3469 = vmax.f32 %v3467, %v3468
        %v3470 = vrot.slane %v3469, 1
        %v3471 = vmax.f32 %v3469, %v3470
        %v3472 = vmax.f32 %v2796, %v2800
        %v3473 = vmax.f32 %v3472, %v2806
        %v3474 = vmax.f32 %v3473, %v2810
        %v3475 = vmax.f32 %v3474, %v2816
        %v3476 = vmax.f32 %v3475, %v2820
        %v3477 = vmax.f32 %v3476, %v2826
        %v3478 = vmax.f32 %v3477, %v2830
        %v3479 = vmax.f32 %v3478, %v2836
        %v3480 = vmax.f32 %v3479, %v2840
        %v3481 = vmax.f32 %v3480, %v2846
        %v3482 = vmax.f32 %v3481, %v2850
        %v3483 = vmax.f32 %v3482, %v2856
        %v3484 = vmax.f32 %v3483, %v2860
        %v3485 = vmax.f32 %v3484, %v2866
        %v3486 = vmax.f32 %v3485, %v2870
        %v3487 = vmax.f32 %v3486, %v2876
        %v3488 = vmax.f32 %v3487, %v2880
        %v3489 = vmax.f32 %v3488, %v2886
        %v3490 = vmax.f32 %v3489, %v2890
        %v3491 = vmax.f32 %v3490, %v2896
        %v3492 = vmax.f32 %v3491, %v2900
        %v3493 = vmax.f32 %v3492, %v2906
        %v3494 = vmax.f32 %v3493, %v2910
        %v3495 = vmax.f32 %v3494, %v2916
        %v3496 = vmax.f32 %v3495, %v2920
        %v3497 = vmax.f32 %v3496, %v2926
        %v3498 = vmax.f32 %v3497, %v2930
        %v3499 = vmax.f32 %v3498, %v2936
        %v3500 = vmax.f32 %v3499, %v2940
        %v3501 = vmax.f32 %v3500, %v2946
        %v3502 = vmax.f32 %v3501, %v2950
        %v3503 = vrot.slane %v3502, 4
        %v3504 = vmax.f32 %v3502, %v3503
        %v3505 = vrot.slane %v3504, 2
        %v3506 = vmax.f32 %v3504, %v3505
        %v3507 = vrot.slane %v3506, 1
        %v3508 = vmax.f32 %v3506, %v3507
        %v3509 = vmax.f32 %v2798, %v2802
        %v3510 = vmax.f32 %v3509, %v2808
        %v3511 = vmax.f32 %v3510, %v2812
        %v3512 = vmax.f32 %v3511, %v2818
        %v3513 = vmax.f32 %v3512, %v2822
        %v3514 = vmax.f32 %v3513, %v2828
        %v3515 = vmax.f32 %v3514, %v2832
        %v3516 = vmax.f32 %v3515, %v2838
        %v3517 = vmax.f32 %v3516, %v2842
        %v3518 = vmax.f32 %v3517, %v2848
        %v3519 = vmax.f32 %v3518, %v2852
        %v3520 = vmax.f32 %v3519, %v2858
        %v3521 = vmax.f32 %v3520, %v2862
        %v3522 = vmax.f32 %v3521, %v2868
        %v3523 = vmax.f32 %v3522, %v2872
        %v3524 = vmax.f32 %v3523, %v2878
        %v3525 = vmax.f32 %v3524, %v2882
        %v3526 = vmax.f32 %v3525, %v2888
        %v3527 = vmax.f32 %v3526, %v2892
        %v3528 = vmax.f32 %v3527, %v2898
        %v3529 = vmax.f32 %v3528, %v2902
        %v3530 = vmax.f32 %v3529, %v2908
        %v3531 = vmax.f32 %v3530, %v2912
        %v3532 = vmax.f32 %v3531, %v2918
        %v3533 = vmax.f32 %v3532, %v2922
        %v3534 = vmax.f32 %v3533, %v2928
        %v3535 = vmax.f32 %v3534, %v2932
        %v3536 = vmax.f32 %v3535, %v2938
        %v3537 = vmax.f32 %v3536, %v2942
        %v3538 = vmax.f32 %v3537, %v2948
        %v3539 = vmax.f32 %v3538, %v2952
        %v3540 = vrot.slane %v3539, 4
        %v3541 = vmax.f32 %v3539, %v3540
        %v3542 = vrot.slane %v3541, 2
        %v3543 = vmax.f32 %v3541, %v3542
        %v3544 = vrot.slane %v3543, 1
        %v3545 = vmax.f32 %v3543, %v3544
        %v3546 = vsub.f32 %v717, %v2990
        %v3547 = vsub.f32 %v719, %v3027
        %v3548 = vsub.f32 %v721, %v2990
        %v3549 = vsub.f32 %v723, %v3027
        %v3550 = vsub.f32 %v727, %v2990
        %v3551 = vsub.f32 %v729, %v3027
        %v3552 = vsub.f32 %v731, %v2990
        %v3553 = vsub.f32 %v733, %v3027
        %v3554 = vsub.f32 %v737, %v2990
        %v3555 = vsub.f32 %v739, %v3027
        %v3556 = vsub.f32 %v741, %v2990
        %v3557 = vsub.f32 %v743, %v3027
        %v3558 = vsub.f32 %v747, %v2990
        %v3559 = vsub.f32 %v749, %v3027
        %v3560 = vsub.f32 %v751, %v2990
        %v3561 = vsub.f32 %v753, %v3027
        %v3562 = vsub.f32 %v757, %v2990
        %v3563 = vsub.f32 %v759, %v3027
        %v3564 = vsub.f32 %v761, %v2990
        %v3565 = vsub.f32 %v763, %v3027
        %v3566 = vsub.f32 %v767, %v2990
        %v3567 = vsub.f32 %v769, %v3027
        %v3568 = vsub.f32 %v771, %v2990
        %v3569 = vsub.f32 %v773, %v3027
        %v3570 = vsub.f32 %v777, %v2990
        %v3571 = vsub.f32 %v779, %v3027
        %v3572 = vsub.f32 %v781, %v2990
        %v3573 = vsub.f32 %v783, %v3027
        %v3574 = vsub.f32 %v787, %v2990
        %v3575 = vsub.f32 %v789, %v3027
        %v3576 = vsub.f32 %v791, %v2990
        %v3577 = vsub.f32 %v793, %v3027
        %v3578 = vsub.f32 %v797, %v2990
        %v3579 = vsub.f32 %v799, %v3027
        %v3580 = vsub.f32 %v801, %v2990
        %v3581 = vsub.f32 %v803, %v3027
        %v3582 = vsub.f32 %v807, %v2990
        %v3583 = vsub.f32 %v809, %v3027
        %v3584 = vsub.f32 %v811, %v2990
        %v3585 = vsub.f32 %v813, %v3027
        %v3586 = vsub.f32 %v817, %v2990
        %v3587 = vsub.f32 %v819, %v3027
        %v3588 = vsub.f32 %v821, %v2990
        %v3589 = vsub.f32 %v823, %v3027
        %v3590 = vsub.f32 %v827, %v2990
        %v3591 = vsub.f32 %v829, %v3027
        %v3592 = vsub.f32 %v831, %v2990
        %v3593 = vsub.f32 %v833, %v3027
        %v3594 = vsub.f32 %v837, %v2990
        %v3595 = vsub.f32 %v839, %v3027
        %v3596 = vsub.f32 %v841, %v2990
        %v3597 = vsub.f32 %v843, %v3027
        %v3598 = vsub.f32 %v847, %v2990
        %v3599 = vsub.f32 %v849, %v3027
        %v3600 = vsub.f32 %v851, %v2990
        %v3601 = vsub.f32 %v853, %v3027
        %v3602 = vsub.f32 %v857, %v2990
        %v3603 = vsub.f32 %v859, %v3027
        %v3604 = vsub.f32 %v861, %v2990
        %v3605 = vsub.f32 %v863, %v3027
        %v3606 = vsub.f32 %v867, %v2990
        %v3607 = vsub.f32 %v869, %v3027
        %v3608 = vsub.f32 %v871, %v2990
        %v3609 = vsub.f32 %v873, %v3027
        %v3610 = vsub.f32 %v1014, %v3064
        %v3611 = vsub.f32 %v1016, %v3101
        %v3612 = vsub.f32 %v1018, %v3064
        %v3613 = vsub.f32 %v1020, %v3101
        %v3614 = vsub.f32 %v1024, %v3064
        %v3615 = vsub.f32 %v1026, %v3101
        %v3616 = vsub.f32 %v1028, %v3064
        %v3617 = vsub.f32 %v1030, %v3101
        %v3618 = vsub.f32 %v1034, %v3064
        %v3619 = vsub.f32 %v1036, %v3101
        %v3620 = vsub.f32 %v1038, %v3064
        %v3621 = vsub.f32 %v1040, %v3101
        %v3622 = vsub.f32 %v1044, %v3064
        %v3623 = vsub.f32 %v1046, %v3101
        %v3624 = vsub.f32 %v1048, %v3064
        %v3625 = vsub.f32 %v1050, %v3101
        %v3626 = vsub.f32 %v1054, %v3064
        %v3627 = vsub.f32 %v1056, %v3101
        %v3628 = vsub.f32 %v1058, %v3064
        %v3629 = vsub.f32 %v1060, %v3101
        %v3630 = vsub.f32 %v1064, %v3064
        %v3631 = vsub.f32 %v1066, %v3101
        %v3632 = vsub.f32 %v1068, %v3064
        %v3633 = vsub.f32 %v1070, %v3101
        %v3634 = vsub.f32 %v1074, %v3064
        %v3635 = vsub.f32 %v1076, %v3101
        %v3636 = vsub.f32 %v1078, %v3064
        %v3637 = vsub.f32 %v1080, %v3101
        %v3638 = vsub.f32 %v1084, %v3064
        %v3639 = vsub.f32 %v1086, %v3101
        %v3640 = vsub.f32 %v1088, %v3064
        %v3641 = vsub.f32 %v1090, %v3101
        %v3642 = vsub.f32 %v1094, %v3064
        %v3643 = vsub.f32 %v1096, %v3101
        %v3644 = vsub.f32 %v1098, %v3064
        %v3645 = vsub.f32 %v1100, %v3101
        %v3646 = vsub.f32 %v1104, %v3064
        %v3647 = vsub.f32 %v1106, %v3101
        %v3648 = vsub.f32 %v1108, %v3064
        %v3649 = vsub.f32 %v1110, %v3101
        %v3650 = vsub.f32 %v1114, %v3064
        %v3651 = vsub.f32 %v1116, %v3101
        %v3652 = vsub.f32 %v1118, %v3064
        %v3653 = vsub.f32 %v1120, %v3101
        %v3654 = vsub.f32 %v1124, %v3064
        %v3655 = vsub.f32 %v1126, %v3101
        %v3656 = vsub.f32 %v1128, %v3064
        %v3657 = vsub.f32 %v1130, %v3101
        %v3658 = vsub.f32 %v1134, %v3064
        %v3659 = vsub.f32 %v1136, %v3101
        %v3660 = vsub.f32 %v1138, %v3064
        %v3661 = vsub.f32 %v1140, %v3101
        %v3662 = vsub.f32 %v1144, %v3064
        %v3663 = vsub.f32 %v1146, %v3101
        %v3664 = vsub.f32 %v1148, %v3064
        %v3665 = vsub.f32 %v1150, %v3101
        %v3666 = vsub.f32 %v1154, %v3064
        %v3667 = vsub.f32 %v1156, %v3101
        %v3668 = vsub.f32 %v1158, %v3064
        %v3669 = vsub.f32 %v1160, %v3101
        %v3670 = vsub.f32 %v1164, %v3064
        %v3671 = vsub.f32 %v1166, %v3101
        %v3672 = vsub.f32 %v1168, %v3064
        %v3673 = vsub.f32 %v1170, %v3101
        %v3674 = vsub.f32 %v1311, %v3138
        %v3675 = vsub.f32 %v1313, %v3175
        %v3676 = vsub.f32 %v1315, %v3138
        %v3677 = vsub.f32 %v1317, %v3175
        %v3678 = vsub.f32 %v1321, %v3138
        %v3679 = vsub.f32 %v1323, %v3175
        %v3680 = vsub.f32 %v1325, %v3138
        %v3681 = vsub.f32 %v1327, %v3175
        %v3682 = vsub.f32 %v1331, %v3138
        %v3683 = vsub.f32 %v1333, %v3175
        %v3684 = vsub.f32 %v1335, %v3138
        %v3685 = vsub.f32 %v1337, %v3175
        %v3686 = vsub.f32 %v1341, %v3138
        %v3687 = vsub.f32 %v1343, %v3175
        %v3688 = vsub.f32 %v1345, %v3138
        %v3689 = vsub.f32 %v1347, %v3175
        %v3690 = vsub.f32 %v1351, %v3138
        %v3691 = vsub.f32 %v1353, %v3175
        %v3692 = vsub.f32 %v1355, %v3138
        %v3693 = vsub.f32 %v1357, %v3175
        %v3694 = vsub.f32 %v1361, %v3138
        %v3695 = vsub.f32 %v1363, %v3175
        %v3696 = vsub.f32 %v1365, %v3138
        %v3697 = vsub.f32 %v1367, %v3175
        %v3698 = vsub.f32 %v1371, %v3138
        %v3699 = vsub.f32 %v1373, %v3175
        %v3700 = vsub.f32 %v1375, %v3138
        %v3701 = vsub.f32 %v1377, %v3175
        %v3702 = vsub.f32 %v1381, %v3138
        %v3703 = vsub.f32 %v1383, %v3175
        %v3704 = vsub.f32 %v1385, %v3138
        %v3705 = vsub.f32 %v1387, %v3175
        %v3706 = vsub.f32 %v1391, %v3138
        %v3707 = vsub.f32 %v1393, %v3175
        %v3708 = vsub.f32 %v1395, %v3138
        %v3709 = vsub.f32 %v1397, %v3175
        %v3710 = vsub.f32 %v1401, %v3138
        %v3711 = vsub.f32 %v1403, %v3175
        %v3712 = vsub.f32 %v1405, %v3138
        %v3713 = vsub.f32 %v1407, %v3175
        %v3714 = vsub.f32 %v1411, %v3138
        %v3715 = vsub.f32 %v1413, %v3175
        %v3716 = vsub.f32 %v1415, %v3138
        %v3717 = vsub.f32 %v1417, %v3175
        %v3718 = vsub.f32 %v1421, %v3138
        %v3719 = vsub.f32 %v1423, %v3175
        %v3720 = vsub.f32 %v1425, %v3138
        %v3721 = vsub.f32 %v1427, %v3175
        %v3722 = vsub.f32 %v1431, %v3138
        %v3723 = vsub.f32 %v1433, %v3175
        %v3724 = vsub.f32 %v1435, %v3138
        %v3725 = vsub.f32 %v1437, %v3175
        %v3726 = vsub.f32 %v1441, %v3138
        %v3727 = vsub.f32 %v1443, %v3175
        %v3728 = vsub.f32 %v1445, %v3138
        %v3729 = vsub.f32 %v1447, %v3175
        %v3730 = vsub.f32 %v1451, %v3138
        %v3731 = vsub.f32 %v1453, %v3175
        %v3732 = vsub.f32 %v1455, %v3138
        %v3733 = vsub.f32 %v1457, %v3175
        %v3734 = vsub.f32 %v1461, %v3138
        %v3735 = vsub.f32 %v1463, %v3175
        %v3736 = vsub.f32 %v1465, %v3138
        %v3737 = vsub.f32 %v1467, %v3175
        %v3738 = vsub.f32 %v1608, %v3212
        %v3739 = vsub.f32 %v1610, %v3249
        %v3740 = vsub.f32 %v1612, %v3212
        %v3741 = vsub.f32 %v1614, %v3249
        %v3742 = vsub.f32 %v1618, %v3212
        %v3743 = vsub.f32 %v1620, %v3249
        %v3744 = vsub.f32 %v1622, %v3212
        %v3745 = vsub.f32 %v1624, %v3249
        %v3746 = vsub.f32 %v1628, %v3212
        %v3747 = vsub.f32 %v1630, %v3249
        %v3748 = vsub.f32 %v1632, %v3212
        %v3749 = vsub.f32 %v1634, %v3249
        %v3750 = vsub.f32 %v1638, %v3212
        %v3751 = vsub.f32 %v1640, %v3249
        %v3752 = vsub.f32 %v1642, %v3212
        %v3753 = vsub.f32 %v1644, %v3249
        %v3754 = vsub.f32 %v1648, %v3212
        %v3755 = vsub.f32 %v1650, %v3249
        %v3756 = vsub.f32 %v1652, %v3212
        %v3757 = vsub.f32 %v1654, %v3249
        %v3758 = vsub.f32 %v1658, %v3212
        %v3759 = vsub.f32 %v1660, %v3249
        %v3760 = vsub.f32 %v1662, %v3212
        %v3761 = vsub.f32 %v1664, %v3249
        %v3762 = vsub.f32 %v1668, %v3212
        %v3763 = vsub.f32 %v1670, %v3249
        %v3764 = vsub.f32 %v1672, %v3212
        %v3765 = vsub.f32 %v1674, %v3249
        %v3766 = vsub.f32 %v1678, %v3212
        %v3767 = vsub.f32 %v1680, %v3249
        %v3768 = vsub.f32 %v1682, %v3212
        %v3769 = vsub.f32 %v1684, %v3249
        %v3770 = vsub.f32 %v1688, %v3212
        %v3771 = vsub.f32 %v1690, %v3249
        %v3772 = vsub.f32 %v1692, %v3212
        %v3773 = vsub.f32 %v1694, %v3249
        %v3774 = vsub.f32 %v1698, %v3212
        %v3775 = vsub.f32 %v1700, %v3249
        %v3776 = vsub.f32 %v1702, %v3212
        %v3777 = vsub.f32 %v1704, %v3249
        %v3778 = vsub.f32 %v1708, %v3212
        %v3779 = vsub.f32 %v1710, %v3249
        %v3780 = vsub.f32 %v1712, %v3212
        %v3781 = vsub.f32 %v1714, %v3249
        %v3782 = vsub.f32 %v1718, %v3212
        %v3783 = vsub.f32 %v1720, %v3249
        %v3784 = vsub.f32 %v1722, %v3212
        %v3785 = vsub.f32 %v1724, %v3249
        %v3786 = vsub.f32 %v1728, %v3212
        %v3787 = vsub.f32 %v1730, %v3249
        %v3788 = vsub.f32 %v1732, %v3212
        %v3789 = vsub.f32 %v1734, %v3249
        %v3790 = vsub.f32 %v1738, %v3212
        %v3791 = vsub.f32 %v1740, %v3249
        %v3792 = vsub.f32 %v1742, %v3212
        %v3793 = vsub.f32 %v1744, %v3249
        %v3794 = vsub.f32 %v1748, %v3212
        %v3795 = vsub.f32 %v1750, %v3249
        %v3796 = vsub.f32 %v1752, %v3212
        %v3797 = vsub.f32 %v1754, %v3249
        %v3798 = vsub.f32 %v1758, %v3212
        %v3799 = vsub.f32 %v1760, %v3249
        %v3800 = vsub.f32 %v1762, %v3212
        %v3801 = vsub.f32 %v1764, %v3249
        %v3802 = vsub.f32 %v1905, %v3286
        %v3803 = vsub.f32 %v1907, %v3323
        %v3804 = vsub.f32 %v1909, %v3286
        %v3805 = vsub.f32 %v1911, %v3323
        %v3806 = vsub.f32 %v1915, %v3286
        %v3807 = vsub.f32 %v1917, %v3323
        %v3808 = vsub.f32 %v1919, %v3286
        %v3809 = vsub.f32 %v1921, %v3323
        %v3810 = vsub.f32 %v1925, %v3286
        %v3811 = vsub.f32 %v1927, %v3323
        %v3812 = vsub.f32 %v1929, %v3286
        %v3813 = vsub.f32 %v1931, %v3323
        %v3814 = vsub.f32 %v1935, %v3286
        %v3815 = vsub.f32 %v1937, %v3323
        %v3816 = vsub.f32 %v1939, %v3286
        %v3817 = vsub.f32 %v1941, %v3323
        %v3818 = vsub.f32 %v1945, %v3286
        %v3819 = vsub.f32 %v1947, %v3323
        %v3820 = vsub.f32 %v1949, %v3286
        %v3821 = vsub.f32 %v1951, %v3323
        %v3822 = vsub.f32 %v1955, %v3286
        %v3823 = vsub.f32 %v1957, %v3323
        %v3824 = vsub.f32 %v1959, %v3286
        %v3825 = vsub.f32 %v1961, %v3323
        %v3826 = vsub.f32 %v1965, %v3286
        %v3827 = vsub.f32 %v1967, %v3323
        %v3828 = vsub.f32 %v1969, %v3286
        %v3829 = vsub.f32 %v1971, %v3323
        %v3830 = vsub.f32 %v1975, %v3286
        %v3831 = vsub.f32 %v1977, %v3323
        %v3832 = vsub.f32 %v1979, %v3286
        %v3833 = vsub.f32 %v1981, %v3323
        %v3834 = vsub.f32 %v1985, %v3286
        %v3835 = vsub.f32 %v1987, %v3323
        %v3836 = vsub.f32 %v1989, %v3286
        %v3837 = vsub.f32 %v1991, %v3323
        %v3838 = vsub.f32 %v1995, %v3286
        %v3839 = vsub.f32 %v1997, %v3323
        %v3840 = vsub.f32 %v1999, %v3286
        %v3841 = vsub.f32 %v2001, %v3323
        %v3842 = vsub.f32 %v2005, %v3286
        %v3843 = vsub.f32 %v2007, %v3323
        %v3844 = vsub.f32 %v2009, %v3286
        %v3845 = vsub.f32 %v2011, %v3323
        %v3846 = vsub.f32 %v2015, %v3286
        %v3847 = vsub.f32 %v2017, %v3323
        %v3848 = vsub.f32 %v2019, %v3286
        %v3849 = vsub.f32 %v2021, %v3323
        %v3850 = vsub.f32 %v2025, %v3286
        %v3851 = vsub.f32 %v2027, %v3323
        %v3852 = vsub.f32 %v2029, %v3286
        %v3853 = vsub.f32 %v2031, %v3323
        %v3854 = vsub.f32 %v2035, %v3286
        %v3855 = vsub.f32 %v2037, %v3323
        %v3856 = vsub.f32 %v2039, %v3286
        %v3857 = vsub.f32 %v2041, %v3323
        %v3858 = vsub.f32 %v2045, %v3286
        %v3859 = vsub.f32 %v2047, %v3323
        %v3860 = vsub.f32 %v2049, %v3286
        %v3861 = vsub.f32 %v2051, %v3323
        %v3862 = vsub.f32 %v2055, %v3286
        %v3863 = vsub.f32 %v2057, %v3323
        %v3864 = vsub.f32 %v2059, %v3286
        %v3865 = vsub.f32 %v2061, %v3323
        %v3866 = vsub.f32 %v2202, %v3360
        %v3867 = vsub.f32 %v2204, %v3397
        %v3868 = vsub.f32 %v2206, %v3360
        %v3869 = vsub.f32 %v2208, %v3397
        %v3870 = vsub.f32 %v2212, %v3360
        %v3871 = vsub.f32 %v2214, %v3397
        %v3872 = vsub.f32 %v2216, %v3360
        %v3873 = vsub.f32 %v2218, %v3397
        %v3874 = vsub.f32 %v2222, %v3360
        %v3875 = vsub.f32 %v2224, %v3397
        %v3876 = vsub.f32 %v2226, %v3360
        %v3877 = vsub.f32 %v2228, %v3397
        %v3878 = vsub.f32 %v2232, %v3360
        %v3879 = vsub.f32 %v2234, %v3397
        %v3880 = vsub.f32 %v2236, %v3360
        %v3881 = vsub.f32 %v2238, %v3397
        %v3882 = vsub.f32 %v2242, %v3360
        %v3883 = vsub.f32 %v2244, %v3397
        %v3884 = vsub.f32 %v2246, %v3360
        %v3885 = vsub.f32 %v2248, %v3397
        %v3886 = vsub.f32 %v2252, %v3360
        %v3887 = vsub.f32 %v2254, %v3397
        %v3888 = vsub.f32 %v2256, %v3360
        %v3889 = vsub.f32 %v2258, %v3397
        %v3890 = vsub.f32 %v2262, %v3360
        %v3891 = vsub.f32 %v2264, %v3397
        %v3892 = vsub.f32 %v2266, %v3360
        %v3893 = vsub.f32 %v2268, %v3397
        %v3894 = vsub.f32 %v2272, %v3360
        %v3895 = vsub.f32 %v2274, %v3397
        %v3896 = vsub.f32 %v2276, %v3360
        %v3897 = vsub.f32 %v2278, %v3397
        %v3898 = vsub.f32 %v2282, %v3360
        %v3899 = vsub.f32 %v2284, %v3397
        %v3900 = vsub.f32 %v2286, %v3360
        %v3901 = vsub.f32 %v2288, %v3397
        %v3902 = vsub.f32 %v2292, %v3360
        %v3903 = vsub.f32 %v2294, %v3397
        %v3904 = vsub.f32 %v2296, %v3360
        %v3905 = vsub.f32 %v2298, %v3397
        %v3906 = vsub.f32 %v2302, %v3360
        %v3907 = vsub.f32 %v2304, %v3397
        %v3908 = vsub.f32 %v2306, %v3360
        %v3909 = vsub.f32 %v2308, %v3397
        %v3910 = vsub.f32 %v2312, %v3360
        %v3911 = vsub.f32 %v2314, %v3397
        %v3912 = vsub.f32 %v2316, %v3360
        %v3913 = vsub.f32 %v2318, %v3397
        %v3914 = vsub.f32 %v2322, %v3360
        %v3915 = vsub.f32 %v2324, %v3397
        %v3916 = vsub.f32 %v2326, %v3360
        %v3917 = vsub.f32 %v2328, %v3397
        %v3918 = vsub.f32 %v2332, %v3360
        %v3919 = vsub.f32 %v2334, %v3397
        %v3920 = vsub.f32 %v2336, %v3360
        %v3921 = vsub.f32 %v2338, %v3397
        %v3922 = vsub.f32 %v2342, %v3360
        %v3923 = vsub.f32 %v2344, %v3397
        %v3924 = vsub.f32 %v2346, %v3360
        %v3925 = vsub.f32 %v2348, %v3397
        %v3926 = vsub.f32 %v2352, %v3360
        %v3927 = vsub.f32 %v2354, %v3397
        %v3928 = vsub.f32 %v2356, %v3360
        %v3929 = vsub.f32 %v2358, %v3397
        %v3930 = vsub.f32 %v2499, %v3434
        %v3931 = vsub.f32 %v2501, %v3471
        %v3932 = vsub.f32 %v2503, %v3434
        %v3933 = vsub.f32 %v2505, %v3471
        %v3934 = vsub.f32 %v2509, %v3434
        %v3935 = vsub.f32 %v2511, %v3471
        %v3936 = vsub.f32 %v2513, %v3434
        %v3937 = vsub.f32 %v2515, %v3471
        %v3938 = vsub.f32 %v2519, %v3434
        %v3939 = vsub.f32 %v2521, %v3471
        %v3940 = vsub.f32 %v2523, %v3434
        %v3941 = vsub.f32 %v2525, %v3471
        %v3942 = vsub.f32 %v2529, %v3434
        %v3943 = vsub.f32 %v2531, %v3471
        %v3944 = vsub.f32 %v2533, %v3434
        %v3945 = vsub.f32 %v2535, %v3471
        %v3946 = vsub.f32 %v2539, %v3434
        %v3947 = vsub.f32 %v2541, %v3471
        %v3948 = vsub.f32 %v2543, %v3434
        %v3949 = vsub.f32 %v2545, %v3471
        %v3950 = vsub.f32 %v2549, %v3434
        %v3951 = vsub.f32 %v2551, %v3471
        %v3952 = vsub.f32 %v2553, %v3434
        %v3953 = vsub.f32 %v2555, %v3471
        %v3954 = vsub.f32 %v2559, %v3434
        %v3955 = vsub.f32 %v2561, %v3471
        %v3956 = vsub.f32 %v2563, %v3434
        %v3957 = vsub.f32 %v2565, %v3471
        %v3958 = vsub.f32 %v2569, %v3434
        %v3959 = vsub.f32 %v2571, %v3471
        %v3960 = vsub.f32 %v2573, %v3434
        %v3961 = vsub.f32 %v2575, %v3471
        %v3962 = vsub.f32 %v2579, %v3434
        %v3963 = vsub.f32 %v2581, %v3471
        %v3964 = vsub.f32 %v2583, %v3434
        %v3965 = vsub.f32 %v2585, %v3471
        %v3966 = vsub.f32 %v2589, %v3434
        %v3967 = vsub.f32 %v2591, %v3471
        %v3968 = vsub.f32 %v2593, %v3434
        %v3969 = vsub.f32 %v2595, %v3471
        %v3970 = vsub.f32 %v2599, %v3434
        %v3971 = vsub.f32 %v2601, %v3471
        %v3972 = vsub.f32 %v2603, %v3434
        %v3973 = vsub.f32 %v2605, %v3471
        %v3974 = vsub.f32 %v2609, %v3434
        %v3975 = vsub.f32 %v2611, %v3471
        %v3976 = vsub.f32 %v2613, %v3434
        %v3977 = vsub.f32 %v2615, %v3471
        %v3978 = vsub.f32 %v2619, %v3434
        %v3979 = vsub.f32 %v2621, %v3471
        %v3980 = vsub.f32 %v2623, %v3434
        %v3981 = vsub.f32 %v2625, %v3471
        %v3982 = vsub.f32 %v2629, %v3434
        %v3983 = vsub.f32 %v2631, %v3471
        %v3984 = vsub.f32 %v2633, %v3434
        %v3985 = vsub.f32 %v2635, %v3471
        %v3986 = vsub.f32 %v2639, %v3434
        %v3987 = vsub.f32 %v2641, %v3471
        %v3988 = vsub.f32 %v2643, %v3434
        %v3989 = vsub.f32 %v2645, %v3471
        %v3990 = vsub.f32 %v2649, %v3434
        %v3991 = vsub.f32 %v2651, %v3471
        %v3992 = vsub.f32 %v2653, %v3434
        %v3993 = vsub.f32 %v2655, %v3471
        %v3994 = vsub.f32 %v2796, %v3508
        %v3995 = vsub.f32 %v2798, %v3545
        %v3996 = vsub.f32 %v2800, %v3508
        %v3997 = vsub.f32 %v2802, %v3545
        %v3998 = vsub.f32 %v2806, %v3508
        %v3999 = vsub.f32 %v2808, %v3545
        %v4000 = vsub.f32 %v2810, %v3508
        %v4001 = vsub.f32 %v2812, %v3545
        %v4002 = vsub.f32 %v2816, %v3508
        %v4003 = vsub.f32 %v2818, %v3545
        %v4004 = vsub.f32 %v2820, %v3508
        %v4005 = vsub.f32 %v2822, %v3545
        %v4006 = vsub.f32 %v2826, %v3508
        %v4007 = vsub.f32 %v2828, %v3545
        %v4008 = vsub.f32 %v2830, %v3508
        %v4009 = vsub.f32 %v2832, %v3545
        %v4010 = vsub.f32 %v2836, %v3508
        %v4011 = vsub.f32 %v2838, %v3545
        %v4012 = vsub.f32 %v2840, %v3508
        %v4013 = vsub.f32 %v2842, %v3545
        %v4014 = vsub.f32 %v2846, %v3508
        %v4015 = vsub.f32 %v2848, %v3545
        %v4016 = vsub.f32 %v2850, %v3508
        %v4017 = vsub.f32 %v2852, %v3545
        %v4018 = vsub.f32 %v2856, %v3508
        %v4019 = vsub.f32 %v2858, %v3545
        %v4020 = vsub.f32 %v2860, %v3508
        %v4021 = vsub.f32 %v2862, %v3545
        %v4022 = vsub.f32 %v2866, %v3508
        %v4023 = vsub.f32 %v2868, %v3545
        %v4024 = vsub.f32 %v2870, %v3508
        %v4025 = vsub.f32 %v2872, %v3545
        %v4026 = vsub.f32 %v2876, %v3508
        %v4027 = vsub.f32 %v2878, %v3545
        %v4028 = vsub.f32 %v2880, %v3508
        %v4029 = vsub.f32 %v2882, %v3545
        %v4030 = vsub.f32 %v2886, %v3508
        %v4031 = vsub.f32 %v2888, %v3545
        %v4032 = vsub.f32 %v2890, %v3508
        %v4033 = vsub.f32 %v2892, %v3545
        %v4034 = vsub.f32 %v2896, %v3508
        %v4035 = vsub.f32 %v2898, %v3545
        %v4036 = vsub.f32 %v2900, %v3508
        %v4037 = vsub.f32 %v2902, %v3545
        %v4038 = vsub.f32 %v2906, %v3508
        %v4039 = vsub.f32 %v2908, %v3545
        %v4040 = vsub.f32 %v2910, %v3508
        %v4041 = vsub.f32 %v2912, %v3545
        %v4042 = vsub.f32 %v2916, %v3508
        %v4043 = vsub.f32 %v2918, %v3545
        %v4044 = vsub.f32 %v2920, %v3508
        %v4045 = vsub.f32 %v2922, %v3545
        %v4046 = vsub.f32 %v2926, %v3508
        %v4047 = vsub.f32 %v2928, %v3545
        %v4048 = vsub.f32 %v2930, %v3508
        %v4049 = vsub.f32 %v2932, %v3545
        %v4050 = vsub.f32 %v2936, %v3508
        %v4051 = vsub.f32 %v2938, %v3545
        %v4052 = vsub.f32 %v2940, %v3508
        %v4053 = vsub.f32 %v2942, %v3545
        %v4054 = vsub.f32 %v2946, %v3508
        %v4055 = vsub.f32 %v2948, %v3545
        %v4056 = vsub.f32 %v2950, %v3508
        %v4057 = vsub.f32 %v2952, %v3545
        %v4058 = vmul.f32 %v3546, 1.442695
        %v4059 = vpow.pop %v4058
        %v4060 = vmul.f32 %v3547, 1.442695
        %v4061 = vpow.pop %v4060
        %v4062 = vmul.f32 %v3548, 1.442695
        %v4063 = vpow.pop %v4062
        %v4064 = vmul.f32 %v3549, 1.442695
        %v4065 = vpow.pop %v4064
        %v4066 = vmul.f32 %v3550, 1.442695
        %v4067 = vpow.pop %v4066
        %v4068 = vmul.f32 %v3551, 1.442695
        %v4069 = vpow.pop %v4068
        %v4070 = vmul.f32 %v3552, 1.442695
        %v4071 = vpow.pop %v4070
        %v4072 = vmul.f32 %v3553, 1.442695
        %v4073 = vpow.pop %v4072
        %v4074 = vmul.f32 %v3554, 1.442695
        %v4075 = vpow.pop %v4074
        %v4076 = vmul.f32 %v3555, 1.442695
        %v4077 = vpow.pop %v4076
        %v4078 = vmul.f32 %v3556, 1.442695
        %v4079 = vpow.pop %v4078
        %v4080 = vmul.f32 %v3557, 1.442695
        %v4081 = vpow.pop %v4080
        %v4082 = vmul.f32 %v3558, 1.442695
        %v4083 = vpow.pop %v4082
        %v4084 = vmul.f32 %v3559, 1.442695
        %v4085 = vpow.pop %v4084
        %v4086 = vmul.f32 %v3560, 1.442695
        %v4087 = vpow.pop %v4086
        %v4088 = vmul.f32 %v3561, 1.442695
        %v4089 = vpow.pop %v4088
        %v4090 = vmul.f32 %v3562, 1.442695
        %v4091 = vpow.pop %v4090
        %v4092 = vmul.f32 %v3563, 1.442695
        %v4093 = vpow.pop %v4092
        %v4094 = vmul.f32 %v3564, 1.442695
        %v4095 = vpow.pop %v4094
        %v4096 = vmul.f32 %v3565, 1.442695
        %v4097 = vpow.pop %v4096
        %v4098 = vmul.f32 %v3566, 1.442695
        %v4099 = vpow.pop %v4098
        %v4100 = vmul.f32 %v3567, 1.442695
        %v4101 = vpow.pop %v4100
        %v4102 = vmul.f32 %v3568, 1.442695
        %v4103 = vpow.pop %v4102
        %v4104 = vmul.f32 %v3569, 1.442695
        %v4105 = vpow.pop %v4104
        %v4106 = vmul.f32 %v3570, 1.442695
        %v4107 = vpow.pop %v4106
        %v4108 = vmul.f32 %v3571, 1.442695
        %v4109 = vpow.pop %v4108
        %v4110 = vmul.f32 %v3572, 1.442695
        %v4111 = vpow.pop %v4110
        %v4112 = vmul.f32 %v3573, 1.442695
        %v4113 = vpow.pop %v4112
        %v4114 = vmul.f32 %v3574, 1.442695
        %v4115 = vpow.pop %v4114
        %v4116 = vmul.f32 %v3575, 1.442695
        %v4117 = vpow.pop %v4116
        %v4118 = vmul.f32 %v3576, 1.442695
        %v4119 = vpow.pop %v4118
        %v4120 = vmul.f32 %v3577, 1.442695
        %v4121 = vpow.pop %v4120
        %v4122 = vmul.f32 %v3578, 1.442695
        %v4123 = vpow.pop %v4122
        %v4124 = vmul.f32 %v3579, 1.442695
        %v4125 = vpow.pop %v4124
        %v4126 = vmul.f32 %v3580, 1.442695
        %v4127 = vpow.pop %v4126
        %v4128 = vmul.f32 %v3581, 1.442695
        %v4129 = vpow.pop %v4128
        %v4130 = vmul.f32 %v3582, 1.442695
        %v4131 = vpow.pop %v4130
        %v4132 = vmul.f32 %v3583, 1.442695
        %v4133 = vpow.pop %v4132
        %v4134 = vmul.f32 %v3584, 1.442695
        %v4135 = vpow.pop %v4134
        %v4136 = vmul.f32 %v3585, 1.442695
        %v4137 = vpow.pop %v4136
        %v4138 = vmul.f32 %v3586, 1.442695
        %v4139 = vpow.pop %v4138
        %v4140 = vmul.f32 %v3587, 1.442695
        %v4141 = vpow.pop %v4140
        %v4142 = vmul.f32 %v3588, 1.442695
        %v4143 = vpow.pop %v4142
        %v4144 = vmul.f32 %v3589, 1.442695
        %v4145 = vpow.pop %v4144
        %v4146 = vmul.f32 %v3590, 1.442695
        %v4147 = vpow.pop %v4146
        %v4148 = vmul.f32 %v3591, 1.442695
        %v4149 = vpow.pop %v4148
        %v4150 = vmul.f32 %v3592, 1.442695
        %v4151 = vpow.pop %v4150
        %v4152 = vmul.f32 %v3593, 1.442695
        %v4153 = vpow.pop %v4152
        %v4154 = vmul.f32 %v3594, 1.442695
        %v4155 = vpow.pop %v4154
        %v4156 = vmul.f32 %v3595, 1.442695
        %v4157 = vpow.pop %v4156
        %v4158 = vmul.f32 %v3596, 1.442695
        %v4159 = vpow.pop %v4158
        %v4160 = vmul.f32 %v3597, 1.442695
        %v4161 = vpow.pop %v4160
        %v4162 = vmul.f32 %v3598, 1.442695
        %v4163 = vpow.pop %v4162
        %v4164 = vmul.f32 %v3599, 1.442695
        %v4165 = vpow.pop %v4164
        %v4166 = vmul.f32 %v3600, 1.442695
        %v4167 = vpow.pop %v4166
        %v4168 = vmul.f32 %v3601, 1.442695
        %v4169 = vpow.pop %v4168
        %v4170 = vmul.f32 %v3602, 1.442695
        %v4171 = vpow.pop %v4170
        %v4172 = vmul.f32 %v3603, 1.442695
        %v4173 = vpow.pop %v4172
        %v4174 = vmul.f32 %v3604, 1.442695
        %v4175 = vpow.pop %v4174
        %v4176 = vmul.f32 %v3605, 1.442695
        %v4177 = vpow.pop %v4176
        %v4178 = vmul.f32 %v3606, 1.442695
        %v4179 = vpow.pop %v4178
        %v4180 = vmul.f32 %v3607, 1.442695
        %v4181 = vpow.pop %v4180
        %v4182 = vmul.f32 %v3608, 1.442695
        %v4183 = vpow.pop %v4182
        %v4184 = vmul.f32 %v3609, 1.442695
        %v4185 = vpow.pop %v4184
        %v4186 = vmul.f32 %v3610, 1.442695
        %v4187 = vpow.pop %v4186
        %v4188 = vmul.f32 %v3611, 1.442695
        %v4189 = vpow.pop %v4188
        %v4190 = vmul.f32 %v3612, 1.442695
        %v4191 = vpow.pop %v4190
        %v4192 = vmul.f32 %v3613, 1.442695
        %v4193 = vpow.pop %v4192
        %v4194 = vmul.f32 %v3614, 1.442695
        %v4195 = vpow.pop %v4194
        %v4196 = vmul.f32 %v3615, 1.442695
        %v4197 = vpow.pop %v4196
        %v4198 = vmul.f32 %v3616, 1.442695
        %v4199 = vpow.pop %v4198
        %v4200 = vmul.f32 %v3617, 1.442695
        %v4201 = vpow.pop %v4200
        %v4202 = vmul.f32 %v3618, 1.442695
        %v4203 = vpow.pop %v4202
        %v4204 = vmul.f32 %v3619, 1.442695
        %v4205 = vpow.pop %v4204
        %v4206 = vmul.f32 %v3620, 1.442695
        %v4207 = vpow.pop %v4206
        %v4208 = vmul.f32 %v3621, 1.442695
        %v4209 = vpow.pop %v4208
        %v4210 = vmul.f32 %v3622, 1.442695
        %v4211 = vpow.pop %v4210
        %v4212 = vmul.f32 %v3623, 1.442695
        %v4213 = vpow.pop %v4212
        %v4214 = vmul.f32 %v3624, 1.442695
        %v4215 = vpow.pop %v4214
        %v4216 = vmul.f32 %v3625, 1.442695
        %v4217 = vpow.pop %v4216
        %v4218 = vmul.f32 %v3626, 1.442695
        %v4219 = vpow.pop %v4218
        %v4220 = vmul.f32 %v3627, 1.442695
        %v4221 = vpow.pop %v4220
        %v4222 = vmul.f32 %v3628, 1.442695
        %v4223 = vpow.pop %v4222
        %v4224 = vmul.f32 %v3629, 1.442695
        %v4225 = vpow.pop %v4224
        %v4226 = vmul.f32 %v3630, 1.442695
        %v4227 = vpow.pop %v4226
        %v4228 = vmul.f32 %v3631, 1.442695
        %v4229 = vpow.pop %v4228
        %v4230 = vmul.f32 %v3632, 1.442695
        %v4231 = vpow.pop %v4230
        %v4232 = vmul.f32 %v3633, 1.442695
        %v4233 = vpow.pop %v4232
        %v4234 = vmul.f32 %v3634, 1.442695
        %v4235 = vpow.pop %v4234
        %v4236 = vmul.f32 %v3635, 1.442695
        %v4237 = vpow.pop %v4236
        %v4238 = vmul.f32 %v3636, 1.442695
        %v4239 = vpow.pop %v4238
        %v4240 = vmul.f32 %v3637, 1.442695
        %v4241 = vpow.pop %v4240
        %v4242 = vmul.f32 %v3638, 1.442695
        %v4243 = vpow.pop %v4242
        %v4244 = vmul.f32 %v3639, 1.442695
        %v4245 = vpow.pop %v4244
        %v4246 = vmul.f32 %v3640, 1.442695
        %v4247 = vpow.pop %v4246
        %v4248 = vmul.f32 %v3641, 1.442695
        %v4249 = vpow.pop %v4248
        %v4250 = vmul.f32 %v3642, 1.442695
        %v4251 = vpow.pop %v4250
        %v4252 = vmul.f32 %v3643, 1.442695
        %v4253 = vpow.pop %v4252
        %v4254 = vmul.f32 %v3644, 1.442695
        %v4255 = vpow.pop %v4254
        %v4256 = vmul.f32 %v3645, 1.442695
        %v4257 = vpow.pop %v4256
        %v4258 = vmul.f32 %v3646, 1.442695
        %v4259 = vpow.pop %v4258
        %v4260 = vmul.f32 %v3647, 1.442695
        %v4261 = vpow.pop %v4260
        %v4262 = vmul.f32 %v3648, 1.442695
        %v4263 = vpow.pop %v4262
        %v4264 = vmul.f32 %v3649, 1.442695
        %v4265 = vpow.pop %v4264
        %v4266 = vmul.f32 %v3650, 1.442695
        %v4267 = vpow.pop %v4266
        %v4268 = vmul.f32 %v3651, 1.442695
        %v4269 = vpow.pop %v4268
        %v4270 = vmul.f32 %v3652, 1.442695
        %v4271 = vpow.pop %v4270
        %v4272 = vmul.f32 %v3653, 1.442695
        %v4273 = vpow.pop %v4272
        %v4274 = vmul.f32 %v3654, 1.442695
        %v4275 = vpow.pop %v4274
        %v4276 = vmul.f32 %v3655, 1.442695
        %v4277 = vpow.pop %v4276
        %v4278 = vmul.f32 %v3656, 1.442695
        %v4279 = vpow.pop %v4278
        %v4280 = vmul.f32 %v3657, 1.442695
        %v4281 = vpow.pop %v4280
        %v4282 = vmul.f32 %v3658, 1.442695
        %v4283 = vpow.pop %v4282
        %v4284 = vmul.f32 %v3659, 1.442695
        %v4285 = vpow.pop %v4284
        %v4286 = vmul.f32 %v3660, 1.442695
        %v4287 = vpow.pop %v4286
        %v4288 = vmul.f32 %v3661, 1.442695
        %v4289 = vpow.pop %v4288
        %v4290 = vmul.f32 %v3662, 1.442695
        %v4291 = vpow.pop %v4290
        %v4292 = vmul.f32 %v3663, 1.442695
        %v4293 = vpow.pop %v4292
        %v4294 = vmul.f32 %v3664, 1.442695
        %v4295 = vpow.pop %v4294
        %v4296 = vmul.f32 %v3665, 1.442695
        %v4297 = vpow.pop %v4296
        %v4298 = vmul.f32 %v3666, 1.442695
        %v4299 = vpow.pop %v4298
        %v4300 = vmul.f32 %v3667, 1.442695
        %v4301 = vpow.pop %v4300
        %v4302 = vmul.f32 %v3668, 1.442695
        %v4303 = vpow.pop %v4302
        %v4304 = vmul.f32 %v3669, 1.442695
        %v4305 = vpow.pop %v4304
        %v4306 = vmul.f32 %v3670, 1.442695
        %v4307 = vpow.pop %v4306
        %v4308 = vmul.f32 %v3671, 1.442695
        %v4309 = vpow.pop %v4308
        %v4310 = vmul.f32 %v3672, 1.442695
        %v4311 = vpow.pop %v4310
        %v4312 = vmul.f32 %v3673, 1.442695
        %v4313 = vpow.pop %v4312
        %v4314 = vmul.f32 %v3674, 1.442695
        %v4315 = vpow.pop %v4314
        %v4316 = vmul.f32 %v3675, 1.442695
        %v4317 = vpow.pop %v4316
        %v4318 = vmul.f32 %v3676, 1.442695
        %v4319 = vpow.pop %v4318
        %v4320 = vmul.f32 %v3677, 1.442695
        %v4321 = vpow.pop %v4320
        %v4322 = vmul.f32 %v3678, 1.442695
        %v4323 = vpow.pop %v4322
        %v4324 = vmul.f32 %v3679, 1.442695
        %v4325 = vpow.pop %v4324
        %v4326 = vmul.f32 %v3680, 1.442695
        %v4327 = vpow.pop %v4326
        %v4328 = vmul.f32 %v3681, 1.442695
        %v4329 = vpow.pop %v4328
        %v4330 = vmul.f32 %v3682, 1.442695
        %v4331 = vpow.pop %v4330
        %v4332 = vmul.f32 %v3683, 1.442695
        %v4333 = vpow.pop %v4332
        %v4334 = vmul.f32 %v3684, 1.442695
        %v4335 = vpow.pop %v4334
        %v4336 = vmul.f32 %v3685, 1.442695
        %v4337 = vpow.pop %v4336
        %v4338 = vmul.f32 %v3686, 1.442695
        %v4339 = vpow.pop %v4338
        %v4340 = vmul.f32 %v3687, 1.442695
        %v4341 = vpow.pop %v4340
        %v4342 = vmul.f32 %v3688, 1.442695
        %v4343 = vpow.pop %v4342
        %v4344 = vmul.f32 %v3689, 1.442695
        %v4345 = vpow.pop %v4344
        %v4346 = vmul.f32 %v3690, 1.442695
        %v4347 = vpow.pop %v4346
        %v4348 = vmul.f32 %v3691, 1.442695
        %v4349 = vpow.pop %v4348
        %v4350 = vmul.f32 %v3692, 1.442695
        %v4351 = vpow.pop %v4350
        %v4352 = vmul.f32 %v3693, 1.442695
        %v4353 = vpow.pop %v4352
        %v4354 = vmul.f32 %v3694, 1.442695
        %v4355 = vpow.pop %v4354
        %v4356 = vmul.f32 %v3695, 1.442695
        %v4357 = vpow.pop %v4356
        %v4358 = vmul.f32 %v3696, 1.442695
        %v4359 = vpow.pop %v4358
        %v4360 = vmul.f32 %v3697, 1.442695
        %v4361 = vpow.pop %v4360
        %v4362 = vmul.f32 %v3698, 1.442695
        %v4363 = vpow.pop %v4362
        %v4364 = vmul.f32 %v3699, 1.442695
        %v4365 = vpow.pop %v4364
        %v4366 = vmul.f32 %v3700, 1.442695
        %v4367 = vpow.pop %v4366
        %v4368 = vmul.f32 %v3701, 1.442695
        %v4369 = vpow.pop %v4368
        %v4370 = vmul.f32 %v3702, 1.442695
        %v4371 = vpow.pop %v4370
        %v4372 = vmul.f32 %v3703, 1.442695
        %v4373 = vpow.pop %v4372
        %v4374 = vmul.f32 %v3704, 1.442695
        %v4375 = vpow.pop %v4374
        %v4376 = vmul.f32 %v3705, 1.442695
        %v4377 = vpow.pop %v4376
        %v4378 = vmul.f32 %v3706, 1.442695
        %v4379 = vpow.pop %v4378
        %v4380 = vmul.f32 %v3707, 1.442695
        %v4381 = vpow.pop %v4380
        %v4382 = vmul.f32 %v3708, 1.442695
        %v4383 = vpow.pop %v4382
        %v4384 = vmul.f32 %v3709, 1.442695
        %v4385 = vpow.pop %v4384
        %v4386 = vmul.f32 %v3710, 1.442695
        %v4387 = vpow.pop %v4386
        %v4388 = vmul.f32 %v3711, 1.442695
        %v4389 = vpow.pop %v4388
        %v4390 = vmul.f32 %v3712, 1.442695
        %v4391 = vpow.pop %v4390
        %v4392 = vmul.f32 %v3713, 1.442695
        %v4393 = vpow.pop %v4392
        %v4394 = vmul.f32 %v3714, 1.442695
        %v4395 = vpow.pop %v4394
        %v4396 = vmul.f32 %v3715, 1.442695
        %v4397 = vpow.pop %v4396
        %v4398 = vmul.f32 %v3716, 1.442695
        %v4399 = vpow.pop %v4398
        %v4400 = vmul.f32 %v3717, 1.442695
        %v4401 = vpow.pop %v4400
        %v4402 = vmul.f32 %v3718, 1.442695
        %v4403 = vpow.pop %v4402
        %v4404 = vmul.f32 %v3719, 1.442695
        %v4405 = vpow.pop %v4404
        %v4406 = vmul.f32 %v3720, 1.442695
        %v4407 = vpow.pop %v4406
        %v4408 = vmul.f32 %v3721, 1.442695
        %v4409 = vpow.pop %v4408
        %v4410 = vmul.f32 %v3722, 1.442695
        %v4411 = vpow.pop %v4410
        %v4412 = vmul.f32 %v3723, 1.442695
        %v4413 = vpow.pop %v4412
        %v4414 = vmul.f32 %v3724, 1.442695
        %v4415 = vpow.pop %v4414
        %v4416 = vmul.f32 %v3725, 1.442695
        %v4417 = vpow.pop %v4416
        %v4418 = vmul.f32 %v3726, 1.442695
        %v4419 = vpow.pop %v4418
        %v4420 = vmul.f32 %v3727, 1.442695
        %v4421 = vpow.pop %v4420
        %v4422 = vmul.f32 %v3728, 1.442695
        %v4423 = vpow.pop %v4422
        %v4424 = vmul.f32 %v3729, 1.442695
        %v4425 = vpow.pop %v4424
        %v4426 = vmul.f32 %v3730, 1.442695
        %v4427 = vpow.pop %v4426
        %v4428 = vmul.f32 %v3731, 1.442695
        %v4429 = vpow.pop %v4428
        %v4430 = vmul.f32 %v3732, 1.442695
        %v4431 = vpow.pop %v4430
        %v4432 = vmul.f32 %v3733, 1.442695
        %v4433 = vpow.pop %v4432
        %v4434 = vmul.f32 %v3734, 1.442695
        %v4435 = vpow.pop %v4434
        %v4436 = vmul.f32 %v3735, 1.442695
        %v4437 = vpow.pop %v4436
        %v4438 = vmul.f32 %v3736, 1.442695
        %v4439 = vpow.pop %v4438
        %v4440 = vmul.f32 %v3737, 1.442695
        %v4441 = vpow.pop %v4440
        %v4442 = vmul.f32 %v3738, 1.442695
        %v4443 = vpow.pop %v4442
        %v4444 = vmul.f32 %v3739, 1.442695
        %v4445 = vpow.pop %v4444
        %v4446 = vmul.f32 %v3740, 1.442695
        %v4447 = vpow.pop %v4446
        %v4448 = vmul.f32 %v3741, 1.442695
        %v4449 = vpow.pop %v4448
        %v4450 = vmul.f32 %v3742, 1.442695
        %v4451 = vpow.pop %v4450
        %v4452 = vmul.f32 %v3743, 1.442695
        %v4453 = vpow.pop %v4452
        %v4454 = vmul.f32 %v3744, 1.442695
        %v4455 = vpow.pop %v4454
        %v4456 = vmul.f32 %v3745, 1.442695
        %v4457 = vpow.pop %v4456
        %v4458 = vmul.f32 %v3746, 1.442695
        %v4459 = vpow.pop %v4458
        %v4460 = vmul.f32 %v3747, 1.442695
        %v4461 = vpow.pop %v4460
        %v4462 = vmul.f32 %v3748, 1.442695
        %v4463 = vpow.pop %v4462
        %v4464 = vmul.f32 %v3749, 1.442695
        %v4465 = vpow.pop %v4464
        %v4466 = vmul.f32 %v3750, 1.442695
        %v4467 = vpow.pop %v4466
        %v4468 = vmul.f32 %v3751, 1.442695
        %v4469 = vpow.pop %v4468
        %v4470 = vmul.f32 %v3752, 1.442695
        %v4471 = vpow.pop %v4470
        %v4472 = vmul.f32 %v3753, 1.442695
        %v4473 = vpow.pop %v4472
        %v4474 = vmul.f32 %v3754, 1.442695
        %v4475 = vpow.pop %v4474
        %v4476 = vmul.f32 %v3755, 1.442695
        %v4477 = vpow.pop %v4476
        %v4478 = vmul.f32 %v3756, 1.442695
        %v4479 = vpow.pop %v4478
        %v4480 = vmul.f32 %v3757, 1.442695
        %v4481 = vpow.pop %v4480
        %v4482 = vmul.f32 %v3758, 1.442695
        %v4483 = vpow.pop %v4482
        %v4484 = vmul.f32 %v3759, 1.442695
        %v4485 = vpow.pop %v4484
        %v4486 = vmul.f32 %v3760, 1.442695
        %v4487 = vpow.pop %v4486
        %v4488 = vmul.f32 %v3761, 1.442695
        %v4489 = vpow.pop %v4488
        %v4490 = vmul.f32 %v3762, 1.442695
        %v4491 = vpow.pop %v4490
        %v4492 = vmul.f32 %v3763, 1.442695
        %v4493 = vpow.pop %v4492
        %v4494 = vmul.f32 %v3764, 1.442695
        %v4495 = vpow.pop %v4494
        %v4496 = vmul.f32 %v3765, 1.442695
        %v4497 = vpow.pop %v4496
        %v4498 = vmul.f32 %v3766, 1.442695
        %v4499 = vpow.pop %v4498
        %v4500 = vmul.f32 %v3767, 1.442695
        %v4501 = vpow.pop %v4500
        %v4502 = vmul.f32 %v3768, 1.442695
        %v4503 = vpow.pop %v4502
        %v4504 = vmul.f32 %v3769, 1.442695
        %v4505 = vpow.pop %v4504
        %v4506 = vmul.f32 %v3770, 1.442695
        %v4507 = vpow.pop %v4506
        %v4508 = vmul.f32 %v3771, 1.442695
        %v4509 = vpow.pop %v4508
        %v4510 = vmul.f32 %v3772, 1.442695
        %v4511 = vpow.pop %v4510
        %v4512 = vmul.f32 %v3773, 1.442695
        %v4513 = vpow.pop %v4512
        %v4514 = vmul.f32 %v3774, 1.442695
        %v4515 = vpow.pop %v4514
        %v4516 = vmul.f32 %v3775, 1.442695
        %v4517 = vpow.pop %v4516
        %v4518 = vmul.f32 %v3776, 1.442695
        %v4519 = vpow.pop %v4518
        %v4520 = vmul.f32 %v3777, 1.442695
        %v4521 = vpow.pop %v4520
        %v4522 = vmul.f32 %v3778, 1.442695
        %v4523 = vpow.pop %v4522
        %v4524 = vmul.f32 %v3779, 1.442695
        %v4525 = vpow.pop %v4524
        %v4526 = vmul.f32 %v3780, 1.442695
        %v4527 = vpow.pop %v4526
        %v4528 = vmul.f32 %v3781, 1.442695
        %v4529 = vpow.pop %v4528
        %v4530 = vmul.f32 %v3782, 1.442695
        %v4531 = vpow.pop %v4530
        %v4532 = vmul.f32 %v3783, 1.442695
        %v4533 = vpow.pop %v4532
        %v4534 = vmul.f32 %v3784, 1.442695
        %v4535 = vpow.pop %v4534
        %v4536 = vmul.f32 %v3785, 1.442695
        %v4537 = vpow.pop %v4536
        %v4538 = vmul.f32 %v3786, 1.442695
        %v4539 = vpow.pop %v4538
        %v4540 = vmul.f32 %v3787, 1.442695
        %v4541 = vpow.pop %v4540
        %v4542 = vmul.f32 %v3788, 1.442695
        %v4543 = vpow.pop %v4542
        %v4544 = vmul.f32 %v3789, 1.442695
        %v4545 = vpow.pop %v4544
        %v4546 = vmul.f32 %v3790, 1.442695
        %v4547 = vpow.pop %v4546
        %v4548 = vmul.f32 %v3791, 1.442695
        %v4549 = vpow.pop %v4548
        %v4550 = vmul.f32 %v3792, 1.442695
        %v4551 = vpow.pop %v4550
        %v4552 = vmul.f32 %v3793, 1.442695
        %v4553 = vpow.pop %v4552
        %v4554 = vmul.f32 %v3794, 1.442695
        %v4555 = vpow.pop %v4554
        %v4556 = vmul.f32 %v3795, 1.442695
        %v4557 = vpow.pop %v4556
        %v4558 = vmul.f32 %v3796, 1.442695
        %v4559 = vpow.pop %v4558
        %v4560 = vmul.f32 %v3797, 1.442695
        %v4561 = vpow.pop %v4560
        %v4562 = vmul.f32 %v3798, 1.442695
        %v4563 = vpow.pop %v4562
        %v4564 = vmul.f32 %v3799, 1.442695
        %v4565 = vpow.pop %v4564
        %v4566 = vmul.f32 %v3800, 1.442695
        %v4567 = vpow.pop %v4566
        %v4568 = vmul.f32 %v3801, 1.442695
        %v4569 = vpow.pop %v4568
        %v4570 = vmul.f32 %v3802, 1.442695
        %v4571 = vpow.pop %v4570
        %v4572 = vmul.f32 %v3803, 1.442695
        %v4573 = vpow.pop %v4572
        %v4574 = vmul.f32 %v3804, 1.442695
        %v4575 = vpow.pop %v4574
        %v4576 = vmul.f32 %v3805, 1.442695
        %v4577 = vpow.pop %v4576
        %v4578 = vmul.f32 %v3806, 1.442695
        %v4579 = vpow.pop %v4578
        %v4580 = vmul.f32 %v3807, 1.442695
        %v4581 = vpow.pop %v4580
        %v4582 = vmul.f32 %v3808, 1.442695
        %v4583 = vpow.pop %v4582
        %v4584 = vmul.f32 %v3809, 1.442695
        %v4585 = vpow.pop %v4584
        %v4586 = vmul.f32 %v3810, 1.442695
        %v4587 = vpow.pop %v4586
        %v4588 = vmul.f32 %v3811, 1.442695
        %v4589 = vpow.pop %v4588
        %v4590 = vmul.f32 %v3812, 1.442695
        %v4591 = vpow.pop %v4590
        %v4592 = vmul.f32 %v3813, 1.442695
        %v4593 = vpow.pop %v4592
        %v4594 = vmul.f32 %v3814, 1.442695
        %v4595 = vpow.pop %v4594
        %v4596 = vmul.f32 %v3815, 1.442695
        %v4597 = vpow.pop %v4596
        %v4598 = vmul.f32 %v3816, 1.442695
        %v4599 = vpow.pop %v4598
        %v4600 = vmul.f32 %v3817, 1.442695
        %v4601 = vpow.pop %v4600
        %v4602 = vmul.f32 %v3818, 1.442695
        %v4603 = vpow.pop %v4602
        %v4604 = vmul.f32 %v3819, 1.442695
        %v4605 = vpow.pop %v4604
        %v4606 = vmul.f32 %v3820, 1.442695
        %v4607 = vpow.pop %v4606
        %v4608 = vmul.f32 %v3821, 1.442695
        %v4609 = vpow.pop %v4608
        %v4610 = vmul.f32 %v3822, 1.442695
        %v4611 = vpow.pop %v4610
        %v4612 = vmul.f32 %v3823, 1.442695
        %v4613 = vpow.pop %v4612
        %v4614 = vmul.f32 %v3824, 1.442695
        %v4615 = vpow.pop %v4614
        %v4616 = vmul.f32 %v3825, 1.442695
        %v4617 = vpow.pop %v4616
        %v4618 = vmul.f32 %v3826, 1.442695
        %v4619 = vpow.pop %v4618
        %v4620 = vmul.f32 %v3827, 1.442695
        %v4621 = vpow.pop %v4620
        %v4622 = vmul.f32 %v3828, 1.442695
        %v4623 = vpow.pop %v4622
        %v4624 = vmul.f32 %v3829, 1.442695
        %v4625 = vpow.pop %v4624
        %v4626 = vmul.f32 %v3830, 1.442695
        %v4627 = vpow.pop %v4626
        %v4628 = vmul.f32 %v3831, 1.442695
        %v4629 = vpow.pop %v4628
        %v4630 = vmul.f32 %v3832, 1.442695
        %v4631 = vpow.pop %v4630
        %v4632 = vmul.f32 %v3833, 1.442695
        %v4633 = vpow.pop %v4632
        %v4634 = vmul.f32 %v3834, 1.442695
        %v4635 = vpow.pop %v4634
        %v4636 = vmul.f32 %v3835, 1.442695
        %v4637 = vpow.pop %v4636
        %v4638 = vmul.f32 %v3836, 1.442695
        %v4639 = vpow.pop %v4638
        %v4640 = vmul.f32 %v3837, 1.442695
        %v4641 = vpow.pop %v4640
        %v4642 = vmul.f32 %v3838, 1.442695
        %v4643 = vpow.pop %v4642
        %v4644 = vmul.f32 %v3839, 1.442695
        %v4645 = vpow.pop %v4644
        %v4646 = vmul.f32 %v3840, 1.442695
        %v4647 = vpow.pop %v4646
        %v4648 = vmul.f32 %v3841, 1.442695
        %v4649 = vpow.pop %v4648
        %v4650 = vmul.f32 %v3842, 1.442695
        %v4651 = vpow.pop %v4650
        %v4652 = vmul.f32 %v3843, 1.442695
        %v4653 = vpow.pop %v4652
        %v4654 = vmul.f32 %v3844, 1.442695
        %v4655 = vpow.pop %v4654
        %v4656 = vmul.f32 %v3845, 1.442695
        %v4657 = vpow.pop %v4656
        %v4658 = vmul.f32 %v3846, 1.442695
        %v4659 = vpow.pop %v4658
        %v4660 = vmul.f32 %v3847, 1.442695
        %v4661 = vpow.pop %v4660
        %v4662 = vmul.f32 %v3848, 1.442695
        %v4663 = vpow.pop %v4662
        %v4664 = vmul.f32 %v3849, 1.442695
        %v4665 = vpow.pop %v4664
        %v4666 = vmul.f32 %v3850, 1.442695
        %v4667 = vpow.pop %v4666
        %v4668 = vmul.f32 %v3851, 1.442695
        %v4669 = vpow.pop %v4668
        %v4670 = vmul.f32 %v3852, 1.442695
        %v4671 = vpow.pop %v4670
        %v4672 = vmul.f32 %v3853, 1.442695
        %v4673 = vpow.pop %v4672
        %v4674 = vmul.f32 %v3854, 1.442695
        %v4675 = vpow.pop %v4674
        %v4676 = vmul.f32 %v3855, 1.442695
        %v4677 = vpow.pop %v4676
        %v4678 = vmul.f32 %v3856, 1.442695
        %v4679 = vpow.pop %v4678
        %v4680 = vmul.f32 %v3857, 1.442695
        %v4681 = vpow.pop %v4680
        %v4682 = vmul.f32 %v3858, 1.442695
        %v4683 = vpow.pop %v4682
        %v4684 = vmul.f32 %v3859, 1.442695
        %v4685 = vpow.pop %v4684
        %v4686 = vmul.f32 %v3860, 1.442695
        %v4687 = vpow.pop %v4686
        %v4688 = vmul.f32 %v3861, 1.442695
        %v4689 = vpow.pop %v4688
        %v4690 = vmul.f32 %v3862, 1.442695
        %v4691 = vpow.pop %v4690
        %v4692 = vmul.f32 %v3863, 1.442695
        %v4693 = vpow.pop %v4692
        %v4694 = vmul.f32 %v3864, 1.442695
        %v4695 = vpow.pop %v4694
        %v4696 = vmul.f32 %v3865, 1.442695
        %v4697 = vpow.pop %v4696
        %v4698 = vmul.f32 %v3866, 1.442695
        %v4699 = vpow.pop %v4698
        %v4700 = vmul.f32 %v3867, 1.442695
        %v4701 = vpow.pop %v4700
        %v4702 = vmul.f32 %v3868, 1.442695
        %v4703 = vpow.pop %v4702
        %v4704 = vmul.f32 %v3869, 1.442695
        %v4705 = vpow.pop %v4704
        %v4706 = vmul.f32 %v3870, 1.442695
        %v4707 = vpow.pop %v4706
        %v4708 = vmul.f32 %v3871, 1.442695
        %v4709 = vpow.pop %v4708
        %v4710 = vmul.f32 %v3872, 1.442695
        %v4711 = vpow.pop %v4710
        %v4712 = vmul.f32 %v3873, 1.442695
        %v4713 = vpow.pop %v4712
        %v4714 = vmul.f32 %v3874, 1.442695
        %v4715 = vpow.pop %v4714
        %v4716 = vmul.f32 %v3875, 1.442695
        %v4717 = vpow.pop %v4716
        %v4718 = vmul.f32 %v3876, 1.442695
        %v4719 = vpow.pop %v4718
        %v4720 = vmul.f32 %v3877, 1.442695
        %v4721 = vpow.pop %v4720
        %v4722 = vmul.f32 %v3878, 1.442695
        %v4723 = vpow.pop %v4722
        %v4724 = vmul.f32 %v3879, 1.442695
        %v4725 = vpow.pop %v4724
        %v4726 = vmul.f32 %v3880, 1.442695
        %v4727 = vpow.pop %v4726
        %v4728 = vmul.f32 %v3881, 1.442695
        %v4729 = vpow.pop %v4728
        %v4730 = vmul.f32 %v3882, 1.442695
        %v4731 = vpow.pop %v4730
        %v4732 = vmul.f32 %v3883, 1.442695
        %v4733 = vpow.pop %v4732
        %v4734 = vmul.f32 %v3884, 1.442695
        %v4735 = vpow.pop %v4734
        %v4736 = vmul.f32 %v3885, 1.442695
        %v4737 = vpow.pop %v4736
        %v4738 = vmul.f32 %v3886, 1.442695
        %v4739 = vpow.pop %v4738
        %v4740 = vmul.f32 %v3887, 1.442695
        %v4741 = vpow.pop %v4740
        %v4742 = vmul.f32 %v3888, 1.442695
        %v4743 = vpow.pop %v4742
        %v4744 = vmul.f32 %v3889, 1.442695
        %v4745 = vpow.pop %v4744
        %v4746 = vmul.f32 %v3890, 1.442695
        %v4747 = vpow.pop %v4746
        %v4748 = vmul.f32 %v3891, 1.442695
        %v4749 = vpow.pop %v4748
        %v4750 = vmul.f32 %v3892, 1.442695
        %v4751 = vpow.pop %v4750
        %v4752 = vmul.f32 %v3893, 1.442695
        %v4753 = vpow.pop %v4752
        %v4754 = vmul.f32 %v3894, 1.442695
        %v4755 = vpow.pop %v4754
        %v4756 = vmul.f32 %v3895, 1.442695
        %v4757 = vpow.pop %v4756
        %v4758 = vmul.f32 %v3896, 1.442695
        %v4759 = vpow.pop %v4758
        %v4760 = vmul.f32 %v3897, 1.442695
        %v4761 = vpow.pop %v4760
        %v4762 = vmul.f32 %v3898, 1.442695
        %v4763 = vpow.pop %v4762
        %v4764 = vmul.f32 %v3899, 1.442695
        %v4765 = vpow.pop %v4764
        %v4766 = vmul.f32 %v3900, 1.442695
        %v4767 = vpow.pop %v4766
        %v4768 = vmul.f32 %v3901, 1.442695
        %v4769 = vpow.pop %v4768
        %v4770 = vmul.f32 %v3902, 1.442695
        %v4771 = vpow.pop %v4770
        %v4772 = vmul.f32 %v3903, 1.442695
        %v4773 = vpow.pop %v4772
        %v4774 = vmul.f32 %v3904, 1.442695
        %v4775 = vpow.pop %v4774
        %v4776 = vmul.f32 %v3905, 1.442695
        %v4777 = vpow.pop %v4776
        %v4778 = vmul.f32 %v3906, 1.442695
        %v4779 = vpow.pop %v4778
        %v4780 = vmul.f32 %v3907, 1.442695
        %v4781 = vpow.pop %v4780
        %v4782 = vmul.f32 %v3908, 1.442695
        %v4783 = vpow.pop %v4782
        %v4784 = vmul.f32 %v3909, 1.442695
        %v4785 = vpow.pop %v4784
        %v4786 = vmul.f32 %v3910, 1.442695
        %v4787 = vpow.pop %v4786
        %v4788 = vmul.f32 %v3911, 1.442695
        %v4789 = vpow.pop %v4788
        %v4790 = vmul.f32 %v3912, 1.442695
        %v4791 = vpow.pop %v4790
        %v4792 = vmul.f32 %v3913, 1.442695
        %v4793 = vpow.pop %v4792
        %v4794 = vmul.f32 %v3914, 1.442695
        %v4795 = vpow.pop %v4794
        %v4796 = vmul.f32 %v3915, 1.442695
        %v4797 = vpow.pop %v4796
        %v4798 = vmul.f32 %v3916, 1.442695
        %v4799 = vpow.pop %v4798
        %v4800 = vmul.f32 %v3917, 1.442695
        %v4801 = vpow.pop %v4800
        %v4802 = vmul.f32 %v3918, 1.442695
        %v4803 = vpow.pop %v4802
        %v4804 = vmul.f32 %v3919, 1.442695
        %v4805 = vpow.pop %v4804
        %v4806 = vmul.f32 %v3920, 1.442695
        %v4807 = vpow.pop %v4806
        %v4808 = vmul.f32 %v3921, 1.442695
        %v4809 = vpow.pop %v4808
        %v4810 = vmul.f32 %v3922, 1.442695
        %v4811 = vpow.pop %v4810
        %v4812 = vmul.f32 %v3923, 1.442695
        %v4813 = vpow.pop %v4812
        %v4814 = vmul.f32 %v3924, 1.442695
        %v4815 = vpow.pop %v4814
        %v4816 = vmul.f32 %v3925, 1.442695
        %v4817 = vpow.pop %v4816
        %v4818 = vmul.f32 %v3926, 1.442695
        %v4819 = vpow.pop %v4818
        %v4820 = vmul.f32 %v3927, 1.442695
        %v4821 = vpow.pop %v4820
        %v4822 = vmul.f32 %v3928, 1.442695
        %v4823 = vpow.pop %v4822
        %v4824 = vmul.f32 %v3929, 1.442695
        %v4825 = vpow.pop %v4824
        %v4826 = vmul.f32 %v3930, 1.442695
        %v4827 = vpow.pop %v4826
        %v4828 = vmul.f32 %v3931, 1.442695
        %v4829 = vpow.pop %v4828
        %v4830 = vmul.f32 %v3932, 1.442695
        %v4831 = vpow.pop %v4830
        %v4832 = vmul.f32 %v3933, 1.442695
        %v4833 = vpow.pop %v4832
        %v4834 = vmul.f32 %v3934, 1.442695
        %v4835 = vpow.pop %v4834
        %v4836 = vmul.f32 %v3935, 1.442695
        %v4837 = vpow.pop %v4836
        %v4838 = vmul.f32 %v3936, 1.442695
        %v4839 = vpow.pop %v4838
        %v4840 = vmul.f32 %v3937, 1.442695
        %v4841 = vpow.pop %v4840
        %v4842 = vmul.f32 %v3938, 1.442695
        %v4843 = vpow.pop %v4842
        %v4844 = vmul.f32 %v3939, 1.442695
        %v4845 = vpow.pop %v4844
        %v4846 = vmul.f32 %v3940, 1.442695
        %v4847 = vpow.pop %v4846
        %v4848 = vmul.f32 %v3941, 1.442695
        %v4849 = vpow.pop %v4848
        %v4850 = vmul.f32 %v3942, 1.442695
        %v4851 = vpow.pop %v4850
        %v4852 = vmul.f32 %v3943, 1.442695
        %v4853 = vpow.pop %v4852
        %v4854 = vmul.f32 %v3944, 1.442695
        %v4855 = vpow.pop %v4854
        %v4856 = vmul.f32 %v3945, 1.442695
        %v4857 = vpow.pop %v4856
        %v4858 = vmul.f32 %v3946, 1.442695
        %v4859 = vpow.pop %v4858
        %v4860 = vmul.f32 %v3947, 1.442695
        %v4861 = vpow.pop %v4860
        %v4862 = vmul.f32 %v3948, 1.442695
        %v4863 = vpow.pop %v4862
        %v4864 = vmul.f32 %v3949, 1.442695
        %v4865 = vpow.pop %v4864
        %v4866 = vmul.f32 %v3950, 1.442695
        %v4867 = vpow.pop %v4866
        %v4868 = vmul.f32 %v3951, 1.442695
        %v4869 = vpow.pop %v4868
        %v4870 = vmul.f32 %v3952, 1.442695
        %v4871 = vpow.pop %v4870
        %v4872 = vmul.f32 %v3953, 1.442695
        %v4873 = vpow.pop %v4872
        %v4874 = vmul.f32 %v3954, 1.442695
        %v4875 = vpow.pop %v4874
        %v4876 = vmul.f32 %v3955, 1.442695
        %v4877 = vpow.pop %v4876
        %v4878 = vmul.f32 %v3956, 1.442695
        %v4879 = vpow.pop %v4878
        %v4880 = vmul.f32 %v3957, 1.442695
        %v4881 = vpow.pop %v4880
        %v4882 = vmul.f32 %v3958, 1.442695
        %v4883 = vpow.pop %v4882
        %v4884 = vmul.f32 %v3959, 1.442695
        %v4885 = vpow.pop %v4884
        %v4886 = vmul.f32 %v3960, 1.442695
        %v4887 = vpow.pop %v4886
        %v4888 = vmul.f32 %v3961, 1.442695
        %v4889 = vpow.pop %v4888
        %v4890 = vmul.f32 %v3962, 1.442695
        %v4891 = vpow.pop %v4890
        %v4892 = vmul.f32 %v3963, 1.442695
        %v4893 = vpow.pop %v4892
        %v4894 = vmul.f32 %v3964, 1.442695
        %v4895 = vpow.pop %v4894
        %v4896 = vmul.f32 %v3965, 1.442695
        %v4897 = vpow.pop %v4896
        %v4898 = vmul.f32 %v3966, 1.442695
        %v4899 = vpow.pop %v4898
        %v4900 = vmul.f32 %v3967, 1.442695
        %v4901 = vpow.pop %v4900
        %v4902 = vmul.f32 %v3968, 1.442695
        %v4903 = vpow.pop %v4902
        %v4904 = vmul.f32 %v3969, 1.442695
        %v4905 = vpow.pop %v4904
        %v4906 = vmul.f32 %v3970, 1.442695
        %v4907 = vpow.pop %v4906
        %v4908 = vmul.f32 %v3971, 1.442695
        %v4909 = vpow.pop %v4908
        %v4910 = vmul.f32 %v3972, 1.442695
        %v4911 = vpow.pop %v4910
        %v4912 = vmul.f32 %v3973, 1.442695
        %v4913 = vpow.pop %v4912
        %v4914 = vmul.f32 %v3974, 1.442695
        %v4915 = vpow.pop %v4914
        %v4916 = vmul.f32 %v3975, 1.442695
        %v4917 = vpow.pop %v4916
        %v4918 = vmul.f32 %v3976, 1.442695
        %v4919 = vpow.pop %v4918
        %v4920 = vmul.f32 %v3977, 1.442695
        %v4921 = vpow.pop %v4920
        %v4922 = vmul.f32 %v3978, 1.442695
        %v4923 = vpow.pop %v4922
        %v4924 = vmul.f32 %v3979, 1.442695
        %v4925 = vpow.pop %v4924
        %v4926 = vmul.f32 %v3980, 1.442695
        %v4927 = vpow.pop %v4926
        %v4928 = vmul.f32 %v3981, 1.442695
        %v4929 = vpow.pop %v4928
        %v4930 = vmul.f32 %v3982, 1.442695
        %v4931 = vpow.pop %v4930
        %v4932 = vmul.f32 %v3983, 1.442695
        %v4933 = vpow.pop %v4932
        %v4934 = vmul.f32 %v3984, 1.442695
        %v4935 = vpow.pop %v4934
        %v4936 = vmul.f32 %v3985, 1.442695
        %v4937 = vpow.pop %v4936
        %v4938 = vmul.f32 %v3986, 1.442695
        %v4939 = vpow.pop %v4938
        %v4940 = vmul.f32 %v3987, 1.442695
        %v4941 = vpow.pop %v4940
        %v4942 = vmul.f32 %v3988, 1.442695
        %v4943 = vpow.pop %v4942
        %v4944 = vmul.f32 %v3989, 1.442695
        %v4945 = vpow.pop %v4944
        %v4946 = vmul.f32 %v3990, 1.442695
        %v4947 = vpow.pop %v4946
        %v4948 = vmul.f32 %v3991, 1.442695
        %v4949 = vpow.pop %v4948
        %v4950 = vmul.f32 %v3992, 1.442695
        %v4951 = vpow.pop %v4950
        %v4952 = vmul.f32 %v3993, 1.442695
        %v4953 = vpow.pop %v4952
        %v4954 = vmul.f32 %v3994, 1.442695
        %v4955 = vpow.pop %v4954
        %v4956 = vmul.f32 %v3995, 1.442695
        %v4957 = vpow.pop %v4956
        %v4958 = vmul.f32 %v3996, 1.442695
        %v4959 = vpow.pop %v4958
        %v4960 = vmul.f32 %v3997, 1.442695
        %v4961 = vpow.pop %v4960
        %v4962 = vmul.f32 %v3998, 1.442695
        %v4963 = vpow.pop %v4962
        %v4964 = vmul.f32 %v3999, 1.442695
        %v4965 = vpow.pop %v4964
        %v4966 = vmul.f32 %v4000, 1.442695
        %v4967 = vpow.pop %v4966
        %v4968 = vmul.f32 %v4001, 1.442695
        %v4969 = vpow.pop %v4968
        %v4970 = vmul.f32 %v4002, 1.442695
        %v4971 = vpow.pop %v4970
        %v4972 = vmul.f32 %v4003, 1.442695
        %v4973 = vpow.pop %v4972
        %v4974 = vmul.f32 %v4004, 1.442695
        %v4975 = vpow.pop %v4974
        %v4976 = vmul.f32 %v4005, 1.442695
        %v4977 = vpow.pop %v4976
        %v4978 = vmul.f32 %v4006, 1.442695
        %v4979 = vpow.pop %v4978
        %v4980 = vmul.f32 %v4007, 1.442695
        %v4981 = vpow.pop %v4980
        %v4982 = vmul.f32 %v4008, 1.442695
        %v4983 = vpow.pop %v4982
        %v4984 = vmul.f32 %v4009, 1.442695
        %v4985 = vpow.pop %v4984
        %v4986 = vmul.f32 %v4010, 1.442695
        %v4987 = vpow.pop %v4986
        %v4988 = vmul.f32 %v4011, 1.442695
        %v4989 = vpow.pop %v4988
        %v4990 = vmul.f32 %v4012, 1.442695
        %v4991 = vpow.pop %v4990
        %v4992 = vmul.f32 %v4013, 1.442695
        %v4993 = vpow.pop %v4992
        %v4994 = vmul.f32 %v4014, 1.442695
        %v4995 = vpow.pop %v4994
        %v4996 = vmul.f32 %v4015, 1.442695
        %v4997 = vpow.pop %v4996
        %v4998 = vmul.f32 %v4016, 1.442695
        %v4999 = vpow.pop %v4998
        %v5000 = vmul.f32 %v4017, 1.442695
        %v5001 = vpow.pop %v5000
        %v5002 = vmul.f32 %v4018, 1.442695
        %v5003 = vpow.pop %v5002
        %v5004 = vmul.f32 %v4019, 1.442695
        %v5005 = vpow.pop %v5004
        %v5006 = vmul.f32 %v4020, 1.442695
        %v5007 = vpow.pop %v5006
        %v5008 = vmul.f32 %v4021, 1.442695
        %v5009 = vpow.pop %v5008
        %v5010 = vmul.f32 %v4022, 1.442695
        %v5011 = vpow.pop %v5010
        %v5012 = vmul.f32 %v4023, 1.442695
        %v5013 = vpow.pop %v5012
        %v5014 = vmul.f32 %v4024, 1.442695
        %v5015 = vpow.pop %v5014
        %v5016 = vmul.f32 %v4025, 1.442695
        %v5017 = vpow.pop %v5016
        %v5018 = vmul.f32 %v4026, 1.442695
        %v5019 = vpow.pop %v5018
        %v5020 = vmul.f32 %v4027, 1.442695
        %v5021 = vpow.pop %v5020
        %v5022 = vmul.f32 %v4028, 1.442695
        %v5023 = vpow.pop %v5022
        %v5024 = vmul.f32 %v4029, 1.442695
        %v5025 = vpow.pop %v5024
        %v5026 = vmul.f32 %v4030, 1.442695
        %v5027 = vpow.pop %v5026
        %v5028 = vmul.f32 %v4031, 1.442695
        %v5029 = vpow.pop %v5028
        %v5030 = vmul.f32 %v4032, 1.442695
        %v5031 = vpow.pop %v5030
        %v5032 = vmul.f32 %v4033, 1.442695
        %v5033 = vpow.pop %v5032
        %v5034 = vmul.f32 %v4034, 1.442695
        %v5035 = vpow.pop %v5034
        %v5036 = vmul.f32 %v4035, 1.442695
        %v5037 = vpow.pop %v5036
        %v5038 = vmul.f32 %v4036, 1.442695
        %v5039 = vpow.pop %v5038
        %v5040 = vmul.f32 %v4037, 1.442695
        %v5041 = vpow.pop %v5040
        %v5042 = vmul.f32 %v4038, 1.442695
        %v5043 = vpow.pop %v5042
        %v5044 = vmul.f32 %v4039, 1.442695
        %v5045 = vpow.pop %v5044
        %v5046 = vmul.f32 %v4040, 1.442695
        %v5047 = vpow.pop %v5046
        %v5048 = vmul.f32 %v4041, 1.442695
        %v5049 = vpow.pop %v5048
        %v5050 = vmul.f32 %v4042, 1.442695
        %v5051 = vpow.pop %v5050
        %v5052 = vmul.f32 %v4043, 1.442695
        %v5053 = vpow.pop %v5052
        %v5054 = vmul.f32 %v4044, 1.442695
        %v5055 = vpow.pop %v5054
        %v5056 = vmul.f32 %v4045, 1.442695
        %v5057 = vpow.pop %v5056
        %v5058 = vmul.f32 %v4046, 1.442695
        %v5059 = vpow.pop %v5058
        %v5060 = vmul.f32 %v4047, 1.442695
        %v5061 = vpow.pop %v5060
        %v5062 = vmul.f32 %v4048, 1.442695
        %v5063 = vpow.pop %v5062
        %v5064 = vmul.f32 %v4049, 1.442695
        %v5065 = vpow.pop %v5064
        %v5066 = vmul.f32 %v4050, 1.442695
        %v5067 = vpow.pop %v5066
        %v5068 = vmul.f32 %v4051, 1.442695
        %v5069 = vpow.pop %v5068
        %v5070 = vmul.f32 %v4052, 1.442695
        %v5071 = vpow.pop %v5070
        %v5072 = vmul.f32 %v4053, 1.442695
        %v5073 = vpow.pop %v5072
        %v5074 = vmul.f32 %v4054, 1.442695
        %v5075 = vpow.pop %v5074
        %v5076 = vmul.f32 %v4055, 1.442695
        %v5077 = vpow.pop %v5076
        %v5078 = vmul.f32 %v4056, 1.442695
        %v5079 = vpow.pop %v5078
        %v5080 = vmul.f32 %v4057, 1.442695
        %v5081 = vpow.pop %v5080
        %v5082 = vadd.f32 %v4059, %v4063
        %v5083 = vadd.f32 %v5082, %v4067
        %v5084 = vadd.f32 %v5083, %v4071
        %v5085 = vadd.f32 %v5084, %v4075
        %v5086 = vadd.f32 %v5085, %v4079
        %v5087 = vadd.f32 %v5086, %v4083
        %v5088 = vadd.f32 %v5087, %v4087
        %v5089 = vadd.f32 %v5088, %v4091
        %v5090 = vadd.f32 %v5089, %v4095
        %v5091 = vadd.f32 %v5090, %v4099
        %v5092 = vadd.f32 %v5091, %v4103
        %v5093 = vadd.f32 %v5092, %v4107
        %v5094 = vadd.f32 %v5093, %v4111
        %v5095 = vadd.f32 %v5094, %v4115
        %v5096 = vadd.f32 %v5095, %v4119
        %v5097 = vadd.f32 %v5096, %v4123
        %v5098 = vadd.f32 %v5097, %v4127
        %v5099 = vadd.f32 %v5098, %v4131
        %v5100 = vadd.f32 %v5099, %v4135
        %v5101 = vadd.f32 %v5100, %v4139
        %v5102 = vadd.f32 %v5101, %v4143
        %v5103 = vadd.f32 %v5102, %v4147
        %v5104 = vadd.f32 %v5103, %v4151
        %v5105 = vadd.f32 %v5104, %v4155
        %v5106 = vadd.f32 %v5105, %v4159
        %v5107 = vadd.f32 %v5106, %v4163
        %v5108 = vadd.f32 %v5107, %v4167
        %v5109 = vadd.f32 %v5108, %v4171
        %v5110 = vadd.f32 %v5109, %v4175
        %v5111 = vadd.f32 %v5110, %v4179
        %v5112 = vadd.f32 %v5111, %v4183
        %v5113 = vrot.slane %v5112, 4
        %v5114 = vadd.f32 %v5112, %v5113
        %v5115 = vrot.slane %v5114, 2
        %v5116 = vadd.f32 %v5114, %v5115
        %v5117 = vrot.slane %v5116, 1
        %v5118 = vadd.f32 %v5116, %v5117
        %v5119 = vadd.f32 %v4061, %v4065
        %v5120 = vadd.f32 %v5119, %v4069
        %v5121 = vadd.f32 %v5120, %v4073
        %v5122 = vadd.f32 %v5121, %v4077
        %v5123 = vadd.f32 %v5122, %v4081
        %v5124 = vadd.f32 %v5123, %v4085
        %v5125 = vadd.f32 %v5124, %v4089
        %v5126 = vadd.f32 %v5125, %v4093
        %v5127 = vadd.f32 %v5126, %v4097
        %v5128 = vadd.f32 %v5127, %v4101
        %v5129 = vadd.f32 %v5128, %v4105
        %v5130 = vadd.f32 %v5129, %v4109
        %v5131 = vadd.f32 %v5130, %v4113
        %v5132 = vadd.f32 %v5131, %v4117
        %v5133 = vadd.f32 %v5132, %v4121
        %v5134 = vadd.f32 %v5133, %v4125
        %v5135 = vadd.f32 %v5134, %v4129
        %v5136 = vadd.f32 %v5135, %v4133
        %v5137 = vadd.f32 %v5136, %v4137
        %v5138 = vadd.f32 %v5137, %v4141
        %v5139 = vadd.f32 %v5138, %v4145
        %v5140 = vadd.f32 %v5139, %v4149
        %v5141 = vadd.f32 %v5140, %v4153
        %v5142 = vadd.f32 %v5141, %v4157
        %v5143 = vadd.f32 %v5142, %v4161
        %v5144 = vadd.f32 %v5143, %v4165
        %v5145 = vadd.f32 %v5144, %v4169
        %v5146 = vadd.f32 %v5145, %v4173
        %v5147 = vadd.f32 %v5146, %v4177
        %v5148 = vadd.f32 %v5147, %v4181
        %v5149 = vadd.f32 %v5148, %v4185
        %v5150 = vrot.slane %v5149, 4
        %v5151 = vadd.f32 %v5149, %v5150
        %v5152 = vrot.slane %v5151, 2
        %v5153 = vadd.f32 %v5151, %v5152
        %v5154 = vrot.slane %v5153, 1
        %v5155 = vadd.f32 %v5153, %v5154
        %v5156 = vadd.f32 %v4187, %v4191
        %v5157 = vadd.f32 %v5156, %v4195
        %v5158 = vadd.f32 %v5157, %v4199
        %v5159 = vadd.f32 %v5158, %v4203
        %v5160 = vadd.f32 %v5159, %v4207
        %v5161 = vadd.f32 %v5160, %v4211
        %v5162 = vadd.f32 %v5161, %v4215
        %v5163 = vadd.f32 %v5162, %v4219
        %v5164 = vadd.f32 %v5163, %v4223
        %v5165 = vadd.f32 %v5164, %v4227
        %v5166 = vadd.f32 %v5165, %v4231
        %v5167 = vadd.f32 %v5166, %v4235
        %v5168 = vadd.f32 %v5167, %v4239
        %v5169 = vadd.f32 %v5168, %v4243
        %v5170 = vadd.f32 %v5169, %v4247
        %v5171 = vadd.f32 %v5170, %v4251
        %v5172 = vadd.f32 %v5171, %v4255
        %v5173 = vadd.f32 %v5172, %v4259
        %v5174 = vadd.f32 %v5173, %v4263
        %v5175 = vadd.f32 %v5174, %v4267
        %v5176 = vadd.f32 %v5175, %v4271
        %v5177 = vadd.f32 %v5176, %v4275
        %v5178 = vadd.f32 %v5177, %v4279
        %v5179 = vadd.f32 %v5178, %v4283
        %v5180 = vadd.f32 %v5179, %v4287
        %v5181 = vadd.f32 %v5180, %v4291
        %v5182 = vadd.f32 %v5181, %v4295
        %v5183 = vadd.f32 %v5182, %v4299
        %v5184 = vadd.f32 %v5183, %v4303
        %v5185 = vadd.f32 %v5184, %v4307
        %v5186 = vadd.f32 %v5185, %v4311
        %v5187 = vrot.slane %v5186, 4
        %v5188 = vadd.f32 %v5186, %v5187
        %v5189 = vrot.slane %v5188, 2
        %v5190 = vadd.f32 %v5188, %v5189
        %v5191 = vrot.slane %v5190, 1
        %v5192 = vadd.f32 %v5190, %v5191
        %v5193 = vadd.f32 %v4189, %v4193
        %v5194 = vadd.f32 %v5193, %v4197
        %v5195 = vadd.f32 %v5194, %v4201
        %v5196 = vadd.f32 %v5195, %v4205
        %v5197 = vadd.f32 %v5196, %v4209
        %v5198 = vadd.f32 %v5197, %v4213
        %v5199 = vadd.f32 %v5198, %v4217
        %v5200 = vadd.f32 %v5199, %v4221
        %v5201 = vadd.f32 %v5200, %v4225
        %v5202 = vadd.f32 %v5201, %v4229
        %v5203 = vadd.f32 %v5202, %v4233
        %v5204 = vadd.f32 %v5203, %v4237
        %v5205 = vadd.f32 %v5204, %v4241
        %v5206 = vadd.f32 %v5205, %v4245
        %v5207 = vadd.f32 %v5206, %v4249
        %v5208 = vadd.f32 %v5207, %v4253
        %v5209 = vadd.f32 %v5208, %v4257
        %v5210 = vadd.f32 %v5209, %v4261
        %v5211 = vadd.f32 %v5210, %v4265
        %v5212 = vadd.f32 %v5211, %v4269
        %v5213 = vadd.f32 %v5212, %v4273
        %v5214 = vadd.f32 %v5213, %v4277
        %v5215 = vadd.f32 %v5214, %v4281
        %v5216 = vadd.f32 %v5215, %v4285
        %v5217 = vadd.f32 %v5216, %v4289
        %v5218 = vadd.f32 %v5217, %v4293
        %v5219 = vadd.f32 %v5218, %v4297
        %v5220 = vadd.f32 %v5219, %v4301
        %v5221 = vadd.f32 %v5220, %v4305
        %v5222 = vadd.f32 %v5221, %v4309
        %v5223 = vadd.f32 %v5222, %v4313
        %v5224 = vrot.slane %v5223, 4
        %v5225 = vadd.f32 %v5223, %v5224
        %v5226 = vrot.slane %v5225, 2
        %v5227 = vadd.f32 %v5225, %v5226
        %v5228 = vrot.slane %v5227, 1
        %v5229 = vadd.f32 %v5227, %v5228
        %v5230 = vadd.f32 %v4315, %v4319
        %v5231 = vadd.f32 %v5230, %v4323
        %v5232 = vadd.f32 %v5231, %v4327
        %v5233 = vadd.f32 %v5232, %v4331
        %v5234 = vadd.f32 %v5233, %v4335
        %v5235 = vadd.f32 %v5234, %v4339
        %v5236 = vadd.f32 %v5235, %v4343
        %v5237 = vadd.f32 %v5236, %v4347
        %v5238 = vadd.f32 %v5237, %v4351
        %v5239 = vadd.f32 %v5238, %v4355
        %v5240 = vadd.f32 %v5239, %v4359
        %v5241 = vadd.f32 %v5240, %v4363
        %v5242 = vadd.f32 %v5241, %v4367
        %v5243 = vadd.f32 %v5242, %v4371
        %v5244 = vadd.f32 %v5243, %v4375
        %v5245 = vadd.f32 %v5244, %v4379
        %v5246 = vadd.f32 %v5245, %v4383
        %v5247 = vadd.f32 %v5246, %v4387
        %v5248 = vadd.f32 %v5247, %v4391
        %v5249 = vadd.f32 %v5248, %v4395
        %v5250 = vadd.f32 %v5249, %v4399
        %v5251 = vadd.f32 %v5250, %v4403
        %v5252 = vadd.f32 %v5251, %v4407
        %v5253 = vadd.f32 %v5252, %v4411
        %v5254 = vadd.f32 %v5253, %v4415
        %v5255 = vadd.f32 %v5254, %v4419
        %v5256 = vadd.f32 %v5255, %v4423
        %v5257 = vadd.f32 %v5256, %v4427
        %v5258 = vadd.f32 %v5257, %v4431
        %v5259 = vadd.f32 %v5258, %v4435
        %v5260 = vadd.f32 %v5259, %v4439
        %v5261 = vrot.slane %v5260, 4
        %v5262 = vadd.f32 %v5260, %v5261
        %v5263 = vrot.slane %v5262, 2
        %v5264 = vadd.f32 %v5262, %v5263
        %v5265 = vrot.slane %v5264, 1
        %v5266 = vadd.f32 %v5264, %v5265
        %v5267 = vadd.f32 %v4317, %v4321
        %v5268 = vadd.f32 %v5267, %v4325
        %v5269 = vadd.f32 %v5268, %v4329
        %v5270 = vadd.f32 %v5269, %v4333
        %v5271 = vadd.f32 %v5270, %v4337
        %v5272 = vadd.f32 %v5271, %v4341
        %v5273 = vadd.f32 %v5272, %v4345
        %v5274 = vadd.f32 %v5273, %v4349
        %v5275 = vadd.f32 %v5274, %v4353
        %v5276 = vadd.f32 %v5275, %v4357
        %v5277 = vadd.f32 %v5276, %v4361
        %v5278 = vadd.f32 %v5277, %v4365
        %v5279 = vadd.f32 %v5278, %v4369
        %v5280 = vadd.f32 %v5279, %v4373
        %v5281 = vadd.f32 %v5280, %v4377
        %v5282 = vadd.f32 %v5281, %v4381
        %v5283 = vadd.f32 %v5282, %v4385
        %v5284 = vadd.f32 %v5283, %v4389
        %v5285 = vadd.f32 %v5284, %v4393
        %v5286 = vadd.f32 %v5285, %v4397
        %v5287 = vadd.f32 %v5286, %v4401
        %v5288 = vadd.f32 %v5287, %v4405
        %v5289 = vadd.f32 %v5288, %v4409
        %v5290 = vadd.f32 %v5289, %v4413
        %v5291 = vadd.f32 %v5290, %v4417
        %v5292 = vadd.f32 %v5291, %v4421
        %v5293 = vadd.f32 %v5292, %v4425
        %v5294 = vadd.f32 %v5293, %v4429
        %v5295 = vadd.f32 %v5294, %v4433
        %v5296 = vadd.f32 %v5295, %v4437
        %v5297 = vadd.f32 %v5296, %v4441
        %v5298 = vrot.slane %v5297, 4
        %v5299 = vadd.f32 %v5297, %v5298
        %v5300 = vrot.slane %v5299, 2
        %v5301 = vadd.f32 %v5299, %v5300
        %v5302 = vrot.slane %v5301, 1
        %v5303 = vadd.f32 %v5301, %v5302
        %v5304 = vadd.f32 %v4443, %v4447
        %v5305 = vadd.f32 %v5304, %v4451
        %v5306 = vadd.f32 %v5305, %v4455
        %v5307 = vadd.f32 %v5306, %v4459
        %v5308 = vadd.f32 %v5307, %v4463
        %v5309 = vadd.f32 %v5308, %v4467
        %v5310 = vadd.f32 %v5309, %v4471
        %v5311 = vadd.f32 %v5310, %v4475
        %v5312 = vadd.f32 %v5311, %v4479
        %v5313 = vadd.f32 %v5312, %v4483
        %v5314 = vadd.f32 %v5313, %v4487
        %v5315 = vadd.f32 %v5314, %v4491
        %v5316 = vadd.f32 %v5315, %v4495
        %v5317 = vadd.f32 %v5316, %v4499
        %v5318 = vadd.f32 %v5317, %v4503
        %v5319 = vadd.f32 %v5318, %v4507
        %v5320 = vadd.f32 %v5319, %v4511
        %v5321 = vadd.f32 %v5320, %v4515
        %v5322 = vadd.f32 %v5321, %v4519
        %v5323 = vadd.f32 %v5322, %v4523
        %v5324 = vadd.f32 %v5323, %v4527
        %v5325 = vadd.f32 %v5324, %v4531
        %v5326 = vadd.f32 %v5325, %v4535
        %v5327 = vadd.f32 %v5326, %v4539
        %v5328 = vadd.f32 %v5327, %v4543
        %v5329 = vadd.f32 %v5328, %v4547
        %v5330 = vadd.f32 %v5329, %v4551
        %v5331 = vadd.f32 %v5330, %v4555
        %v5332 = vadd.f32 %v5331, %v4559
        %v5333 = vadd.f32 %v5332, %v4563
        %v5334 = vadd.f32 %v5333, %v4567
        %v5335 = vrot.slane %v5334, 4
        %v5336 = vadd.f32 %v5334, %v5335
        %v5337 = vrot.slane %v5336, 2
        %v5338 = vadd.f32 %v5336, %v5337
        %v5339 = vrot.slane %v5338, 1
        %v5340 = vadd.f32 %v5338, %v5339
        %v5341 = vadd.f32 %v4445, %v4449
        %v5342 = vadd.f32 %v5341, %v4453
        %v5343 = vadd.f32 %v5342, %v4457
        %v5344 = vadd.f32 %v5343, %v4461
        %v5345 = vadd.f32 %v5344, %v4465
        %v5346 = vadd.f32 %v5345, %v4469
        %v5347 = vadd.f32 %v5346, %v4473
        %v5348 = vadd.f32 %v5347, %v4477
        %v5349 = vadd.f32 %v5348, %v4481
        %v5350 = vadd.f32 %v5349, %v4485
        %v5351 = vadd.f32 %v5350, %v4489
        %v5352 = vadd.f32 %v5351, %v4493
        %v5353 = vadd.f32 %v5352, %v4497
        %v5354 = vadd.f32 %v5353, %v4501
        %v5355 = vadd.f32 %v5354, %v4505
        %v5356 = vadd.f32 %v5355, %v4509
        %v5357 = vadd.f32 %v5356, %v4513
        %v5358 = vadd.f32 %v5357, %v4517
        %v5359 = vadd.f32 %v5358, %v4521
        %v5360 = vadd.f32 %v5359, %v4525
        %v5361 = vadd.f32 %v5360, %v4529
        %v5362 = vadd.f32 %v5361, %v4533
        %v5363 = vadd.f32 %v5362, %v4537
        %v5364 = vadd.f32 %v5363, %v4541
        %v5365 = vadd.f32 %v5364, %v4545
        %v5366 = vadd.f32 %v5365, %v4549
        %v5367 = vadd.f32 %v5366, %v4553
        %v5368 = vadd.f32 %v5367, %v4557
        %v5369 = vadd.f32 %v5368, %v4561
        %v5370 = vadd.f32 %v5369, %v4565
        %v5371 = vadd.f32 %v5370, %v4569
        %v5372 = vrot.slane %v5371, 4
        %v5373 = vadd.f32 %v5371, %v5372
        %v5374 = vrot.slane %v5373, 2
        %v5375 = vadd.f32 %v5373, %v5374
        %v5376 = vrot.slane %v5375, 1
        %v5377 = vadd.f32 %v5375, %v5376
        %v5378 = vadd.f32 %v4571, %v4575
        %v5379 = vadd.f32 %v5378, %v4579
        %v5380 = vadd.f32 %v5379, %v4583
        %v5381 = vadd.f32 %v5380, %v4587
        %v5382 = vadd.f32 %v5381, %v4591
        %v5383 = vadd.f32 %v5382, %v4595
        %v5384 = vadd.f32 %v5383, %v4599
        %v5385 = vadd.f32 %v5384, %v4603
        %v5386 = vadd.f32 %v5385, %v4607
        %v5387 = vadd.f32 %v5386, %v4611
        %v5388 = vadd.f32 %v5387, %v4615
        %v5389 = vadd.f32 %v5388, %v4619
        %v5390 = vadd.f32 %v5389, %v4623
        %v5391 = vadd.f32 %v5390, %v4627
        %v5392 = vadd.f32 %v5391, %v4631
        %v5393 = vadd.f32 %v5392, %v4635
        %v5394 = vadd.f32 %v5393, %v4639
        %v5395 = vadd.f32 %v5394, %v4643
        %v5396 = vadd.f32 %v5395, %v4647
        %v5397 = vadd.f32 %v5396, %v4651
        %v5398 = vadd.f32 %v5397, %v4655
        %v5399 = vadd.f32 %v5398, %v4659
        %v5400 = vadd.f32 %v5399, %v4663
        %v5401 = vadd.f32 %v5400, %v4667
        %v5402 = vadd.f32 %v5401, %v4671
        %v5403 = vadd.f32 %v5402, %v4675
        %v5404 = vadd.f32 %v5403, %v4679
        %v5405 = vadd.f32 %v5404, %v4683
        %v5406 = vadd.f32 %v5405, %v4687
        %v5407 = vadd.f32 %v5406, %v4691
        %v5408 = vadd.f32 %v5407, %v4695
        %v5409 = vrot.slane %v5408, 4
        %v5410 = vadd.f32 %v5408, %v5409
        %v5411 = vrot.slane %v5410, 2
        %v5412 = vadd.f32 %v5410, %v5411
        %v5413 = vrot.slane %v5412, 1
        %v5414 = vadd.f32 %v5412, %v5413
        %v5415 = vadd.f32 %v4573, %v4577
        %v5416 = vadd.f32 %v5415, %v4581
        %v5417 = vadd.f32 %v5416, %v4585
        %v5418 = vadd.f32 %v5417, %v4589
        %v5419 = vadd.f32 %v5418, %v4593
        %v5420 = vadd.f32 %v5419, %v4597
        %v5421 = vadd.f32 %v5420, %v4601
        %v5422 = vadd.f32 %v5421, %v4605
        %v5423 = vadd.f32 %v5422, %v4609
        %v5424 = vadd.f32 %v5423, %v4613
        %v5425 = vadd.f32 %v5424, %v4617
        %v5426 = vadd.f32 %v5425, %v4621
        %v5427 = vadd.f32 %v5426, %v4625
        %v5428 = vadd.f32 %v5427, %v4629
        %v5429 = vadd.f32 %v5428, %v4633
        %v5430 = vadd.f32 %v5429, %v4637
        %v5431 = vadd.f32 %v5430, %v4641
        %v5432 = vadd.f32 %v5431, %v4645
        %v5433 = vadd.f32 %v5432, %v4649
        %v5434 = vadd.f32 %v5433, %v4653
        %v5435 = vadd.f32 %v5434, %v4657
        %v5436 = vadd.f32 %v5435, %v4661
        %v5437 = vadd.f32 %v5436, %v4665
        %v5438 = vadd.f32 %v5437, %v4669
        %v5439 = vadd.f32 %v5438, %v4673
        %v5440 = vadd.f32 %v5439, %v4677
        %v5441 = vadd.f32 %v5440, %v4681
        %v5442 = vadd.f32 %v5441, %v4685
        %v5443 = vadd.f32 %v5442, %v4689
        %v5444 = vadd.f32 %v5443, %v4693
        %v5445 = vadd.f32 %v5444, %v4697
        %v5446 = vrot.slane %v5445, 4
        %v5447 = vadd.f32 %v5445, %v5446
        %v5448 = vrot.slane %v5447, 2
        %v5449 = vadd.f32 %v5447, %v5448
        %v5450 = vrot.slane %v5449, 1
        %v5451 = vadd.f32 %v5449, %v5450
        %v5452 = vadd.f32 %v4699, %v4703
        %v5453 = vadd.f32 %v5452, %v4707
        %v5454 = vadd.f32 %v5453, %v4711
        %v5455 = vadd.f32 %v5454, %v4715
        %v5456 = vadd.f32 %v5455, %v4719
        %v5457 = vadd.f32 %v5456, %v4723
        %v5458 = vadd.f32 %v5457, %v4727
        %v5459 = vadd.f32 %v5458, %v4731
        %v5460 = vadd.f32 %v5459, %v4735
        %v5461 = vadd.f32 %v5460, %v4739
        %v5462 = vadd.f32 %v5461, %v4743
        %v5463 = vadd.f32 %v5462, %v4747
        %v5464 = vadd.f32 %v5463, %v4751
        %v5465 = vadd.f32 %v5464, %v4755
        %v5466 = vadd.f32 %v5465, %v4759
        %v5467 = vadd.f32 %v5466, %v4763
        %v5468 = vadd.f32 %v5467, %v4767
        %v5469 = vadd.f32 %v5468, %v4771
        %v5470 = vadd.f32 %v5469, %v4775
        %v5471 = vadd.f32 %v5470, %v4779
        %v5472 = vadd.f32 %v5471, %v4783
        %v5473 = vadd.f32 %v5472, %v4787
        %v5474 = vadd.f32 %v5473, %v4791
        %v5475 = vadd.f32 %v5474, %v4795
        %v5476 = vadd.f32 %v5475, %v4799
        %v5477 = vadd.f32 %v5476, %v4803
        %v5478 = vadd.f32 %v5477, %v4807
        %v5479 = vadd.f32 %v5478, %v4811
        %v5480 = vadd.f32 %v5479, %v4815
        %v5481 = vadd.f32 %v5480, %v4819
        %v5482 = vadd.f32 %v5481, %v4823
        %v5483 = vrot.slane %v5482, 4
        %v5484 = vadd.f32 %v5482, %v5483
        %v5485 = vrot.slane %v5484, 2
        %v5486 = vadd.f32 %v5484, %v5485
        %v5487 = vrot.slane %v5486, 1
        %v5488 = vadd.f32 %v5486, %v5487
        %v5489 = vadd.f32 %v4701, %v4705
        %v5490 = vadd.f32 %v5489, %v4709
        %v5491 = vadd.f32 %v5490, %v4713
        %v5492 = vadd.f32 %v5491, %v4717
        %v5493 = vadd.f32 %v5492, %v4721
        %v5494 = vadd.f32 %v5493, %v4725
        %v5495 = vadd.f32 %v5494, %v4729
        %v5496 = vadd.f32 %v5495, %v4733
        %v5497 = vadd.f32 %v5496, %v4737
        %v5498 = vadd.f32 %v5497, %v4741
        %v5499 = vadd.f32 %v5498, %v4745
        %v5500 = vadd.f32 %v5499, %v4749
        %v5501 = vadd.f32 %v5500, %v4753
        %v5502 = vadd.f32 %v5501, %v4757
        %v5503 = vadd.f32 %v5502, %v4761
        %v5504 = vadd.f32 %v5503, %v4765
        %v5505 = vadd.f32 %v5504, %v4769
        %v5506 = vadd.f32 %v5505, %v4773
        %v5507 = vadd.f32 %v5506, %v4777
        %v5508 = vadd.f32 %v5507, %v4781
        %v5509 = vadd.f32 %v5508, %v4785
        %v5510 = vadd.f32 %v5509, %v4789
        %v5511 = vadd.f32 %v5510, %v4793
        %v5512 = vadd.f32 %v5511, %v4797
        %v5513 = vadd.f32 %v5512, %v4801
        %v5514 = vadd.f32 %v5513, %v4805
        %v5515 = vadd.f32 %v5514, %v4809
        %v5516 = vadd.f32 %v5515, %v4813
        %v5517 = vadd.f32 %v5516, %v4817
        %v5518 = vadd.f32 %v5517, %v4821
        %v5519 = vadd.f32 %v5518, %v4825
        %v5520 = vrot.slane %v5519, 4
        %v5521 = vadd.f32 %v5519, %v5520
        %v5522 = vrot.slane %v5521, 2
        %v5523 = vadd.f32 %v5521, %v5522
        %v5524 = vrot.slane %v5523, 1
        %v5525 = vadd.f32 %v5523, %v5524
        %v5526 = vadd.f32 %v4827, %v4831
        %v5527 = vadd.f32 %v5526, %v4835
        %v5528 = vadd.f32 %v5527, %v4839
        %v5529 = vadd.f32 %v5528, %v4843
        %v5530 = vadd.f32 %v5529, %v4847
        %v5531 = vadd.f32 %v5530, %v4851
        %v5532 = vadd.f32 %v5531, %v4855
        %v5533 = vadd.f32 %v5532, %v4859
        %v5534 = vadd.f32 %v5533, %v4863
        %v5535 = vadd.f32 %v5534, %v4867
        %v5536 = vadd.f32 %v5535, %v4871
        %v5537 = vadd.f32 %v5536, %v4875
        %v5538 = vadd.f32 %v5537, %v4879
        %v5539 = vadd.f32 %v5538, %v4883
        %v5540 = vadd.f32 %v5539, %v4887
        %v5541 = vadd.f32 %v5540, %v4891
        %v5542 = vadd.f32 %v5541, %v4895
        %v5543 = vadd.f32 %v5542, %v4899
        %v5544 = vadd.f32 %v5543, %v4903
        %v5545 = vadd.f32 %v5544, %v4907
        %v5546 = vadd.f32 %v5545, %v4911
        %v5547 = vadd.f32 %v5546, %v4915
        %v5548 = vadd.f32 %v5547, %v4919
        %v5549 = vadd.f32 %v5548, %v4923
        %v5550 = vadd.f32 %v5549, %v4927
        %v5551 = vadd.f32 %v5550, %v4931
        %v5552 = vadd.f32 %v5551, %v4935
        %v5553 = vadd.f32 %v5552, %v4939
        %v5554 = vadd.f32 %v5553, %v4943
        %v5555 = vadd.f32 %v5554, %v4947
        %v5556 = vadd.f32 %v5555, %v4951
        %v5557 = vrot.slane %v5556, 4
        %v5558 = vadd.f32 %v5556, %v5557
        %v5559 = vrot.slane %v5558, 2
        %v5560 = vadd.f32 %v5558, %v5559
        %v5561 = vrot.slane %v5560, 1
        %v5562 = vadd.f32 %v5560, %v5561
        %v5563 = vadd.f32 %v4829, %v4833
        %v5564 = vadd.f32 %v5563, %v4837
        %v5565 = vadd.f32 %v5564, %v4841
        %v5566 = vadd.f32 %v5565, %v4845
        %v5567 = vadd.f32 %v5566, %v4849
        %v5568 = vadd.f32 %v5567, %v4853
        %v5569 = vadd.f32 %v5568, %v4857
        %v5570 = vadd.f32 %v5569, %v4861
        %v5571 = vadd.f32 %v5570, %v4865
        %v5572 = vadd.f32 %v5571, %v4869
        %v5573 = vadd.f32 %v5572, %v4873
        %v5574 = vadd.f32 %v5573, %v4877
        %v5575 = vadd.f32 %v5574, %v4881
        %v5576 = vadd.f32 %v5575, %v4885
        %v5577 = vadd.f32 %v5576, %v4889
        %v5578 = vadd.f32 %v5577, %v4893
        %v5579 = vadd.f32 %v5578, %v4897
        %v5580 = vadd.f32 %v5579, %v4901
        %v5581 = vadd.f32 %v5580, %v4905
        %v5582 = vadd.f32 %v5581, %v4909
        %v5583 = vadd.f32 %v5582, %v4913
        %v5584 = vadd.f32 %v5583, %v4917
        %v5585 = vadd.f32 %v5584, %v4921
        %v5586 = vadd.f32 %v5585, %v4925
        %v5587 = vadd.f32 %v5586, %v4929
        %v5588 = vadd.f32 %v5587, %v4933
        %v5589 = vadd.f32 %v5588, %v4937
        %v5590 = vadd.f32 %v5589, %v4941
        %v5591 = vadd.f32 %v5590, %v4945
        %v5592 = vadd.f32 %v5591, %v4949
        %v5593 = vadd.f32 %v5592, %v4953
        %v5594 = vrot.slane %v5593, 4
        %v5595 = vadd.f32 %v5593, %v5594
        %v5596 = vrot.slane %v5595, 2
        %v5597 = vadd.f32 %v5595, %v5596
        %v5598 = vrot.slane %v5597, 1
        %v5599 = vadd.f32 %v5597, %v5598
        %v5600 = vadd.f32 %v4955, %v4959
        %v5601 = vadd.f32 %v5600, %v4963
        %v5602 = vadd.f32 %v5601, %v4967
        %v5603 = vadd.f32 %v5602, %v4971
        %v5604 = vadd.f32 %v5603, %v4975
        %v5605 = vadd.f32 %v5604, %v4979
        %v5606 = vadd.f32 %v5605, %v4983
        %v5607 = vadd.f32 %v5606, %v4987
        %v5608 = vadd.f32 %v5607, %v4991
        %v5609 = vadd.f32 %v5608, %v4995
        %v5610 = vadd.f32 %v5609, %v4999
        %v5611 = vadd.f32 %v5610, %v5003
        %v5612 = vadd.f32 %v5611, %v5007
        %v5613 = vadd.f32 %v5612, %v5011
        %v5614 = vadd.f32 %v5613, %v5015
        %v5615 = vadd.f32 %v5614, %v5019
        %v5616 = vadd.f32 %v5615, %v5023
        %v5617 = vadd.f32 %v5616, %v5027
        %v5618 = vadd.f32 %v5617, %v5031
        %v5619 = vadd.f32 %v5618, %v5035
        %v5620 = vadd.f32 %v5619, %v5039
        %v5621 = vadd.f32 %v5620, %v5043
        %v5622 = vadd.f32 %v5621, %v5047
        %v5623 = vadd.f32 %v5622, %v5051
        %v5624 = vadd.f32 %v5623, %v5055
        %v5625 = vadd.f32 %v5624, %v5059
        %v5626 = vadd.f32 %v5625, %v5063
        %v5627 = vadd.f32 %v5626, %v5067
        %v5628 = vadd.f32 %v5627, %v5071
        %v5629 = vadd.f32 %v5628, %v5075
        %v5630 = vadd.f32 %v5629, %v5079
        %v5631 = vrot.slane %v5630, 4
        %v5632 = vadd.f32 %v5630, %v5631
        %v5633 = vrot.slane %v5632, 2
        %v5634 = vadd.f32 %v5632, %v5633
        %v5635 = vrot.slane %v5634, 1
        %v5636 = vadd.f32 %v5634, %v5635
        %v5637 = vadd.f32 %v4957, %v4961
        %v5638 = vadd.f32 %v5637, %v4965
        %v5639 = vadd.f32 %v5638, %v4969
        %v5640 = vadd.f32 %v5639, %v4973
        %v5641 = vadd.f32 %v5640, %v4977
        %v5642 = vadd.f32 %v5641, %v4981
        %v5643 = vadd.f32 %v5642, %v4985
        %v5644 = vadd.f32 %v5643, %v4989
        %v5645 = vadd.f32 %v5644, %v4993
        %v5646 = vadd.f32 %v5645, %v4997
        %v5647 = vadd.f32 %v5646, %v5001
        %v5648 = vadd.f32 %v5647, %v5005
        %v5649 = vadd.f32 %v5648, %v5009
        %v5650 = vadd.f32 %v5649, %v5013
        %v5651 = vadd.f32 %v5650, %v5017
        %v5652 = vadd.f32 %v5651, %v5021
        %v5653 = vadd.f32 %v5652, %v5025
        %v5654 = vadd.f32 %v5653, %v5029
        %v5655 = vadd.f32 %v5654, %v5033
        %v5656 = vadd.f32 %v5655, %v5037
        %v5657 = vadd.f32 %v5656, %v5041
        %v5658 = vadd.f32 %v5657, %v5045
        %v5659 = vadd.f32 %v5658, %v5049
        %v5660 = vadd.f32 %v5659, %v5053
        %v5661 = vadd.f32 %v5660, %v5057
        %v5662 = vadd.f32 %v5661, %v5061
        %v5663 = vadd.f32 %v5662, %v5065
        %v5664 = vadd.f32 %v5663, %v5069
        %v5665 = vadd.f32 %v5664, %v5073
        %v5666 = vadd.f32 %v5665, %v5077
        %v5667 = vadd.f32 %v5666, %v5081
        %v5668 = vrot.slane %v5667, 4
        %v5669 = vadd.f32 %v5667, %v5668
        %v5670 = vrot.slane %v5669, 2
        %v5671 = vadd.f32 %v5669, %v5670
        %v5672 = vrot.slane %v5671, 1
        %v5673 = vadd.f32 %v5671, %v5672
        %v5674 = vpack.c.bf16 %v4063, %v4059
        %v5675 = vpack.c.bf16 %v4065, %v4061
        %v5676 = vpack.c.bf16 %v4071, %v4067
        %v5677 = vpack.c.bf16 %v4073, %v4069
        %v5678 = vpack.c.bf16 %v4079, %v4075
        %v5679 = vpack.c.bf16 %v4081, %v4077
        %v5680 = vpack.c.bf16 %v4087, %v4083
        %v5681 = vpack.c.bf16 %v4089, %v4085
        %v5682 = vpack.c.bf16 %v4095, %v4091
        %v5683 = vpack.c.bf16 %v4097, %v4093
        %v5684 = vpack.c.bf16 %v4103, %v4099
        %v5685 = vpack.c.bf16 %v4105, %v4101
        %v5686 = vpack.c.bf16 %v4111, %v4107
        %v5687 = vpack.c.bf16 %v4113, %v4109
        %v5688 = vpack.c.bf16 %v4119, %v4115
        %v5689 = vpack.c.bf16 %v4121, %v4117
        %v5690 = vpack.c.bf16 %v4127, %v4123
        %v5691 = vpack.c.bf16 %v4129, %v4125
        %v5692 = vpack.c.bf16 %v4135, %v4131
        %v5693 = vpack.c.bf16 %v4137, %v4133
        %v5694 = vpack.c.bf16 %v4143, %v4139
        %v5695 = vpack.c.bf16 %v4145, %v4141
        %v5696 = vpack.c.bf16 %v4151, %v4147
        %v5697 = vpack.c.bf16 %v4153, %v4149
        %v5698 = vpack.c.bf16 %v4159, %v4155
        %v5699 = vpack.c.bf16 %v4161, %v4157
        %v5700 = vpack.c.bf16 %v4167, %v4163
        %v5701 = vpack.c.bf16 %v4169, %v4165
        %v5702 = vpack.c.bf16 %v4175, %v4171
        %v5703 = vpack.c.bf16 %v4177, %v4173
        %v5704 = vpack.c.bf16 %v4183, %v4179
        %v5705 = vpack.c.bf16 %v4185, %v4181
        %v5706 = vpack.c.bf16 %v4191, %v4187
        %v5707 = vpack.c.bf16 %v4193, %v4189
        %v5708 = vpack.c.bf16 %v4199, %v4195
        %v5709 = vpack.c.bf16 %v4201, %v4197
        %v5710 = vpack.c.bf16 %v4207, %v4203
        %v5711 = vpack.c.bf16 %v4209, %v4205
        %v5712 = vpack.c.bf16 %v4215, %v4211
        %v5713 = vpack.c.bf16 %v4217, %v4213
        %v5714 = vpack.c.bf16 %v4223, %v4219
        %v5715 = vpack.c.bf16 %v4225, %v4221
        %v5716 = vpack.c.bf16 %v4231, %v4227
        %v5717 = vpack.c.bf16 %v4233, %v4229
        %v5718 = vpack.c.bf16 %v4239, %v4235
        %v5719 = vpack.c.bf16 %v4241, %v4237
        %v5720 = vpack.c.bf16 %v4247, %v4243
        %v5721 = vpack.c.bf16 %v4249, %v4245
        %v5722 = vpack.c.bf16 %v4255, %v4251
        %v5723 = vpack.c.bf16 %v4257, %v4253
        %v5724 = vpack.c.bf16 %v4263, %v4259
        %v5725 = vpack.c.bf16 %v4265, %v4261
        %v5726 = vpack.c.bf16 %v4271, %v4267
        %v5727 = vpack.c.bf16 %v4273, %v4269
        %v5728 = vpack.c.bf16 %v4279, %v4275
        %v5729 = vpack.c.bf16 %v4281, %v4277
        %v5730 = vpack.c.bf16 %v4287, %v4283
        %v5731 = vpack.c.bf16 %v4289, %v4285
        %v5732 = vpack.c.bf16 %v4295, %v4291
        %v5733 = vpack.c.bf16 %v4297, %v4293
        %v5734 = vpack.c.bf16 %v4303, %v4299
        %v5735 = vpack.c.bf16 %v4305, %v4301
        %v5736 = vpack.c.bf16 %v4311, %v4307
        %v5737 = vpack.c.bf16 %v4313, %v4309
        %v5738 = vpack.c.bf16 %v4319, %v4315
        %v5739 = vpack.c.bf16 %v4321, %v4317
        %v5740 = vpack.c.bf16 %v4327, %v4323
        %v5741 = vpack.c.bf16 %v4329, %v4325
        %v5742 = vpack.c.bf16 %v4335, %v4331
        %v5743 = vpack.c.bf16 %v4337, %v4333
        %v5744 = vpack.c.bf16 %v4343, %v4339
        %v5745 = vpack.c.bf16 %v4345, %v4341
        %v5746 = vpack.c.bf16 %v4351, %v4347
        %v5747 = vpack.c.bf16 %v4353, %v4349
        %v5748 = vpack.c.bf16 %v4359, %v4355
        %v5749 = vpack.c.bf16 %v4361, %v4357
        %v5750 = vpack.c.bf16 %v4367, %v4363
        %v5751 = vpack.c.bf16 %v4369, %v4365
        %v5752 = vpack.c.bf16 %v4375, %v4371
        %v5753 = vpack.c.bf16 %v4377, %v4373
        %v5754 = vpack.c.bf16 %v4383, %v4379
        %v5755 = vpack.c.bf16 %v4385, %v4381
        %v5756 = vpack.c.bf16 %v4391, %v4387
        %v5757 = vpack.c.bf16 %v4393, %v4389
        %v5758 = vpack.c.bf16 %v4399, %v4395
        %v5759 = vpack.c.bf16 %v4401, %v4397
        %v5760 = vpack.c.bf16 %v4407, %v4403
        %v5761 = vpack.c.bf16 %v4409, %v4405
        %v5762 = vpack.c.bf16 %v4415, %v4411
        %v5763 = vpack.c.bf16 %v4417, %v4413
        %v5764 = vpack.c.bf16 %v4423, %v4419
        %v5765 = vpack.c.bf16 %v4425, %v4421
        %v5766 = vpack.c.bf16 %v4431, %v4427
        %v5767 = vpack.c.bf16 %v4433, %v4429
        %v5768 = vpack.c.bf16 %v4439, %v4435
        %v5769 = vpack.c.bf16 %v4441, %v4437
        %v5770 = vpack.c.bf16 %v4447, %v4443
        %v5771 = vpack.c.bf16 %v4449, %v4445
        %v5772 = vpack.c.bf16 %v4455, %v4451
        %v5773 = vpack.c.bf16 %v4457, %v4453
        %v5774 = vpack.c.bf16 %v4463, %v4459
        %v5775 = vpack.c.bf16 %v4465, %v4461
        %v5776 = vpack.c.bf16 %v4471, %v4467
        %v5777 = vpack.c.bf16 %v4473, %v4469
        %v5778 = vpack.c.bf16 %v4479, %v4475
        %v5779 = vpack.c.bf16 %v4481, %v4477
        %v5780 = vpack.c.bf16 %v4487, %v4483
        %v5781 = vpack.c.bf16 %v4489, %v4485
        %v5782 = vpack.c.bf16 %v4495, %v4491
        %v5783 = vpack.c.bf16 %v4497, %v4493
        %v5784 = vpack.c.bf16 %v4503, %v4499
        %v5785 = vpack.c.bf16 %v4505, %v4501
        %v5786 = vpack.c.bf16 %v4511, %v4507
        %v5787 = vpack.c.bf16 %v4513, %v4509
        %v5788 = vpack.c.bf16 %v4519, %v4515
        %v5789 = vpack.c.bf16 %v4521, %v4517
        %v5790 = vpack.c.bf16 %v4527, %v4523
        %v5791 = vpack.c.bf16 %v4529, %v4525
        %v5792 = vpack.c.bf16 %v4535, %v4531
        %v5793 = vpack.c.bf16 %v4537, %v4533
        %v5794 = vpack.c.bf16 %v4543, %v4539
        %v5795 = vpack.c.bf16 %v4545, %v4541
        %v5796 = vpack.c.bf16 %v4551, %v4547
        %v5797 = vpack.c.bf16 %v4553, %v4549
        %v5798 = vpack.c.bf16 %v4559, %v4555
        %v5799 = vpack.c.bf16 %v4561, %v4557
        %v5800 = vpack.c.bf16 %v4567, %v4563
        %v5801 = vpack.c.bf16 %v4569, %v4565
        %v5802 = vpack.c.bf16 %v4575, %v4571
        %v5803 = vpack.c.bf16 %v4577, %v4573
        %v5804 = vpack.c.bf16 %v4583, %v4579
        %v5805 = vpack.c.bf16 %v4585, %v4581
        %v5806 = vpack.c.bf16 %v4591, %v4587
        %v5807 = vpack.c.bf16 %v4593, %v4589
        %v5808 = vpack.c.bf16 %v4599, %v4595
        %v5809 = vpack.c.bf16 %v4601, %v4597
        %v5810 = vpack.c.bf16 %v4607, %v4603
        %v5811 = vpack.c.bf16 %v4609, %v4605
        %v5812 = vpack.c.bf16 %v4615, %v4611
        %v5813 = vpack.c.bf16 %v4617, %v4613
        %v5814 = vpack.c.bf16 %v4623, %v4619
        %v5815 = vpack.c.bf16 %v4625, %v4621
        %v5816 = vpack.c.bf16 %v4631, %v4627
        %v5817 = vpack.c.bf16 %v4633, %v4629
        %v5818 = vpack.c.bf16 %v4639, %v4635
        %v5819 = vpack.c.bf16 %v4641, %v4637
        %v5820 = vpack.c.bf16 %v4647, %v4643
        %v5821 = vpack.c.bf16 %v4649, %v4645
        %v5822 = vpack.c.bf16 %v4655, %v4651
        %v5823 = vpack.c.bf16 %v4657, %v4653
        %v5824 = vpack.c.bf16 %v4663, %v4659
        %v5825 = vpack.c.bf16 %v4665, %v4661
        %v5826 = vpack.c.bf16 %v4671, %v4667
        %v5827 = vpack.c.bf16 %v4673, %v4669
        %v5828 = vpack.c.bf16 %v4679, %v4675
        %v5829 = vpack.c.bf16 %v4681, %v4677
        %v5830 = vpack.c.bf16 %v4687, %v4683
        %v5831 = vpack.c.bf16 %v4689, %v4685
        %v5832 = vpack.c.bf16 %v4695, %v4691
        %v5833 = vpack.c.bf16 %v4697, %v4693
        %v5834 = vpack.c.bf16 %v4703, %v4699
        %v5835 = vpack.c.bf16 %v4705, %v4701
        %v5836 = vpack.c.bf16 %v4711, %v4707
        %v5837 = vpack.c.bf16 %v4713, %v4709
        %v5838 = vpack.c.bf16 %v4719, %v4715
        %v5839 = vpack.c.bf16 %v4721, %v4717
        %v5840 = vpack.c.bf16 %v4727, %v4723
        %v5841 = vpack.c.bf16 %v4729, %v4725
        %v5842 = vpack.c.bf16 %v4735, %v4731
        %v5843 = vpack.c.bf16 %v4737, %v4733
        %v5844 = vpack.c.bf16 %v4743, %v4739
        %v5845 = vpack.c.bf16 %v4745, %v4741
        %v5846 = vpack.c.bf16 %v4751, %v4747
        %v5847 = vpack.c.bf16 %v4753, %v4749
        %v5848 = vpack.c.bf16 %v4759, %v4755
        %v5849 = vpack.c.bf16 %v4761, %v4757
        %v5850 = vpack.c.bf16 %v4767, %v4763
        %v5851 = vpack.c.bf16 %v4769, %v4765
        %v5852 = vpack.c.bf16 %v4775, %v4771
        %v5853 = vpack.c.bf16 %v4777, %v4773
        %v5854 = vpack.c.bf16 %v4783, %v4779
        %v5855 = vpack.c.bf16 %v4785, %v4781
        %v5856 = vpack.c.bf16 %v4791, %v4787
        %v5857 = vpack.c.bf16 %v4793, %v4789
        %v5858 = vpack.c.bf16 %v4799, %v4795
        %v5859 = vpack.c.bf16 %v4801, %v4797
        %v5860 = vpack.c.bf16 %v4807, %v4803
        %v5861 = vpack.c.bf16 %v4809, %v4805
        %v5862 = vpack.c.bf16 %v4815, %v4811
        %v5863 = vpack.c.bf16 %v4817, %v4813
        %v5864 = vpack.c.bf16 %v4823, %v4819
        %v5865 = vpack.c.bf16 %v4825, %v4821
        %v5866 = vpack.c.bf16 %v4831, %v4827
        %v5867 = vpack.c.bf16 %v4833, %v4829
        %v5868 = vpack.c.bf16 %v4839, %v4835
        %v5869 = vpack.c.bf16 %v4841, %v4837
        %v5870 = vpack.c.bf16 %v4847, %v4843
        %v5871 = vpack.c.bf16 %v4849, %v4845
        %v5872 = vpack.c.bf16 %v4855, %v4851
        %v5873 = vpack.c.bf16 %v4857, %v4853
        %v5874 = vpack.c.bf16 %v4863, %v4859
        %v5875 = vpack.c.bf16 %v4865, %v4861
        %v5876 = vpack.c.bf16 %v4871, %v4867
        %v5877 = vpack.c.bf16 %v4873, %v4869
        %v5878 = vpack.c.bf16 %v4879, %v4875
        %v5879 = vpack.c.bf16 %v4881, %v4877
        %v5880 = vpack.c.bf16 %v4887, %v4883
        %v5881 = vpack.c.bf16 %v4889, %v4885
        %v5882 = vpack.c.bf16 %v4895, %v4891
        %v5883 = vpack.c.bf16 %v4897, %v4893
        %v5884 = vpack.c.bf16 %v4903, %v4899
        %v5885 = vpack.c.bf16 %v4905, %v4901
        %v5886 = vpack.c.bf16 %v4911, %v4907
        %v5887 = vpack.c.bf16 %v4913, %v4909
        %v5888 = vpack.c.bf16 %v4919, %v4915
        %v5889 = vpack.c.bf16 %v4921, %v4917
        %v5890 = vpack.c.bf16 %v4927, %v4923
        %v5891 = vpack.c.bf16 %v4929, %v4925
        %v5892 = vpack.c.bf16 %v4935, %v4931
        %v5893 = vpack.c.bf16 %v4937, %v4933
        %v5894 = vpack.c.bf16 %v4943, %v4939
        %v5895 = vpack.c.bf16 %v4945, %v4941
        %v5896 = vpack.c.bf16 %v4951, %v4947
        %v5897 = vpack.c.bf16 %v4953, %v4949
        %v5898 = vpack.c.bf16 %v4959, %v4955
        %v5899 = vpack.c.bf16 %v4961, %v4957
        %v5900 = vpack.c.bf16 %v4967, %v4963
        %v5901 = vpack.c.bf16 %v4969, %v4965
        %v5902 = vpack.c.bf16 %v4975, %v4971
        %v5903 = vpack.c.bf16 %v4977, %v4973
        %v5904 = vpack.c.bf16 %v4983, %v4979
        %v5905 = vpack.c.bf16 %v4985, %v4981
        %v5906 = vpack.c.bf16 %v4991, %v4987
        %v5907 = vpack.c.bf16 %v4993, %v4989
        %v5908 = vpack.c.bf16 %v4999, %v4995
        %v5909 = vpack.c.bf16 %v5001, %v4997
        %v5910 = vpack.c.bf16 %v5007, %v5003
        %v5911 = vpack.c.bf16 %v5009, %v5005
        %v5912 = vpack.c.bf16 %v5015, %v5011
        %v5913 = vpack.c.bf16 %v5017, %v5013
        %v5914 = vpack.c.bf16 %v5023, %v5019
        %v5915 = vpack.c.bf16 %v5025, %v5021
        %v5916 = vpack.c.bf16 %v5031, %v5027
        %v5917 = vpack.c.bf16 %v5033, %v5029
        %v5918 = vpack.c.bf16 %v5039, %v5035
        %v5919 = vpack.c.bf16 %v5041, %v5037
        %v5920 = vpack.c.bf16 %v5047, %v5043
        %v5921 = vpack.c.bf16 %v5049, %v5045
        %v5922 = vpack.c.bf16 %v5055, %v5051
        %v5923 = vpack.c.bf16 %v5057, %v5053
        %v5924 = vpack.c.bf16 %v5063, %v5059
        %v5925 = vpack.c.bf16 %v5065, %v5061
        %v5926 = vpack.c.bf16 %v5071, %v5067
        %v5927 = vpack.c.bf16 %v5073, %v5069
        %v5928 = vpack.c.bf16 %v5079, %v5075
        %v5929 = vpack.c.bf16 %v5081, %v5077
        %v5931 = vunpack.c.l.s4 1983009808
        %v5932 = vunpack.c.0.s8 %v5931
        %v5933 = vlaneseq
        %v5934 = vshrl.u32 %v5933, 7
        %v5935 = vsub.s32 %v5932, %v5934
        %v5936 = vrot.slane %v548, %v5935
        %v5937 = vcombine.high %v5936, %v5936
        %5940 = vmatprep.subr.bf16.mxu0 %v5675
        %5941 = vmatpush1.bf16.msra.mxu0 %v5674
        %5942 = vmatprep.subr.bf16.mxu0 %v5677
        %5943 = vmatpush1.bf16.msra.mxu0 %v5676
        %5944 = vmatprep.subr.bf16.mxu0 %v5679
        %5945 = vmatpush1.bf16.msra.mxu0 %v5678
        %5946 = vmatprep.subr.bf16.mxu0 %v5681
        %5947 = vmatpush1.bf16.msra.mxu0 %v5680
        %5948 = vmatprep.subr.bf16.mxu0 %v5683
        %5949 = vmatpush1.bf16.msra.mxu0 %v5682
        %5950 = vmatprep.subr.bf16.mxu0 %v5685
        %5951 = vmatpush1.bf16.msra.mxu0 %v5684
        %5952 = vmatprep.subr.bf16.mxu0 %v5687
        %5953 = vmatpush1.bf16.msra.mxu0 %v5686
        %5954 = vmatprep.subr.bf16.mxu0 %v5689
        %5955 = vmatpush1.bf16.msra.mxu0 %v5688
        %5956 = vmatprep.subr.bf16.mxu0 %v5691
        %5957 = vmatpush1.bf16.msra.mxu0 %v5690
        %5958 = vmatprep.subr.bf16.mxu0 %v5693
        %5959 = vmatpush1.bf16.msra.mxu0 %v5692
        %5960 = vmatprep.subr.bf16.mxu0 %v5695
        %5961 = vmatpush1.bf16.msra.mxu0 %v5694
        %5962 = vmatprep.subr.bf16.mxu0 %v5697
        %5963 = vmatpush1.bf16.msra.mxu0 %v5696
        %5964 = vmatprep.subr.bf16.mxu0 %v5699
        %5965 = vmatpush1.bf16.msra.mxu0 %v5698
        %5966 = vmatprep.subr.bf16.mxu0 %v5701
        %5967 = vmatpush1.bf16.msra.mxu0 %v5700
        %5968 = vmatprep.subr.bf16.mxu0 %v5703
        %5969 = vmatpush1.bf16.msra.mxu0 %v5702
        %5970 = vmatprep.subr.bf16.mxu0 %v5705
        %5971 = vmatpush1.bf16.msra.mxu0 %v5704
        %5972 = vmatprep.mubr.bf16.mxu0 %v5937
        %5973 = vmatmul.mubr.bf16.gmra.mrb[0].mxu0 %v5936
        %v5974 = vpop.f32.mrb[0].mxu0
        %v5975 = vadd.f32 0.0, %v5974
        %v5976 = vpop.f32.mrb[0].mxu0
        %v5977 = vadd.f32 0.0, %v5976
        %v5978 = vpop.f32.mrb[0].mxu0
        %v5979 = vpop.f32.mrb[0].mxu0
        %5980 = vdwg.mxu0
        %v5982 = vunpack.c.l.s4 1983009808
        %v5983 = vunpack.c.0.s8 %v5982
        %v5984 = vlaneseq
        %v5985 = vshrl.u32 %v5984, 7
        %v5986 = vsub.s32 %v5983, %v5985
        %v5987 = vrot.slane %v556, %v5986
        %v5988 = vcombine.high %v5987, %v5987
        %5991 = vmatprep.subr.bf16.mxu0 %v5707
        %5992 = vmatpush1.bf16.msra.mxu0 %v5706
        %5993 = vmatprep.subr.bf16.mxu0 %v5709
        %5994 = vmatpush1.bf16.msra.mxu0 %v5708
        %5995 = vmatprep.subr.bf16.mxu0 %v5711
        %5996 = vmatpush1.bf16.msra.mxu0 %v5710
        %5997 = vmatprep.subr.bf16.mxu0 %v5713
        %5998 = vmatpush1.bf16.msra.mxu0 %v5712
        %5999 = vmatprep.subr.bf16.mxu0 %v5715
        %6000 = vmatpush1.bf16.msra.mxu0 %v5714
        %6001 = vmatprep.subr.bf16.mxu0 %v5717
        %6002 = vmatpush1.bf16.msra.mxu0 %v5716
        %6003 = vmatprep.subr.bf16.mxu0 %v5719
        %6004 = vmatpush1.bf16.msra.mxu0 %v5718
        %6005 = vmatprep.subr.bf16.mxu0 %v5721
        %6006 = vmatpush1.bf16.msra.mxu0 %v5720
        %6007 = vmatprep.subr.bf16.mxu0 %v5723
        %6008 = vmatpush1.bf16.msra.mxu0 %v5722
        %6009 = vmatprep.subr.bf16.mxu0 %v5725
        %6010 = vmatpush1.bf16.msra.mxu0 %v5724
        %6011 = vmatprep.subr.bf16.mxu0 %v5727
        %6012 = vmatpush1.bf16.msra.mxu0 %v5726
        %6013 = vmatprep.subr.bf16.mxu0 %v5729
        %6014 = vmatpush1.bf16.msra.mxu0 %v5728
        %6015 = vmatprep.subr.bf16.mxu0 %v5731
        %6016 = vmatpush1.bf16.msra.mxu0 %v5730
        %6017 = vmatprep.subr.bf16.mxu0 %v5733
        %6018 = vmatpush1.bf16.msra.mxu0 %v5732
        %6019 = vmatprep.subr.bf16.mxu0 %v5735
        %6020 = vmatpush1.bf16.msra.mxu0 %v5734
        %6021 = vmatprep.subr.bf16.mxu0 %v5737
        %6022 = vmatpush1.bf16.msra.mxu0 %v5736
        %6023 = vmatprep.mubr.bf16.mxu0 %v5988
        %6024 = vmatmul.mubr.bf16.gmra.mrb[0].mxu0 %v5987
        %v6025 = vpop.f32.mrb[0].mxu0
        %v6026 = vadd.f32 0.0, %v6025
        %v6027 = vpop.f32.mrb[0].mxu0
        %v6028 = vadd.f32 0.0, %v6027
        %v6029 = vpop.f32.mrb[0].mxu0
        %v6030 = vpop.f32.mrb[0].mxu0
        %6031 = vdwg.mxu0
        %v6033 = vunpack.c.l.s4 1983009808
        %v6034 = vunpack.c.0.s8 %v6033
        %v6035 = vlaneseq
        %v6036 = vshrl.u32 %v6035, 7
        %v6037 = vsub.s32 %v6034, %v6036
        %v6038 = vrot.slane %v555, %v6037
        %v6039 = vcombine.high %v6038, %v6038
        %6042 = vmatprep.subr.bf16.mxu0 %v5739
        %6043 = vmatpush1.bf16.msra.mxu0 %v5738
        %6044 = vmatprep.subr.bf16.mxu0 %v5741
        %6045 = vmatpush1.bf16.msra.mxu0 %v5740
        %6046 = vmatprep.subr.bf16.mxu0 %v5743
        %6047 = vmatpush1.bf16.msra.mxu0 %v5742
        %6048 = vmatprep.subr.bf16.mxu0 %v5745
        %6049 = vmatpush1.bf16.msra.mxu0 %v5744
        %6050 = vmatprep.subr.bf16.mxu0 %v5747
        %6051 = vmatpush1.bf16.msra.mxu0 %v5746
        %6052 = vmatprep.subr.bf16.mxu0 %v5749
        %6053 = vmatpush1.bf16.msra.mxu0 %v5748
        %6054 = vmatprep.subr.bf16.mxu0 %v5751
        %6055 = vmatpush1.bf16.msra.mxu0 %v5750
        %6056 = vmatprep.subr.bf16.mxu0 %v5753
        %6057 = vmatpush1.bf16.msra.mxu0 %v5752
        %6058 = vmatprep.subr.bf16.mxu0 %v5755
        %6059 = vmatpush1.bf16.msra.mxu0 %v5754
        %6060 = vmatprep.subr.bf16.mxu0 %v5757
        %6061 = vmatpush1.bf16.msra.mxu0 %v5756
        %6062 = vmatprep.subr.bf16.mxu0 %v5759
        %6063 = vmatpush1.bf16.msra.mxu0 %v5758
        %6064 = vmatprep.subr.bf16.mxu0 %v5761
        %6065 = vmatpush1.bf16.msra.mxu0 %v5760
        %6066 = vmatprep.subr.bf16.mxu0 %v5763
        %6067 = vmatpush1.bf16.msra.mxu0 %v5762
        %6068 = vmatprep.subr.bf16.mxu0 %v5765
        %6069 = vmatpush1.bf16.msra.mxu0 %v5764
        %6070 = vmatprep.subr.bf16.mxu0 %v5767
        %6071 = vmatpush1.bf16.msra.mxu0 %v5766
        %6072 = vmatprep.subr.bf16.mxu0 %v5769
        %6073 = vmatpush1.bf16.msra.mxu0 %v5768
        %6074 = vmatprep.mubr.bf16.mxu0 %v6039
        %6075 = vmatmul.mubr.bf16.gmra.mrb[0].mxu0 %v6038
        %v6076 = vpop.f32.mrb[0].mxu0
        %v6077 = vadd.f32 0.0, %v6076
        %v6078 = vpop.f32.mrb[0].mxu0
        %v6079 = vadd.f32 0.0, %v6078
        %v6080 = vpop.f32.mrb[0].mxu0
        %v6081 = vpop.f32.mrb[0].mxu0
        %6082 = vdwg.mxu0
        %v6084 = vunpack.c.l.s4 1983009808
        %v6085 = vunpack.c.0.s8 %v6084
        %v6086 = vlaneseq
        %v6087 = vshrl.u32 %v6086, 7
        %v6088 = vsub.s32 %v6085, %v6087
        %v6089 = vrot.slane %v557, %v6088
        %v6090 = vcombine.high %v6089, %v6089
        %6093 = vmatprep.subr.bf16.mxu0 %v5771
        %6094 = vmatpush1.bf16.msra.mxu0 %v5770
        %6095 = vmatprep.subr.bf16.mxu0 %v5773
        %6096 = vmatpush1.bf16.msra.mxu0 %v5772
        %6097 = vmatprep.subr.bf16.mxu0 %v5775
        %6098 = vmatpush1.bf16.msra.mxu0 %v5774
        %6099 = vmatprep.subr.bf16.mxu0 %v5777
        %6100 = vmatpush1.bf16.msra.mxu0 %v5776
        %6101 = vmatprep.subr.bf16.mxu0 %v5779
        %6102 = vmatpush1.bf16.msra.mxu0 %v5778
        %6103 = vmatprep.subr.bf16.mxu0 %v5781
        %6104 = vmatpush1.bf16.msra.mxu0 %v5780
        %6105 = vmatprep.subr.bf16.mxu0 %v5783
        %6106 = vmatpush1.bf16.msra.mxu0 %v5782
        %6107 = vmatprep.subr.bf16.mxu0 %v5785
        %6108 = vmatpush1.bf16.msra.mxu0 %v5784
        %6109 = vmatprep.subr.bf16.mxu0 %v5787
        %6110 = vmatpush1.bf16.msra.mxu0 %v5786
        %6111 = vmatprep.subr.bf16.mxu0 %v5789
        %6112 = vmatpush1.bf16.msra.mxu0 %v5788
        %6113 = vmatprep.subr.bf16.mxu0 %v5791
        %6114 = vmatpush1.bf16.msra.mxu0 %v5790
        %6115 = vmatprep.subr.bf16.mxu0 %v5793
        %6116 = vmatpush1.bf16.msra.mxu0 %v5792
        %6117 = vmatprep.subr.bf16.mxu0 %v5795
        %6118 = vmatpush1.bf16.msra.mxu0 %v5794
        %6119 = vmatprep.subr.bf16.mxu0 %v5797
        %6120 = vmatpush1.bf16.msra.mxu0 %v5796
        %6121 = vmatprep.subr.bf16.mxu0 %v5799
        %6122 = vmatpush1.bf16.msra.mxu0 %v5798
        %6123 = vmatprep.subr.bf16.mxu0 %v5801
        %6124 = vmatpush1.bf16.msra.mxu0 %v5800
        %6125 = vmatprep.mubr.bf16.mxu0 %v6090
        %6126 = vmatmul.mubr.bf16.gmra.mrb[0].mxu0 %v6089
        %v6127 = vpop.f32.mrb[0].mxu0
        %v6128 = vadd.f32 0.0, %v6127
        %v6129 = vpop.f32.mrb[0].mxu0
        %v6130 = vadd.f32 0.0, %v6129
        %v6131 = vpop.f32.mrb[0].mxu0
        %v6132 = vpop.f32.mrb[0].mxu0
        %6133 = vdwg.mxu0
        %v6135 = vunpack.c.l.s4 1983009808
        %v6136 = vunpack.c.0.s8 %v6135
        %v6137 = vlaneseq
        %v6138 = vshrl.u32 %v6137, 7
        %v6139 = vsub.s32 %v6136, %v6138
        %v6140 = vrot.slane %v566, %v6139
        %v6141 = vcombine.high %v6140, %v6140
        %6144 = vmatprep.subr.bf16.mxu0 %v5803
        %6145 = vmatpush1.bf16.msra.mxu0 %v5802
        %6146 = vmatprep.subr.bf16.mxu0 %v5805
        %6147 = vmatpush1.bf16.msra.mxu0 %v5804
        %6148 = vmatprep.subr.bf16.mxu0 %v5807
        %6149 = vmatpush1.bf16.msra.mxu0 %v5806
        %6150 = vmatprep.subr.bf16.mxu0 %v5809
        %6151 = vmatpush1.bf16.msra.mxu0 %v5808
        %6152 = vmatprep.subr.bf16.mxu0 %v5811
        %6153 = vmatpush1.bf16.msra.mxu0 %v5810
        %6154 = vmatprep.subr.bf16.mxu0 %v5813
        %6155 = vmatpush1.bf16.msra.mxu0 %v5812
        %6156 = vmatprep.subr.bf16.mxu0 %v5815
        %6157 = vmatpush1.bf16.msra.mxu0 %v5814
        %6158 = vmatprep.subr.bf16.mxu0 %v5817
        %6159 = vmatpush1.bf16.msra.mxu0 %v5816
        %6160 = vmatprep.subr.bf16.mxu0 %v5819
        %6161 = vmatpush1.bf16.msra.mxu0 %v5818
        %6162 = vmatprep.subr.bf16.mxu0 %v5821
        %6163 = vmatpush1.bf16.msra.mxu0 %v5820
        %6164 = vmatprep.subr.bf16.mxu0 %v5823
        %6165 = vmatpush1.bf16.msra.mxu0 %v5822
        %6166 = vmatprep.subr.bf16.mxu0 %v5825
        %6167 = vmatpush1.bf16.msra.mxu0 %v5824
        %6168 = vmatprep.subr.bf16.mxu0 %v5827
        %6169 = vmatpush1.bf16.msra.mxu0 %v5826
        %6170 = vmatprep.subr.bf16.mxu0 %v5829
        %6171 = vmatpush1.bf16.msra.mxu0 %v5828
        %6172 = vmatprep.subr.bf16.mxu0 %v5831
        %6173 = vmatpush1.bf16.msra.mxu0 %v5830
        %6174 = vmatprep.subr.bf16.mxu0 %v5833
        %6175 = vmatpush1.bf16.msra.mxu0 %v5832
        %6176 = vmatprep.mubr.bf16.mxu0 %v6141
        %6177 = vmatmul.mubr.bf16.gmra.mrb[0].mxu0 %v6140
        %v6178 = vpop.f32.mrb[0].mxu0
        %v6179 = vadd.f32 0.0, %v6178
        %v6180 = vpop.f32.mrb[0].mxu0
        %v6181 = vadd.f32 0.0, %v6180
        %v6182 = vpop.f32.mrb[0].mxu0
        %v6183 = vpop.f32.mrb[0].mxu0
        %6184 = vdwg.mxu0
        %v6186 = vunpack.c.l.s4 1983009808
        %v6187 = vunpack.c.0.s8 %v6186
        %v6188 = vlaneseq
        %v6189 = vshrl.u32 %v6188, 7
        %v6190 = vsub.s32 %v6187, %v6189
        %v6191 = vrot.slane %v574, %v6190
        %v6192 = vcombine.high %v6191, %v6191
        %6195 = vmatprep.subr.bf16.mxu0 %v5835
        %6196 = vmatpush1.bf16.msra.mxu0 %v5834
        %6197 = vmatprep.subr.bf16.mxu0 %v5837
        %6198 = vmatpush1.bf16.msra.mxu0 %v5836
        %6199 = vmatprep.subr.bf16.mxu0 %v5839
        %6200 = vmatpush1.bf16.msra.mxu0 %v5838
        %6201 = vmatprep.subr.bf16.mxu0 %v5841
        %6202 = vmatpush1.bf16.msra.mxu0 %v5840
        %6203 = vmatprep.subr.bf16.mxu0 %v5843
        %6204 = vmatpush1.bf16.msra.mxu0 %v5842
        %6205 = vmatprep.subr.bf16.mxu0 %v5845
        %6206 = vmatpush1.bf16.msra.mxu0 %v5844
        %6207 = vmatprep.subr.bf16.mxu0 %v5847
        %6208 = vmatpush1.bf16.msra.mxu0 %v5846
        %6209 = vmatprep.subr.bf16.mxu0 %v5849
        %6210 = vmatpush1.bf16.msra.mxu0 %v5848
        %6211 = vmatprep.subr.bf16.mxu0 %v5851
        %6212 = vmatpush1.bf16.msra.mxu0 %v5850
        %6213 = vmatprep.subr.bf16.mxu0 %v5853
        %6214 = vmatpush1.bf16.msra.mxu0 %v5852
        %6215 = vmatprep.subr.bf16.mxu0 %v5855
        %6216 = vmatpush1.bf16.msra.mxu0 %v5854
        %6217 = vmatprep.subr.bf16.mxu0 %v5857
        %6218 = vmatpush1.bf16.msra.mxu0 %v5856
        %6219 = vmatprep.subr.bf16.mxu0 %v5859
        %6220 = vmatpush1.bf16.msra.mxu0 %v5858
        %6221 = vmatprep.subr.bf16.mxu0 %v5861
        %6222 = vmatpush1.bf16.msra.mxu0 %v5860
        %6223 = vmatprep.subr.bf16.mxu0 %v5863
        %6224 = vmatpush1.bf16.msra.mxu0 %v5862
        %6225 = vmatprep.subr.bf16.mxu0 %v5865
        %6226 = vmatpush1.bf16.msra.mxu0 %v5864
        %6227 = vmatprep.mubr.bf16.mxu0 %v6192
        %6228 = vmatmul.mubr.bf16.gmra.mrb[0].mxu0 %v6191
        %v6229 = vpop.f32.mrb[0].mxu0
        %v6230 = vadd.f32 0.0, %v6229
        %v6231 = vpop.f32.mrb[0].mxu0
        %v6232 = vadd.f32 0.0, %v6231
        %v6233 = vpop.f32.mrb[0].mxu0
        %v6234 = vpop.f32.mrb[0].mxu0
        %6235 = vdwg.mxu0
        %v6237 = vunpack.c.l.s4 1983009808
        %v6238 = vunpack.c.0.s8 %v6237
        %v6239 = vlaneseq
        %v6240 = vshrl.u32 %v6239, 7
        %v6241 = vsub.s32 %v6238, %v6240
        %v6242 = vrot.slane %v573, %v6241
        %v6243 = vcombine.high %v6242, %v6242
        %6246 = vmatprep.subr.bf16.mxu0 %v5867
        %6247 = vmatpush1.bf16.msra.mxu0 %v5866
        %6248 = vmatprep.subr.bf16.mxu0 %v5869
        %6249 = vmatpush1.bf16.msra.mxu0 %v5868
        %6250 = vmatprep.subr.bf16.mxu0 %v5871
        %6251 = vmatpush1.bf16.msra.mxu0 %v5870
        %6252 = vmatprep.subr.bf16.mxu0 %v5873
        %6253 = vmatpush1.bf16.msra.mxu0 %v5872
        %6254 = vmatprep.subr.bf16.mxu0 %v5875
        %6255 = vmatpush1.bf16.msra.mxu0 %v5874
        %6256 = vmatprep.subr.bf16.mxu0 %v5877
        %6257 = vmatpush1.bf16.msra.mxu0 %v5876
        %6258 = vmatprep.subr.bf16.mxu0 %v5879
        %6259 = vmatpush1.bf16.msra.mxu0 %v5878
        %6260 = vmatprep.subr.bf16.mxu0 %v5881
        %6261 = vmatpush1.bf16.msra.mxu0 %v5880
        %6262 = vmatprep.subr.bf16.mxu0 %v5883
        %6263 = vmatpush1.bf16.msra.mxu0 %v5882
        %6264 = vmatprep.subr.bf16.mxu0 %v5885
        %6265 = vmatpush1.bf16.msra.mxu0 %v5884
        %6266 = vmatprep.subr.bf16.mxu0 %v5887
        %6267 = vmatpush1.bf16.msra.mxu0 %v5886
        %6268 = vmatprep.subr.bf16.mxu0 %v5889
        %6269 = vmatpush1.bf16.msra.mxu0 %v5888
        %6270 = vmatprep.subr.bf16.mxu0 %v5891
        %6271 = vmatpush1.bf16.msra.mxu0 %v5890
        %6272 = vmatprep.subr.bf16.mxu0 %v5893
        %6273 = vmatpush1.bf16.msra.mxu0 %v5892
        %6274 = vmatprep.subr.bf16.mxu0 %v5895
        %6275 = vmatpush1.bf16.msra.mxu0 %v5894
        %6276 = vmatprep.subr.bf16.mxu0 %v5897
        %6277 = vmatpush1.bf16.msra.mxu0 %v5896
        %6278 = vmatprep.mubr.bf16.mxu0 %v6243
        %6279 = vmatmul.mubr.bf16.gmra.mrb[0].mxu0 %v6242
        %v6280 = vpop.f32.mrb[0].mxu0
        %v6281 = vadd.f32 0.0, %v6280
        %v6282 = vpop.f32.mrb[0].mxu0
        %v6283 = vadd.f32 0.0, %v6282
        %v6284 = vpop.f32.mrb[0].mxu0
        %v6285 = vpop.f32.mrb[0].mxu0
        %6286 = vdwg.mxu0
        %v6288 = vunpack.c.l.s4 1983009808
        %v6289 = vunpack.c.0.s8 %v6288
        %v6290 = vlaneseq
        %v6291 = vshrl.u32 %v6290, 7
        %v6292 = vsub.s32 %v6289, %v6291
        %v6293 = vrot.slane %v575, %v6292
        %v6294 = vcombine.high %v6293, %v6293
        %6297 = vmatprep.subr.bf16.mxu0 %v5899
        %6298 = vmatpush1.bf16.msra.mxu0 %v5898
        %6299 = vmatprep.subr.bf16.mxu0 %v5901
        %6300 = vmatpush1.bf16.msra.mxu0 %v5900
        %6301 = vmatprep.subr.bf16.mxu0 %v5903
        %6302 = vmatpush1.bf16.msra.mxu0 %v5902
        %6303 = vmatprep.subr.bf16.mxu0 %v5905
        %6304 = vmatpush1.bf16.msra.mxu0 %v5904
        %6305 = vmatprep.subr.bf16.mxu0 %v5907
        %6306 = vmatpush1.bf16.msra.mxu0 %v5906
        %6307 = vmatprep.subr.bf16.mxu0 %v5909
        %6308 = vmatpush1.bf16.msra.mxu0 %v5908
        %6309 = vmatprep.subr.bf16.mxu0 %v5911
        %6310 = vmatpush1.bf16.msra.mxu0 %v5910
        %6311 = vmatprep.subr.bf16.mxu0 %v5913
        %6312 = vmatpush1.bf16.msra.mxu0 %v5912
        %6313 = vmatprep.subr.bf16.mxu0 %v5915
        %6314 = vmatpush1.bf16.msra.mxu0 %v5914
        %6315 = vmatprep.subr.bf16.mxu0 %v5917
        %6316 = vmatpush1.bf16.msra.mxu0 %v5916
        %6317 = vmatprep.subr.bf16.mxu0 %v5919
        %6318 = vmatpush1.bf16.msra.mxu0 %v5918
        %6319 = vmatprep.subr.bf16.mxu0 %v5921
        %6320 = vmatpush1.bf16.msra.mxu0 %v5920
        %6321 = vmatprep.subr.bf16.mxu0 %v5923
        %6322 = vmatpush1.bf16.msra.mxu0 %v5922
        %6323 = vmatprep.subr.bf16.mxu0 %v5925
        %6324 = vmatpush1.bf16.msra.mxu0 %v5924
        %6325 = vmatprep.subr.bf16.mxu0 %v5927
        %6326 = vmatpush1.bf16.msra.mxu0 %v5926
        %6327 = vmatprep.subr.bf16.mxu0 %v5929
        %6328 = vmatpush1.bf16.msra.mxu0 %v5928
        %6329 = vmatprep.mubr.bf16.mxu0 %v6294
        %6330 = vmatmul.mubr.bf16.gmra.mrb[0].mxu0 %v6293
        %v6331 = vpop.f32.mrb[0].mxu0
        %v6332 = vadd.f32 0.0, %v6331
        %v6333 = vpop.f32.mrb[0].mxu0
        %v6334 = vadd.f32 0.0, %v6333
        %v6335 = vpop.f32.mrb[0].mxu0
        %v6336 = vpop.f32.mrb[0].mxu0
        %6337 = vdwg.mxu0
        %v6338 = vrcp.pop %v5118
        %v6339 = vrcp.pop %v5155
        %v6340 = vrcp.pop %v5192
        %v6341 = vrcp.pop %v5229
        %v6342 = vrcp.pop %v5266
        %v6343 = vrcp.pop %v5303
        %v6344 = vrcp.pop %v5340
        %v6345 = vrcp.pop %v5377
        %v6346 = vrcp.pop %v5414
        %v6347 = vrcp.pop %v5451
        %v6348 = vrcp.pop %v5488
        %v6349 = vrcp.pop %v5525
        %v6350 = vrcp.pop %v5562
        %v6351 = vrcp.pop %v5599
        %v6352 = vrcp.pop %v5636
        %v6353 = vrcp.pop %v5673
        %v6354 = vmul.f32 %v5975, %v6338
        %v6355 = vmul.f32 %v5977, %v6339
        %v6356 = vmul.f32 %v6026, %v6340
        %v6357 = vmul.f32 %v6028, %v6341
        %v6358 = vmul.f32 %v6077, %v6342
        %v6359 = vmul.f32 %v6079, %v6343
        %v6360 = vmul.f32 %v6128, %v6344
        %v6361 = vmul.f32 %v6130, %v6345
        %v6362 = vmul.f32 %v6179, %v6346
        %v6363 = vmul.f32 %v6181, %v6347
        %v6364 = vmul.f32 %v6230, %v6348
        %v6365 = vmul.f32 %v6232, %v6349
        %v6366 = vmul.f32 %v6281, %v6350
        %v6367 = vmul.f32 %v6283, %v6351
        %v6368 = vmul.f32 %v6332, %v6352
        %v6369 = vmul.f32 %v6334, %v6353
        %s6370 = sld [smem:[#allocation2]]
        %v6387 = vcombine.low %v6354, %v6355
        %v6388 = vcombine.low %v6356, %v6357
        %v6389 = vcombine.low %v6358, %v6359
        %v6390 = vcombine.low %v6360, %v6361
        %v6391 = vcombine.low %v6362, %v6363
        %v6392 = vcombine.low %v6364, %v6365
        %v6393 = vcombine.low %v6366, %v6367
        %v6394 = vcombine.low %v6368, %v6369
        %v6403 = vstv %s6370
        %v6404 = vmul.f32 %v6403, %v6387
        %v6405 = vmul.f32 %v6403, %v6388
        %v6406 = vmul.f32 %v6403, %v6389
        %v6407 = vmul.f32 %v6403, %v6390
        %v6408 = vmul.f32 %v6403, %v6391
        %v6409 = vmul.f32 %v6403, %v6392
        %v6410 = vmul.f32 %v6403, %v6393
        %v6411 = vmul.f32 %v6403, %v6394
        %v6420 = vcombine.low %v198, %v199
        %v6421 = vcombine.high %v198, %v199
        %v6422 = vcombine.low %v200, %v201
        %v6423 = vcombine.high %v200, %v201
        %v6424 = vcombine.low %v202, %v203
        %v6425 = vcombine.high %v202, %v203
        %v6426 = vcombine.low %v204, %v205
        %v6427 = vcombine.high %v204, %v205
        %v6436 = vadd.f32 %v6404, %v6420
        %v6437 = vadd.f32 %v6405, %v6421
        %v6438 = vadd.f32 %v6406, %v6422
        %v6439 = vadd.f32 %v6407, %v6423
        %v6440 = vadd.f32 %v6408, %v6424
        %v6441 = vadd.f32 %v6409, %v6425
        %v6442 = vadd.f32 %v6410, %v6426
        %v6443 = vadd.f32 %v6411, %v6427
        %v6452 = vcombine.low %v6436, %v6437
        %v6453 = vcombine.high %v6436, %v6437
        %v6454 = vcombine.low %v6438, %v6439
        %v6455 = vcombine.high %v6438, %v6439
        %v6456 = vcombine.low %v6440, %v6441
        %v6457 = vcombine.high %v6440, %v6441
        %v6458 = vcombine.low %v6442, %v6443
        %v6459 = vcombine.high %v6442, %v6443
        %6468 = vst [vmem:[%s191] sm:$0xff] %v6452
        %6469 = vst [vmem:[%s191 + $0x8] sm:$0xff] %v6453
        %6470 = vst [vmem:[%s191 + $0x10] sm:$0xff] %v6454
        %6471 = vst [vmem:[%s191 + $0x18] sm:$0xff] %v6455
        %6472 = vst [vmem:[%s191 + $0x20] sm:$0xff] %v6456
        %6473 = vst [vmem:[%s191 + $0x28] sm:$0xff] %v6457
        %6474 = vst [vmem:[%s191 + $0x30] sm:$0xff] %v6458
        %6475 = vst [vmem:[%s191 + $0x38] sm:$0xff] %v6459
        %s6476 = sand.u32 %s116, 1
        %s6477 = scalar_lea.sflag [#allocation4], %s6476
        %s6478 = sand.u32 %s116, 1
        %s6479 = smul.addr %s6478, 64
        %s6480 = scalar_lea.vmem [#allocation3], %s6479
        // Predicated region
        $region37: #{tpu_custom_call.1} parent=35 // pred_check
          %p6481 = pneg %p126
        $region38: #{tpu_custom_call.1} parent=35 // pred_check_branch
          %6483 = sbr.rel (%p6481) target = $region40
        $region39: #{tpu_custom_call.1} parent=35 // pred_region
          %s6485 = ssub.s32 1024, 1024
          %6486 = vsyncadd %s6477, %s6485
          %s6487 = smul.addr %s19, 8
          %s6488 = smul.addr %s6487, 128
          %s6489 = scalar_lea.hbm %s4, %s6488
          %s6490 = sshll.u32 %s6480, 4
          %s6491 = int_to_ptr.vmem [resolvable:$true] %s6490
          %6496 = dma.vmem_to_hbm [thread:$0]  %s6491, 1024, %s6489, %s6477, 256, 256, 16
        $region40: #{tpu_custom_call.1} parent=35 // pred_fallthru
          _
      $region36: #{tpu_custom_call.1} parent=5 // pred_fallthru
        _
      %p6497 = scmp.le.s32.totalorder 2, %s14
      // Predicated region
      $region41: #{tpu_custom_call.1} parent=5 // pred_check
        %p6498 = pneg %p6497
      $region42: #{tpu_custom_call.1} parent=5 // pred_check_branch
        %6500 = sbr.rel (%p6498) target = $region44
      $region43: #{tpu_custom_call.1} parent=5 // pred_region
        %s6501 = ssub.s32 %s14, 2
        // Predicated region
        $region45: #{tpu_custom_call.1} parent=43 // pred_check
          %p6502 = pneg %p132
        $region46: #{tpu_custom_call.1} parent=43 // pred_check_branch
          %6504 = sbr.rel (%p6502) target = $region48
        $region47: #{tpu_custom_call.1} parent=43 // pred_region
          %s6505 = sand.u32 %s117, 1
          %s6506 = scalar_lea.sflag [#allocation4], %s6505
          %s6507 = sand.u32 %s117, 1
          %s6508 = smul.addr %s6507, 64
          %s6509 = scalar_lea.vmem [#allocation3], %s6508
          %6510 = dma.done %s6506, 1024
        $region48: #{tpu_custom_call.1} parent=43 // pred_fallthru
          _
      $region44: #{tpu_custom_call.1} parent=5 // pred_fallthru
        _
    $region6: #{tpu_custom_call.1} parent=1 // loop_footer
      %s18 = sadd.s32 1, %s14
    $region7: #{tpu_custom_call.1} parent=1 // loop_footer_branch
      %13 = sbr.rel target = $region3
    $region8: #{tpu_custom_call.1} parent=1 // loop_exit
      _
    %6511 = vsyncpa [#allocation4], 1
    %s6512 = scalar_lea.sflag [#allocation4], 1
    %6513 = vsyncpa %s6512, 1

</llo_original>
